<compile_context>
chip_gen: v7x
topology: tpu7x:2x2x1
jax: 0.10.0
libtpu: 0.0.40
codegen_flags: <defaults>
</compile_context>

<pallas_src>
import functools

import jax
import jax.numpy as jnp
from jax.experimental import pallas as pl
from jax.experimental.pallas import tpu as pltpu


# ----------------------------------------------------------------------------
# Kernel 1: conv (super-patch GEMM, 4 pool phases folded along N) + 2x2 maxpool
#           (max over 4 column slabs) + folded bias/BN affine + sigmoid -> bf16.
# ----------------------------------------------------------------------------
def _conv_pool_affine_sig_kernel(p_ref, w_ref, scale_ref, off_ref, o_ref, *, cout):
    # (T, 36*Cin) @ (36*Cin, 4*Cout) -> (T, 4*Cout), f32 accumulation on MXU.
    y = jnp.dot(p_ref[0], w_ref[...], preferred_element_type=jnp.float32)
    # 2x2 maxpool == elementwise max over the 4 phase column slabs.
    m = jnp.maximum(jnp.maximum(y[:, 0:cout], y[:, cout:2 * cout]),
                    jnp.maximum(y[:, 2 * cout:3 * cout], y[:, 3 * cout:4 * cout]))
    # Per-channel affine (conv bias + BN fold).  Must stay AFTER the max:
    # the BN scale can be negative, so it does not commute with maxpool.
    z = m * scale_ref[...] + off_ref[...]
    o_ref[0] = pl.reciprocal(1.0 + jnp.exp(-z)).astype(o_ref.dtype)


def conv_pool_affine_sig(P, Ws, scale, offset):
    """P: (B, T, 36*Cin) bf16 super-patch im2col; Ws: (36*Cin, 4*Cout) bf16.
    Returns (B, T, Cout) bf16 = sigmoid(affine(maxpool(conv(x))))."""
    B, T, Kd = P.shape
    four_cout = Ws.shape[1]
    cout = four_cout // 4
    return pl.pallas_call(
        functools.partial(_conv_pool_affine_sig_kernel, cout=cout),
        out_shape=jax.ShapeDtypeStruct((B, T, cout), jnp.bfloat16),
        grid=(B,),
        in_specs=[
            pl.BlockSpec((1, T, Kd), lambda b: (b, 0, 0)),
            pl.BlockSpec((Kd, four_cout), lambda b: (0, 0)),
            pl.BlockSpec((1, cout), lambda b: (0, 0)),
            pl.BlockSpec((1, cout), lambda b: (0, 0)),
        ],
        out_specs=pl.BlockSpec((1, T, cout), lambda b: (b, 0, 0)),
        compiler_params=pltpu.CompilerParams(dimension_semantics=("parallel",)),
    )(P, Ws, scale, offset)


# ----------------------------------------------------------------------------
# Kernel 2: fused fc1 + sigmoid + fc2 (bf16 operands, f32 accumulation).
# ----------------------------------------------------------------------------
def _mlp_kernel(a_ref, w1_ref, b1_ref, w2_ref, b2_ref, o_ref):
    h = jnp.dot(a_ref[...], w1_ref[...], preferred_element_type=jnp.float32) + b1_ref[...]
    h = pl.reciprocal(1.0 + jnp.exp(-h))
    o_ref[...] = jnp.dot(h.astype(w2_ref.dtype), w2_ref[...],
                         preferred_element_type=jnp.float32) + b2_ref[...]


def mlp(a, w1, b1, w2, b2):
    B, D = a.shape
    K = w1.shape[1]
    O = w2.shape[1]
    # Tile over batch for large B (so v7x can use both TCs); at tiny B a single
    # block avoids per-step overhead and (8,128) padding constraints.
    if B >= 16 and B % 16 == 0:
        tile_b = max(8, (B // 2) // 8 * 8)
        nt = B // tile_b
    else:
        tile_b, nt = B, 1
    return pl.pallas_call(
        _mlp_kernel,
        out_shape=jax.ShapeDtypeStruct((B, O), jnp.float32),
        grid=(nt,),
        in_specs=[
            pl.BlockSpec((tile_b, D), lambda i: (i, 0)),
            pl.BlockSpec((D, K), lambda i: (0, 0)),
            pl.BlockSpec((1, K), lambda i: (0, 0)),
            pl.BlockSpec((K, O), lambda i: (0, 0)),
            pl.BlockSpec((1, O), lambda i: (0, 0)),
        ],
        out_specs=pl.BlockSpec((tile_b, O), lambda i: (i, 0)),
        compiler_params=pltpu.CompilerParams(dimension_semantics=("parallel",)),
    )(a, w1, b1, w2, b2)


# ----------------------------------------------------------------------------
# Glue: super-patch im2col (pure JAX static slices; fuses into one XLA copy).
# Row (b, i*Wo + j) holds x_pad[b, 2i:2i+6, 2j:2j+6, :] flattened (36*Cin) —
# the union of the 5x5 patches of all 4 pool phases of pooled output (i, j).
# ----------------------------------------------------------------------------
def _superpatch_im2col(x_pad, Ho, Wo):
    B, _, _, Cin = x_pad.shape
    cols = []
    for r in range(6):
        for c in range(6):
            cols.append(x_pad[:, r:r + 2 * Ho:2, c:c + 2 * Wo:2, :])   # (B,Ho,Wo,Cin)
    p = jnp.stack(cols, axis=3)                                        # (B,Ho,Wo,36,Cin)
    return p.reshape(B, Ho * Wo, 36 * Cin)


def _make_superpatch_weight(w):
    """w: (5,5,Cin,Cout) -> (36*Cin, 4*Cout).  Phase q = dh*2+dw occupies column
    slab [q*Cout:(q+1)*Cout] and reads the 5x5 kernel shifted by (dh,dw) inside
    the 6x6 super-patch (zeros elsewhere)."""
    KH, KW, Cin, Cout = w.shape
    Ws = jnp.zeros((6, 6, Cin, 4, Cout), w.dtype)
    for q, (dh, dw) in enumerate(((0, 0), (0, 1), (1, 0), (1, 1))):
        Ws = Ws.at[dh:dh + KH, dw:dw + KW, :, q, :].set(w)
    return Ws.reshape(36 * Cin, 4 * Cout)


# ----------------------------------------------------------------------------
# Parameters (deterministic synthetic init; shapes match the PyTorch module).
# ----------------------------------------------------------------------------
def init_params(key, K, O):
    ks = jax.random.split(key, 10)
    s = 0.1
    return {
        "w1": s * jax.random.normal(ks[0], (5, 5, 1, 32), jnp.float32),    # conv1 (kh,kw,cin,cout)
        "b1": s * jax.random.normal(ks[1], (1, 32), jnp.float32),
        "w2": s * jax.random.normal(ks[2], (5, 5, 32, 32), jnp.float32),   # conv2
        "b2": s * jax.random.normal(ks[3], (1, 32), jnp.float32),
        "bn_gamma": 1.0 + s * jax.random.normal(ks[4], (1, 32), jnp.float32),
        "bn_beta": s * jax.random.normal(ks[5], (1, 32), jnp.float32),
        "bn_mean": jnp.zeros((1, 32), jnp.float32),   # PyTorch running_mean init
        "bn_var": jnp.ones((1, 32), jnp.float32),     # PyTorch running_var init
        "fc1_w": s * jax.random.normal(ks[6], (7 * 7 * 32, K), jnp.float32),  # NCHW-flatten rows
        "fc1_b": s * jax.random.normal(ks[7], (1, K), jnp.float32),
        "fc2_w": s * jax.random.normal(ks[8], (K, O), jnp.float32),
        "fc2_b": s * jax.random.normal(ks[9], (1, O), jnp.float32),
    }


def prepare_params(params):
    """One-time weight preprocessing (hoisted out of the traced forward)."""
    eps = 1e-5
    # Folded BN affine (eval mode, running stats) + conv2 bias.
    scale2 = params["bn_gamma"] / jnp.sqrt(params["bn_var"] + eps)
    offset2 = (params["b2"] - params["bn_mean"]) * scale2 + params["bn_beta"]
    # Permute fc1 rows from NCHW flatten order (c*49+i*7+j) to the NHWC order
    # in which a2 is produced ((i*7+j)*32+c), so no transpose of a2 is needed.
    K = params["fc1_w"].shape[1]
    fc1_w_nhwc = params["fc1_w"].reshape(32, 7, 7, K).transpose(1, 2, 0, 3).reshape(7 * 7 * 32, K)
    return {
        "w1s": _make_superpatch_weight(params["w1"]).astype(jnp.bfloat16),   # (36, 128)
        "scale1": jnp.ones((1, 32), jnp.float32),
        "offset1": params["b1"],
        "w2s": _make_superpatch_weight(params["w2"]).astype(jnp.bfloat16),   # (1152, 128)
        "scale2": scale2,
        "offset2": offset2,
        "fc1_w": fc1_w_nhwc.astype(jnp.bfloat16),
        "fc1_b": params["fc1_b"],
        "fc2_w": params["fc2_w"].astype(jnp.bfloat16),
        "fc2_b": params["fc2_b"],
    }


@jax.jit
def forward(prep, x_nchw):
    B = x_nchw.shape[0]
    x = jnp.transpose(x_nchw, (0, 2, 3, 1)).astype(jnp.bfloat16)   # NCHW -> NHWC, bf16 operands

    # stage 1: sigmoid(maxpool(conv1(x)))   (conv bias folded into the offset)
    xp = jnp.pad(x, ((0, 0), (2, 2), (2, 2), (0, 0)))
    P1 = _superpatch_im2col(xp, 14, 14)                            # (B, 196, 36) bf16
    a1 = conv_pool_affine_sig(P1, prep["w1s"], prep["scale1"], prep["offset1"])  # (B,196,32) bf16
    a1 = a1.reshape(B, 14, 14, 32)

    # stage 2: sigmoid(batchnorm(maxpool(conv2(a1))))
    # TODO(synk): BatchNorm2d is applied in eval mode using running statistics
    # (running_mean=0, running_var=1); training-mode batch statistics are not computed.
    a1p = jnp.pad(a1, ((0, 0), (2, 2), (2, 2), (0, 0)))
    P2 = _superpatch_im2col(a1p, 7, 7)                             # (B, 49, 1152) bf16
    a2 = conv_pool_affine_sig(P2, prep["w2s"], prep["scale2"], prep["offset2"])  # (B,49,32) bf16

    # flatten (NHWC row order; fc1 rows pre-permuted) + fc2(sigmoid(fc1(.)))
    flat = a2.reshape(B, 7 * 7 * 32)
    return mlp(flat, prep["fc1_w"], prep["fc1_b"], prep["fc2_w"], prep["fc2_b"])


if __name__ == "__main__":
    key = jax.random.PRNGKey(0)
    kx, kp = jax.random.split(key)
    B, K, O = 2, 64, 10                       # K = fc1 width, O = number of classes
    # fc1 expects 7*7*32 features -> input spatial size must be 28x28 (MNIST-like)
    x = jax.random.normal(kx, (B, 1, 28, 28), jnp.float32)   # NCHW, like PyTorch
    params = init_params(kp, K, O)
    prep = prepare_params(params)

    out = forward(prep, x)
    jax.block_until_ready(out)
    assert out.shape == (B, O)
    print("KERNEL_OK")
</pallas_src>

<mosaic_0001>
module attributes {stable_mosaic.version = 11 : i64} {
  func.func @_conv_pool_affine_sig_kernel(%arg0: i32, %arg1: memref<1x196x36xbf16, #tpu.memory_space<vmem>>, %arg2: memref<36x128xbf16, #tpu.memory_space<vmem>>, %arg3: memref<1x32xf32, #tpu.memory_space<vmem>>, %arg4: memref<1x32xf32, #tpu.memory_space<vmem>>, %arg5: memref<1x196x32xbf16, #tpu.memory_space<vmem>>) attributes {dimension_semantics = [#tpu.dimension_semantics<parallel>], iteration_bounds = array<i64: 2>, scalar_prefetch = 0 : i64, scratch_operands = 0 : i64, tpu.core_type = #tpu.core_type<tc>, window_params = [{transform_indices = @transform_0, window_bounds = array<i64: 1, 196, 36>}, {pipeline_mode = #tpu.pipeline_mode<synchronous>, transform_indices = @transform_1, window_bounds = array<i64: 36, 128>}, {pipeline_mode = #tpu.pipeline_mode<synchronous>, transform_indices = @transform_2, window_bounds = array<i64: 1, 32>}, {pipeline_mode = #tpu.pipeline_mode<synchronous>, transform_indices = @transform_3, window_bounds = array<i64: 1, 32>}, {transform_indices = @transform_4, window_bounds = array<i64: 1, 196, 32>}]} {
    %c0 = arith.constant 0 : index
    %c0_0 = arith.constant 0 : index
    %c0_1 = arith.constant 0 : index
    %0 = vector.load %arg1[%c0, %c0_0, %c0_1] : memref<1x196x36xbf16, #tpu.memory_space<vmem>>, vector<1x196x36xbf16>
    %1 = vector.shape_cast %0 : vector<1x196x36xbf16> to vector<196x36xbf16>
    %c0_2 = arith.constant 0 : index
    %c0_3 = arith.constant 0 : index
    %2 = vector.load %arg2[%c0_2, %c0_3] : memref<36x128xbf16, #tpu.memory_space<vmem>>, vector<36x128xbf16>
    %cst = arith.constant dense<0.000000e+00> : vector<196x128xf32>
    %3 = tpu.matmul %1, %2, %cst {dimension_numbers = #tpu.dot_dimension_numbers<[1], [0], [0], [1], [0, 0, 1, 1], [], []>} : vector<196x36xbf16>, vector<36x128xbf16>, vector<196x128xf32> -> vector<196x128xf32>
    %4 = vector.extract_strided_slice %3 {offsets = [0, 0], sizes = [196, 32], strides = [1, 1]} : vector<196x128xf32> to vector<196x32xf32>
    %5 = vector.extract_strided_slice %3 {offsets = [0, 32], sizes = [196, 32], strides = [1, 1]} : vector<196x128xf32> to vector<196x32xf32>
    %6 = arith.maximumf %4, %5 : vector<196x32xf32>
    %7 = vector.extract_strided_slice %3 {offsets = [0, 64], sizes = [196, 32], strides = [1, 1]} : vector<196x128xf32> to vector<196x32xf32>
    %8 = vector.extract_strided_slice %3 {offsets = [0, 96], sizes = [196, 32], strides = [1, 1]} : vector<196x128xf32> to vector<196x32xf32>
    %9 = arith.maximumf %7, %8 : vector<196x32xf32>
    %10 = arith.maximumf %6, %9 : vector<196x32xf32>
    %c0_4 = arith.constant 0 : index
    %c0_5 = arith.constant 0 : index
    %11 = vector.load %arg3[%c0_4, %c0_5] : memref<1x32xf32, #tpu.memory_space<vmem>>, vector<1x32xf32>
    %12 = vector.broadcast %11 : vector<1x32xf32> to vector<196x32xf32>
    %13 = arith.mulf %10, %12 : vector<196x32xf32>
    %c0_6 = arith.constant 0 : index
    %c0_7 = arith.constant 0 : index
    %14 = vector.load %arg4[%c0_6, %c0_7] : memref<1x32xf32, #tpu.memory_space<vmem>>, vector<1x32xf32>
    %15 = vector.broadcast %14 : vector<1x32xf32> to vector<196x32xf32>
    %16 = arith.addf %13, %15 : vector<196x32xf32>
    %cst_8 = arith.constant 0.000000e+00 : f32
    %17 = vector.broadcast %cst_8 : f32 to vector<196x32xf32>
    %18 = arith.subf %17, %16 : vector<196x32xf32>
    %19 = math.exp %18 : vector<196x32xf32>
    %cst_9 = arith.constant 1.000000e+00 : f32
    %20 = vector.broadcast %cst_9 : f32 to vector<196x32xf32>
    %21 = arith.addf %20, %19 : vector<196x32xf32>
    %22 = tpu.reciprocal %21 : vector<196x32xf32> -> vector<196x32xf32>
    %23 = arith.truncf %22 : vector<196x32xf32> to vector<196x32xbf16>
    %c0_10 = arith.constant 0 : index
    %c0_11 = arith.constant 0 : index
    %c0_12 = arith.constant 0 : index
    %24 = vector.load %arg5[%c0_10, %c0_11, %c0_12] : memref<1x196x32xbf16, #tpu.memory_space<vmem>>, vector<1x196x32xbf16>
    %25 = vector.shape_cast %24 : vector<1x196x32xbf16> to vector<196x32xbf16>
    %26 = vector.shape_cast %23 : vector<196x32xbf16> to vector<1x196x32xbf16>
    tpu.vector_store %arg5[%c0_10, %c0_11, %c0_12], %26 {strides = array<i32>} : memref<1x196x32xbf16, #tpu.memory_space<vmem>>, vector<1x196x32xbf16>,
    return
  }
  func.func @transform_0(%arg0: i32) -> (i32, i32, i32) {
    %c0_i32 = arith.constant 0 : i32
    %c0_i32_0 = arith.constant 0 : i32
    %c0_i32_1 = arith.constant 0 : i32
    return %arg0, %c0_i32, %c0_i32_0 : i32, i32, i32
  }
  func.func @transform_1(%arg0: i32) -> (i32, i32) {
    %c0_i32 = arith.constant 0 : i32
    %c0_i32_0 = arith.constant 0 : i32
    %c0_i32_1 = arith.constant 0 : i32
    return %c0_i32, %c0_i32_0 : i32, i32
  }
  func.func @transform_2(%arg0: i32) -> (i32, i32) {
    %c0_i32 = arith.constant 0 : i32
    %c0_i32_0 = arith.constant 0 : i32
    %c0_i32_1 = arith.constant 0 : i32
    return %c0_i32, %c0_i32_0 : i32, i32
  }
  func.func @transform_3(%arg0: i32) -> (i32, i32) {
    %c0_i32 = arith.constant 0 : i32
    %c0_i32_0 = arith.constant 0 : i32
    %c0_i32_1 = arith.constant 0 : i32
    return %c0_i32, %c0_i32_0 : i32, i32
  }
  func.func @transform_4(%arg0: i32) -> (i32, i32, i32) {
    %c0_i32 = arith.constant 0 : i32
    %c0_i32_0 = arith.constant 0 : i32
    %c0_i32_1 = arith.constant 0 : i32
    return %arg0, %c0_i32, %c0_i32_0 : i32, i32, i32
  }
}

module attributes {stable_mosaic.version = 11 : i64} {
  func.func @_conv_pool_affine_sig_kernel(%arg0: i32, %arg1: memref<1x49x1152xbf16, #tpu.memory_space<vmem>>, %arg2: memref<1152x128xbf16, #tpu.memory_space<vmem>>, %arg3: memref<1x32xf32, #tpu.memory_space<vmem>>, %arg4: memref<1x32xf32, #tpu.memory_space<vmem>>, %arg5: memref<1x49x32xbf16, #tpu.memory_space<vmem>>) attributes {dimension_semantics = [#tpu.dimension_semantics<parallel>], iteration_bounds = array<i64: 2>, scalar_prefetch = 0 : i64, scratch_operands = 0 : i64, tpu.core_type = #tpu.core_type<tc>, window_params = [{transform_indices = @transform_0, window_bounds = array<i64: 1, 49, 1152>}, {pipeline_mode = #tpu.pipeline_mode<synchronous>, transform_indices = @transform_1, window_bounds = array<i64: 1152, 128>}, {pipeline_mode = #tpu.pipeline_mode<synchronous>, transform_indices = @transform_2, window_bounds = array<i64: 1, 32>}, {pipeline_mode = #tpu.pipeline_mode<synchronous>, transform_indices = @transform_3, window_bounds = array<i64: 1, 32>}, {transform_indices = @transform_4, window_bounds = array<i64: 1, 49, 32>}]} {
    %c0 = arith.constant 0 : index
    %c0_0 = arith.constant 0 : index
    %c0_1 = arith.constant 0 : index
    %0 = vector.load %arg1[%c0, %c0_0, %c0_1] : memref<1x49x1152xbf16, #tpu.memory_space<vmem>>, vector<1x49x1152xbf16>
    %1 = vector.shape_cast %0 : vector<1x49x1152xbf16> to vector<49x1152xbf16>
    %c0_2 = arith.constant 0 : index
    %c0_3 = arith.constant 0 : index
    %2 = vector.load %arg2[%c0_2, %c0_3] : memref<1152x128xbf16, #tpu.memory_space<vmem>>, vector<1152x128xbf16>
    %cst = arith.constant dense<0.000000e+00> : vector<49x128xf32>
    %3 = tpu.matmul %1, %2, %cst {dimension_numbers = #tpu.dot_dimension_numbers<[1], [0], [0], [1], [0, 0, 1, 1], [], []>} : vector<49x1152xbf16>, vector<1152x128xbf16>, vector<49x128xf32> -> vector<49x128xf32>
    %4 = vector.extract_strided_slice %3 {offsets = [0, 0], sizes = [49, 32], strides = [1, 1]} : vector<49x128xf32> to vector<49x32xf32>
    %5 = vector.extract_strided_slice %3 {offsets = [0, 32], sizes = [49, 32], strides = [1, 1]} : vector<49x128xf32> to vector<49x32xf32>
    %6 = arith.maximumf %4, %5 : vector<49x32xf32>
    %7 = vector.extract_strided_slice %3 {offsets = [0, 64], sizes = [49, 32], strides = [1, 1]} : vector<49x128xf32> to vector<49x32xf32>
    %8 = vector.extract_strided_slice %3 {offsets = [0, 96], sizes = [49, 32], strides = [1, 1]} : vector<49x128xf32> to vector<49x32xf32>
    %9 = arith.maximumf %7, %8 : vector<49x32xf32>
    %10 = arith.maximumf %6, %9 : vector<49x32xf32>
    %c0_4 = arith.constant 0 : index
    %c0_5 = arith.constant 0 : index
    %11 = vector.load %arg3[%c0_4, %c0_5] : memref<1x32xf32, #tpu.memory_space<vmem>>, vector<1x32xf32>
    %12 = vector.broadcast %11 : vector<1x32xf32> to vector<49x32xf32>
    %13 = arith.mulf %10, %12 : vector<49x32xf32>
    %c0_6 = arith.constant 0 : index
    %c0_7 = arith.constant 0 : index
    %14 = vector.load %arg4[%c0_6, %c0_7] : memref<1x32xf32, #tpu.memory_space<vmem>>, vector<1x32xf32>
    %15 = vector.broadcast %14 : vector<1x32xf32> to vector<49x32xf32>
    %16 = arith.addf %13, %15 : vector<49x32xf32>
    %cst_8 = arith.constant 0.000000e+00 : f32
    %17 = vector.broadcast %cst_8 : f32 to vector<49x32xf32>
    %18 = arith.subf %17, %16 : vector<49x32xf32>
    %19 = math.exp %18 : vector<49x32xf32>
    %cst_9 = arith.constant 1.000000e+00 : f32
    %20 = vector.broadcast %cst_9 : f32 to vector<49x32xf32>
    %21 = arith.addf %20, %19 : vector<49x32xf32>
    %22 = tpu.reciprocal %21 : vector<49x32xf32> -> vector<49x32xf32>
    %23 = arith.truncf %22 : vector<49x32xf32> to vector<49x32xbf16>
    %c0_10 = arith.constant 0 : index
    %c0_11 = arith.constant 0 : index
    %c0_12 = arith.constant 0 : index
    %24 = vector.load %arg5[%c0_10, %c0_11, %c0_12] : memref<1x49x32xbf16, #tpu.memory_space<vmem>>, vector<1x49x32xbf16>
    %25 = vector.shape_cast %24 : vector<1x49x32xbf16> to vector<49x32xbf16>
    %26 = vector.shape_cast %23 : vector<49x32xbf16> to vector<1x49x32xbf16>
    tpu.vector_store %arg5[%c0_10, %c0_11, %c0_12], %26 {strides = array<i32>} : memref<1x49x32xbf16, #tpu.memory_space<vmem>>, vector<1x49x32xbf16>,
    return
  }
  func.func @transform_0(%arg0: i32) -> (i32, i32, i32) {
    %c0_i32 = arith.constant 0 : i32
    %c0_i32_0 = arith.constant 0 : i32
    %c0_i32_1 = arith.constant 0 : i32
    return %arg0, %c0_i32, %c0_i32_0 : i32, i32, i32
  }
  func.func @transform_1(%arg0: i32) -> (i32, i32) {
    %c0_i32 = arith.constant 0 : i32
    %c0_i32_0 = arith.constant 0 : i32
    %c0_i32_1 = arith.constant 0 : i32
    return %c0_i32, %c0_i32_0 : i32, i32
  }
  func.func @transform_2(%arg0: i32) -> (i32, i32) {
    %c0_i32 = arith.constant 0 : i32
    %c0_i32_0 = arith.constant 0 : i32
    %c0_i32_1 = arith.constant 0 : i32
    return %c0_i32, %c0_i32_0 : i32, i32
  }
  func.func @transform_3(%arg0: i32) -> (i32, i32) {
    %c0_i32 = arith.constant 0 : i32
    %c0_i32_0 = arith.constant 0 : i32
    %c0_i32_1 = arith.constant 0 : i32
    return %c0_i32, %c0_i32_0 : i32, i32
  }
  func.func @transform_4(%arg0: i32) -> (i32, i32, i32) {
    %c0_i32 = arith.constant 0 : i32
    %c0_i32_0 = arith.constant 0 : i32
    %c0_i32_1 = arith.constant 0 : i32
    return %arg0, %c0_i32, %c0_i32_0 : i32, i32, i32
  }
}

module attributes {stable_mosaic.version = 11 : i64} {
  func.func @_mlp_kernel(%arg0: i32, %arg1: memref<2x1568xbf16, #tpu.memory_space<vmem>>, %arg2: memref<1568x64xbf16, #tpu.memory_space<vmem>>, %arg3: memref<1x64xf32, #tpu.memory_space<vmem>>, %arg4: memref<64x10xbf16, #tpu.memory_space<vmem>>, %arg5: memref<1x10xf32, #tpu.memory_space<vmem>>, %arg6: memref<2x10xf32, #tpu.memory_space<vmem>>) attributes {dimension_semantics = [#tpu.dimension_semantics<parallel>], iteration_bounds = array<i64: 1>, scalar_prefetch = 0 : i64, scratch_operands = 0 : i64, tpu.core_type = #tpu.core_type<tc>, window_params = [{transform_indices = @transform_0, window_bounds = array<i64: 2, 1568>}, {pipeline_mode = #tpu.pipeline_mode<synchronous>, transform_indices = @transform_1, window_bounds = array<i64: 1568, 64>}, {pipeline_mode = #tpu.pipeline_mode<synchronous>, transform_indices = @transform_2, window_bounds = array<i64: 1, 64>}, {pipeline_mode = #tpu.pipeline_mode<synchronous>, transform_indices = @transform_3, window_bounds = array<i64: 64, 10>}, {pipeline_mode = #tpu.pipeline_mode<synchronous>, transform_indices = @transform_4, window_bounds = array<i64: 1, 10>}, {transform_indices = @transform_5, window_bounds = array<i64: 2, 10>}]} {
    %c0 = arith.constant 0 : index
    %c0_0 = arith.constant 0 : index
    %0 = vector.load %arg1[%c0, %c0_0] : memref<2x1568xbf16, #tpu.memory_space<vmem>>, vector<2x1568xbf16>
    %c0_1 = arith.constant 0 : index
    %c0_2 = arith.constant 0 : index
    %1 = vector.load %arg2[%c0_1, %c0_2] : memref<1568x64xbf16, #tpu.memory_space<vmem>>, vector<1568x64xbf16>
    %cst = arith.constant dense<0.000000e+00> : vector<2x64xf32>
    %2 = tpu.matmul %0, %1, %cst {dimension_numbers = #tpu.dot_dimension_numbers<[1], [0], [0], [1], [0, 0, 1, 1], [], []>} : vector<2x1568xbf16>, vector<1568x64xbf16>, vector<2x64xf32> -> vector<2x64xf32>
    %c0_3 = arith.constant 0 : index
    %c0_4 = arith.constant 0 : index
    %3 = vector.load %arg3[%c0_3, %c0_4] : memref<1x64xf32, #tpu.memory_space<vmem>>, vector<1x64xf32>
    %4 = vector.broadcast %3 : vector<1x64xf32> to vector<2x64xf32>
    %5 = arith.addf %2, %4 : vector<2x64xf32>
    %cst_5 = arith.constant 0.000000e+00 : f32
    %6 = vector.broadcast %cst_5 : f32 to vector<2x64xf32>
    %7 = arith.subf %6, %5 : vector<2x64xf32>
    %8 = math.exp %7 : vector<2x64xf32>
    %cst_6 = arith.constant 1.000000e+00 : f32
    %9 = vector.broadcast %cst_6 : f32 to vector<2x64xf32>
    %10 = arith.addf %9, %8 : vector<2x64xf32>
    %11 = tpu.reciprocal %10 : vector<2x64xf32> -> vector<2x64xf32>
    %12 = arith.truncf %11 : vector<2x64xf32> to vector<2x64xbf16>
    %c0_7 = arith.constant 0 : index
    %c0_8 = arith.constant 0 : index
    %13 = vector.load %arg4[%c0_7, %c0_8] : memref<64x10xbf16, #tpu.memory_space<vmem>>, vector<64x10xbf16>
    %cst_9 = arith.constant dense<0.000000e+00> : vector<2x10xf32>
    %14 = tpu.matmul %12, %13, %cst_9 {dimension_numbers = #tpu.dot_dimension_numbers<[1], [0], [0], [1], [0, 0, 1, 1], [], []>} : vector<2x64xbf16>, vector<64x10xbf16>, vector<2x10xf32> -> vector<2x10xf32>
    %c0_10 = arith.constant 0 : index
    %c0_11 = arith.constant 0 : index
    %15 = vector.load %arg5[%c0_10, %c0_11] : memref<1x10xf32, #tpu.memory_space<vmem>>, vector<1x10xf32>
    %16 = vector.broadcast %15 : vector<1x10xf32> to vector<2x10xf32>
    %17 = arith.addf %14, %16 : vector<2x10xf32>
    %c0_12 = arith.constant 0 : index
    %c0_13 = arith.constant 0 : index
    %18 = vector.load %arg6[%c0_12, %c0_13] : memref<2x10xf32, #tpu.memory_space<vmem>>, vector<2x10xf32>
    tpu.vector_store %arg6[%c0_12, %c0_13], %17 {strides = array<i32>} : memref<2x10xf32, #tpu.memory_space<vmem>>, vector<2x10xf32>,
    return
  }
  func.func @transform_0(%arg0: i32) -> (i32, i32) {
    %c0_i32 = arith.constant 0 : i32
    %c0_i32_0 = arith.constant 0 : i32
    return %arg0, %c0_i32 : i32, i32
  }
  func.func @transform_1(%arg0: i32) -> (i32, i32) {
    %c0_i32 = arith.constant 0 : i32
    %c0_i32_0 = arith.constant 0 : i32
    %c0_i32_1 = arith.constant 0 : i32
    return %c0_i32, %c0_i32_0 : i32, i32
  }
  func.func @transform_2(%arg0: i32) -> (i32, i32) {
    %c0_i32 = arith.constant 0 : i32
    %c0_i32_0 = arith.constant 0 : i32
    %c0_i32_1 = arith.constant 0 : i32
    return %c0_i32, %c0_i32_0 : i32, i32
  }
  func.func @transform_3(%arg0: i32) -> (i32, i32) {
    %c0_i32 = arith.constant 0 : i32
    %c0_i32_0 = arith.constant 0 : i32
    %c0_i32_1 = arith.constant 0 : i32
    return %c0_i32, %c0_i32_0 : i32, i32
  }
  func.func @transform_4(%arg0: i32) -> (i32, i32) {
    %c0_i32 = arith.constant 0 : i32
    %c0_i32_0 = arith.constant 0 : i32
    %c0_i32_1 = arith.constant 0 : i32
    return %c0_i32, %c0_i32_0 : i32, i32
  }
  func.func @transform_5(%arg0: i32) -> (i32, i32) {
    %c0_i32 = arith.constant 0 : i32
    %c0_i32_0 = arith.constant 0 : i32
    return %arg0, %c0_i32 : i32, i32
  }
}

</mosaic_0001>

<llo_original>
// kernel: forward.3
$region0: #{forward.3}
  #allocation0 [shape = 'u32[]', space=smem, size = 0x4, offset = 0x4, fixed_abs, tag = 'smem constant byte address 0x4 - core index']
  #allocation1 [shape = 'u32[144,128]{1,0:T(1,128)}', space=vmem, size = 0x12000, scoped, tag = 'internal scratch']
  %s0 = inlined_call_operand.vmem [shape: bf16[2,196,36], index: 0, kind: input, shape index: {}]
  %s1 = inlined_call_operand.vmem [shape: bf16[36,128], index: 1, kind: input, shape index: {}]
  %s2 = inlined_call_operand.vmem [shape: f32[1,32], index: 2, kind: input, shape index: {}]
  %s3 = inlined_call_operand.vmem [shape: f32[1,32], index: 3, kind: input, shape index: {}]
  %s4 = inlined_call_operand.vmem [shape: bf16[2,196,32], index: 4, kind: output, shape index: {}]
  %s5 = sld [smem:[#allocation0]]
  $region49: #{forward.3} parent=0
    _
  %s7 = ssub.s32 1, %s5
  %s8 = scalar_select 0, %s7, %s5
  loop: start=0, step=1, limit=4
  $region2: #{forward.3} parent=0 // loop_pre_header
    _
  $region3: #{forward.3} parent=0 // loop_header
    %s10 = sphi 0, %s14
    %p11 = scmp.ge.s32.totalorder %s10, 4
    %s20 = sphi 0, %s22
    %s23 = sphi 0, %s20
    %s24 = sphi 0, %s23
    %s40 = sphi 0, %s24
    %s44 = sphi 0, %s44
    %s46 = sphi 0, %s44
    %s47 = sphi 0, %s46
    %s61 = sphi 0, %s47
    %s65 = sphi 0, %s65
    %s67 = sphi 0, %s65
    %s68 = sphi 0, %s67
    %s82 = sphi 0, %s68
    %s86 = sphi 0, %s86
    %s88 = sphi 0, %s86
    %s89 = sphi 0, %s88
    %s103 = sphi 0, %s89
    %s109 = sphi 0, %s111
    %s112 = sphi 0, %s109
    %s113 = sphi 0, %s112
    %s129 = sphi 0, %s113
  $region4: #{forward.3} parent=0 // loop_header_branch
    %13 = sbr.rel (%p11) target = $region8
  $region5: #{forward.3} parent=0 // loop_body
    %s15 = ssub.s32 %s10, 1
    %s16 = ssub.s32 %s10, 2
    %s17 = sadd.s32 %s10, 1
    %s18 = ssub.s32 %s10, %s17
    %p19 = scmp.eq.s32.totalorder %s18, 0
    %s21 = sadd.s32 %s20, 1
    %s22 = scalar_select %p19, %s20, %s21
    %p25 = pneg %p19
    %p26 = scmp.eq.s32.totalorder %s10, 1
    %p27 = por %p25, %p26
    %p28 = scmp.ne.s32.totalorder %s20, %s23
    %p29 = scmp.eq.s32.totalorder %s10, 0
    %p30 = por %p28, %p29
    %p31 = scmp.ne.s32.totalorder %s20, %s23
    %p32 = scmp.eq.s32.totalorder %s15, 1
    %p33 = por %p31, %p32
    %p34 = scmp.ne.s32.totalorder %s23, %s24
    %p35 = scmp.eq.s32.totalorder %s15, 0
    %p36 = por %p34, %p35
    %p37 = scmp.ne.s32.totalorder %s23, %s24
    %p38 = scmp.eq.s32.totalorder %s16, 1
    %p39 = por %p37, %p38
    %p41 = scmp.ne.s32.totalorder %s24, %s40
    %p42 = scmp.eq.s32.totalorder %s16, 0
    %p43 = por %p41, %p42
    %s45 = sadd.s32 %s44, 1
    %p48 = scmp.eq.s32.totalorder %s10, 1
    %p49 = scmp.ne.s32.totalorder %s44, %s46
    %p50 = scmp.eq.s32.totalorder %s10, 0
    %p51 = por %p49, %p50
    %p52 = scmp.ne.s32.totalorder %s44, %s46
    %p53 = scmp.eq.s32.totalorder %s15, 1
    %p54 = por %p52, %p53
    %p55 = scmp.ne.s32.totalorder %s46, %s47
    %p56 = scmp.eq.s32.totalorder %s15, 0
    %p57 = por %p55, %p56
    %p58 = scmp.ne.s32.totalorder %s46, %s47
    %p59 = scmp.eq.s32.totalorder %s16, 1
    %p60 = por %p58, %p59
    %p62 = scmp.ne.s32.totalorder %s47, %s61
    %p63 = scmp.eq.s32.totalorder %s16, 0
    %p64 = por %p62, %p63
    %s66 = sadd.s32 %s65, 1
    %p69 = scmp.eq.s32.totalorder %s10, 1
    %p70 = scmp.ne.s32.totalorder %s65, %s67
    %p71 = scmp.eq.s32.totalorder %s10, 0
    %p72 = por %p70, %p71
    %p73 = scmp.ne.s32.totalorder %s65, %s67
    %p74 = scmp.eq.s32.totalorder %s15, 1
    %p75 = por %p73, %p74
    %p76 = scmp.ne.s32.totalorder %s67, %s68
    %p77 = scmp.eq.s32.totalorder %s15, 0
    %p78 = por %p76, %p77
    %p79 = scmp.ne.s32.totalorder %s67, %s68
    %p80 = scmp.eq.s32.totalorder %s16, 1
    %p81 = por %p79, %p80
    %p83 = scmp.ne.s32.totalorder %s68, %s82
    %p84 = scmp.eq.s32.totalorder %s16, 0
    %p85 = por %p83, %p84
    %s87 = sadd.s32 %s86, 1
    %p90 = scmp.eq.s32.totalorder %s10, 1
    %p91 = scmp.ne.s32.totalorder %s86, %s88
    %p92 = scmp.eq.s32.totalorder %s10, 0
    %p93 = por %p91, %p92
    %p94 = scmp.ne.s32.totalorder %s86, %s88
    %p95 = scmp.eq.s32.totalorder %s15, 1
    %p96 = por %p94, %p95
    %p97 = scmp.ne.s32.totalorder %s88, %s89
    %p98 = scmp.eq.s32.totalorder %s15, 0
    %p99 = por %p97, %p98
    %p100 = scmp.ne.s32.totalorder %s88, %s89
    %p101 = scmp.eq.s32.totalorder %s16, 1
    %p102 = por %p100, %p101
    %p104 = scmp.ne.s32.totalorder %s89, %s103
    %p105 = scmp.eq.s32.totalorder %s16, 0
    %p106 = por %p104, %p105
    %s107 = ssub.s32 %s10, %s17
    %p108 = scmp.eq.s32.totalorder %s107, 0
    %s110 = sadd.s32 %s109, 1
    %s111 = scalar_select %p108, %s109, %s110
    %p114 = pneg %p108
    %p115 = scmp.eq.s32.totalorder %s10, 1
    %p116 = por %p114, %p115
    %p117 = scmp.ne.s32.totalorder %s109, %s112
    %p118 = scmp.eq.s32.totalorder %s10, 0
    %p119 = por %p117, %p118
    %p120 = scmp.ne.s32.totalorder %s109, %s112
    %p121 = scmp.eq.s32.totalorder %s15, 1
    %p122 = por %p120, %p121
    %p123 = scmp.ne.s32.totalorder %s112, %s113
    %p124 = scmp.eq.s32.totalorder %s15, 0
    %p125 = por %p123, %p124
    %p126 = scmp.ne.s32.totalorder %s112, %s113
    %p127 = scmp.eq.s32.totalorder %s16, 1
    %p128 = por %p126, %p127
    %p130 = scmp.ne.s32.totalorder %s113, %s129
    %p131 = scmp.eq.s32.totalorder %s16, 0
    %p132 = por %p130, %p131
    %p133 = scmp.le.s32.totalorder 1, %s10
    %p134 = scmp.lt.s32.totalorder %s10, 3
    %p135 = pnand %p133, %p134
    %p136 = pneg %p135
    // Predicated region
    $region9: #{forward.3} parent=5 // pred_check
      _
    $region10: #{forward.3} parent=5 // pred_check_branch
      %138 = sbr.rel (%p135) target = $region12
    $region11: #{forward.3} parent=5 // pred_region
      %s139 = ssub.s32 %s10, 1
      // Predicated region
      $region13: #{forward.3} parent=11 // pred_check
        %p140 = pneg %p57
      $region14: #{forward.3} parent=11 // pred_check_branch
        %142 = sbr.rel (%p140) target = $region16
      $region15: #{forward.3} parent=11 // pred_region
        _
      $region16: #{forward.3} parent=11 // pred_fallthru
        _
      // Predicated region
      $region17: #{forward.3} parent=11 // pred_check
        %p143 = pneg %p78
      $region18: #{forward.3} parent=11 // pred_check_branch
        %145 = sbr.rel (%p143) target = $region20
      $region19: #{forward.3} parent=11 // pred_region
        _
      $region20: #{forward.3} parent=11 // pred_fallthru
        _
      // Predicated region
      $region21: #{forward.3} parent=11 // pred_check
        %p146 = pneg %p99
      $region22: #{forward.3} parent=11 // pred_check_branch
        %148 = sbr.rel (%p146) target = $region24
      $region23: #{forward.3} parent=11 // pred_region
        _
      $region24: #{forward.3} parent=11 // pred_fallthru
        _
    $region12: #{forward.3} parent=5 // pred_fallthru
      _
    %p149 = scmp.lt.s32.totalorder %s10, 2
    // Predicated region
    $region25: #{forward.3} parent=5 // pred_check
      %p150 = pneg %p149
    $region26: #{forward.3} parent=5 // pred_check_branch
      %152 = sbr.rel (%p150) target = $region28
    $region27: #{forward.3} parent=5 // pred_region
      // Predicated region
      $region29: #{forward.3} parent=27 // pred_check
        %p153 = pneg %p30
      $region30: #{forward.3} parent=27 // pred_check_branch
        %155 = sbr.rel (%p153) target = $region32
      $region31: #{forward.3} parent=27 // pred_region
        %p156 = scmp.lt.s32.totalorder %s10, 1
        %s157 = scalar_select %p156, %s10, 1
        %s158 = smul.addr %s157, 25
        %s159 = smul.addr %s158, 4
        %s160 = scalar_lea.vmem %s0, %s159
      $region32: #{forward.3} parent=27 // pred_fallthru
        _
    $region28: #{forward.3} parent=5 // pred_fallthru
      _
    %p161 = scmp.le.s32.totalorder 1, %s10
    %p162 = scmp.lt.s32.totalorder %s10, 3
    %p163 = pnand %p161, %p162
    %p164 = pneg %p163
    // Predicated region
    $region33: #{forward.3} parent=5 // pred_check
      _
    $region34: #{forward.3} parent=5 // pred_check_branch
      %166 = sbr.rel (%p163) target = $region36
    $region35: #{forward.3} parent=5 // pred_region
      %s167 = ssub.s32 %s10, 1
      %p168 = scmp.lt.s32.totalorder %s15, 1
      %s169 = scalar_select %p168, %s15, 1
      %s170 = smul.addr %s169, 25
      %s171 = smul.addr %s170, 4
      %s172 = scalar_lea.vmem %s0, %s171
      %p173 = pneg %p36
      %p174 = pneg %p33
      %p175 = pneg %p57
      %p176 = pneg %p54
      %p177 = pneg %p78
      %p178 = pneg %p75
      %p179 = pneg %p99
      %p180 = pneg %p96
      %p181 = pneg %p125
      %p182 = pneg %p122
      %p183 = scmp.lt.s32.totalorder %s15, 1
      %s184 = scalar_select %p183, %s15, 1
      %s185 = smul.addr %s184, 25
      %s186 = smul.addr %s185, 4
      %s187 = scalar_lea.vmem %s4, %s186
      %p188 = scmp.lt.s32.totalorder %s15, 1
      %s189 = scalar_select %p188, %s15, 1
      %s190 = smul.addr %s189, 25
      %s191 = smul.addr %s190, 4
      %s192 = scalar_lea.vmem %s0, %s191
      %p193 = scmp.lt.s32.totalorder %s15, 1
      %s194 = scalar_select %p193, %s15, 1
      %s195 = smul.addr %s194, 25
      %s196 = smul.addr %s195, 4
      %s197 = scalar_lea.vmem %s4, %s196
      %v199 = vld [vmem:[%s192] sm:$0xf]
      %v200 = vld [vmem:[%s192 + $0x4] sm:$0xf]
      %v201 = vld [vmem:[%s192 + $0x8] sm:$0xf]
      %v202 = vld [vmem:[%s192 + $0xc] sm:$0xf]
      %v203 = vld [vmem:[%s192 + $0x10] sm:$0xf]
      %v204 = vld [vmem:[%s192 + $0x14] sm:$0xf]
      %v205 = vld [vmem:[%s192 + $0x18] sm:$0xf]
      %v206 = vld [vmem:[%s192 + $0x1c] sm:$0xf]
      %v207 = vld [vmem:[%s192 + $0x20] sm:$0xf]
      %v208 = vld [vmem:[%s192 + $0x24] sm:$0xf]
      %v209 = vld [vmem:[%s192 + $0x28] sm:$0xf]
      %v210 = vld [vmem:[%s192 + $0x2c] sm:$0xf]
      %v211 = vld [vmem:[%s192 + $0x30] sm:$0xf]
      %v212 = vld [vmem:[%s192 + $0x34] sm:$0xf]
      %v213 = vld [vmem:[%s192 + $0x38] sm:$0xf]
      %v214 = vld [vmem:[%s192 + $0x3c] sm:$0xf]
      %v215 = vld [vmem:[%s192 + $0x40] sm:$0xf]
      %v216 = vld [vmem:[%s192 + $0x44] sm:$0xf]
      %v217 = vld [vmem:[%s192 + $0x48] sm:$0xf]
      %v218 = vld [vmem:[%s192 + $0x4c] sm:$0xf]
      %v219 = vld [vmem:[%s192 + $0x50] sm:$0xf]
      %v220 = vld [vmem:[%s192 + $0x54] sm:$0xf]
      %v221 = vld [vmem:[%s192 + $0x58] sm:$0xf]
      %v222 = vld [vmem:[%s192 + $0x5c] sm:$0xf]
      %v223 = vld [vmem:[%s192 + $0x60] sm:$0x3]
      %v224 = vld [vmem:[%s1] sm:$0xf]
      %v225 = vld [vmem:[%s1 + $0x4] sm:$0xf]
      %v226 = vld [vmem:[%s1 + $0x8] sm:$0xf]
      %v227 = vld [vmem:[%s1 + $0xc] sm:$0xf]
      %v228 = vld [vmem:[%s1 + $0x10] sm:$0x3]
      %v254 = vunpack.c.l.b16 %v199
      %v255 = vunpack.c.l.b16 %v200
      %v256 = vunpack.c.l.b16 %v201
      %v257 = vunpack.c.l.b16 %v202
      %v258 = vunpack.c.l.b16 %v203
      %v259 = vunpack.c.l.b16 %v204
      %v260 = vunpack.c.l.b16 %v205
      %v261 = vunpack.c.l.b16 %v206
      %v262 = vunpack.c.l.b16 %v207
      %v263 = vunpack.c.l.b16 %v208
      %v264 = vunpack.c.l.b16 %v209
      %v265 = vunpack.c.l.b16 %v210
      %v266 = vunpack.c.l.b16 %v211
      %v267 = vunpack.c.l.b16 %v212
      %v268 = vunpack.c.l.b16 %v213
      %v269 = vunpack.c.l.b16 %v214
      %v270 = vunpack.c.l.b16 %v215
      %v271 = vunpack.c.l.b16 %v216
      %v272 = vunpack.c.l.b16 %v217
      %v273 = vunpack.c.l.b16 %v218
      %v274 = vunpack.c.l.b16 %v219
      %v275 = vunpack.c.l.b16 %v220
      %v276 = vunpack.c.l.b16 %v221
      %v277 = vunpack.c.l.b16 %v222
      %v278 = vunpack.c.l.b16 %v223
      %v279 = vpack.c.b16 %v255, %v254
      %v280 = vpack.c.b16 %v257, %v256
      %v281 = vpack.c.b16 %v259, %v258
      %v282 = vpack.c.b16 %v261, %v260
      %v283 = vpack.c.b16 %v263, %v262
      %v284 = vpack.c.b16 %v265, %v264
      %v285 = vpack.c.b16 %v267, %v266
      %v286 = vpack.c.b16 %v269, %v268
      %v287 = vpack.c.b16 %v271, %v270
      %v288 = vpack.c.b16 %v273, %v272
      %v289 = vpack.c.b16 %v275, %v274
      %v290 = vpack.c.b16 %v277, %v276
      %v291 = vpack.c.b16 %v278, %v278
      %v297 = vunpack.c.l.b16 %v224
      %v298 = vunpack.c.l.b16 %v225
      %v299 = vunpack.c.l.b16 %v226
      %v300 = vunpack.c.l.b16 %v227
      %v301 = vunpack.c.l.b16 %v228
      %v302 = vpack.c.b16 %v298, %v297
      %v303 = vpack.c.b16 %v300, %v299
      %v304 = vpack.c.b16 %v301, %v301
      %vm307 = vcmask 293888
      %v309 = vsel %vm307, %v279, 0
      %v312 = vsel %vm307, %v280, 0
      %v315 = vsel %vm307, %v281, 0
      %v318 = vsel %vm307, %v282, 0
      %v321 = vsel %vm307, %v283, 0
      %v324 = vsel %vm307, %v284, 0
      %v327 = vsel %vm307, %v285, 0
      %v330 = vsel %vm307, %v286, 0
      %v333 = vsel %vm307, %v287, 0
      %v336 = vsel %vm307, %v288, 0
      %v339 = vsel %vm307, %v289, 0
      %v342 = vsel %vm307, %v290, 0
      %v345 = vsel %vm307, %v291, 0
      %vm347 = vcmask 1041408
      %v349 = vsel %vm347, %v304, 0
      %351 = vmatprep.subr.bf16.mxu0 0
      %352 = vmatpush1.bf16.msra.mxu0 %v302
      %353 = vmatprep.subr.bf16.mxu0 0
      %354 = vmatpush1.bf16.msra.mxu0 %v303
      %355 = vmatprep.subr.bf16.mxu0 0
      %356 = vmatpush1.bf16.msra.mxu0 %v349
      %357 = vmatprep.subr.bf16.mxu0 0
      %358 = vmatpush1.bf16.msra.mxu0 0
      %359 = vmatprep.subr.bf16.mxu0 0
      %360 = vmatpush1.bf16.msra.mxu0 0
      %361 = vmatprep.subr.bf16.mxu0 0
      %362 = vmatpush1.bf16.msra.mxu0 0
      %363 = vmatprep.subr.bf16.mxu0 0
      %364 = vmatpush1.bf16.msra.mxu0 0
      %365 = vmatprep.subr.bf16.mxu0 0
      %366 = vmatpush1.bf16.msra.mxu0 0
      %367 = vmatprep.subr.bf16.mxu0 0
      %368 = vmatpush1.bf16.msra.mxu0 0
      %369 = vmatprep.subr.bf16.mxu0 0
      %370 = vmatpush1.bf16.msra.mxu0 0
      %371 = vmatprep.subr.bf16.mxu0 0
      %372 = vmatpush1.bf16.msra.mxu0 0
      %373 = vmatprep.subr.bf16.mxu0 0
      %374 = vmatpush1.bf16.msra.mxu0 0
      %375 = vmatprep.subr.bf16.mxu0 0
      %376 = vmatpush1.bf16.msra.mxu0 0
      %377 = vmatprep.subr.bf16.mxu0 0
      %378 = vmatpush1.bf16.msra.mxu0 0
      %379 = vmatprep.subr.bf16.mxu0 0
      %380 = vmatpush1.bf16.msra.mxu0 0
      %381 = vmatprep.subr.bf16.mxu0 0
      %382 = vmatpush1.bf16.msra.mxu0 0
      %383 = vmatprep.mubr.bf16.mxu0 0
      %384 = vmatmul.mubr.bf16.gmra.mrb[0].mxu0 %v309
      %v385 = vpop.f32.mrb[0].mxu0
      %v386 = vadd.f32 0.0, %v385
      %v387 = vpop.f32.mrb[0].mxu0
      %v388 = vpop.f32.mrb[0].mxu0
      %v389 = vadd.f32 0.0, %v388
      %v390 = vpop.f32.mrb[0].mxu0
      %391 = vmatprep.mubr.bf16.mxu0 0
      %392 = vmatmul.mubr.bf16.gmra.mrb[0].mxu0 %v312
      %v393 = vpop.f32.mrb[0].mxu0
      %v394 = vadd.f32 0.0, %v393
      %v395 = vpop.f32.mrb[0].mxu0
      %v396 = vpop.f32.mrb[0].mxu0
      %v397 = vadd.f32 0.0, %v396
      %v398 = vpop.f32.mrb[0].mxu0
      %399 = vmatprep.mubr.bf16.mxu0 0
      %400 = vmatmul.mubr.bf16.gmra.mrb[0].mxu0 %v315
      %v401 = vpop.f32.mrb[0].mxu0
      %v402 = vadd.f32 0.0, %v401
      %v403 = vpop.f32.mrb[0].mxu0
      %v404 = vpop.f32.mrb[0].mxu0
      %v405 = vadd.f32 0.0, %v404
      %v406 = vpop.f32.mrb[0].mxu0
      %407 = vmatprep.mubr.bf16.mxu0 0
      %408 = vmatmul.mubr.bf16.gmra.mrb[0].mxu0 %v318
      %v409 = vpop.f32.mrb[0].mxu0
      %v410 = vadd.f32 0.0, %v409
      %v411 = vpop.f32.mrb[0].mxu0
      %v412 = vpop.f32.mrb[0].mxu0
      %v413 = vadd.f32 0.0, %v412
      %v414 = vpop.f32.mrb[0].mxu0
      %415 = vmatprep.mubr.bf16.mxu0 0
      %416 = vmatmul.mubr.bf16.gmra.mrb[0].mxu0 %v321
      %v417 = vpop.f32.mrb[0].mxu0
      %v418 = vadd.f32 0.0, %v417
      %v419 = vpop.f32.mrb[0].mxu0
      %v420 = vpop.f32.mrb[0].mxu0
      %v421 = vadd.f32 0.0, %v420
      %v422 = vpop.f32.mrb[0].mxu0
      %423 = vmatprep.mubr.bf16.mxu0 0
      %424 = vmatmul.mubr.bf16.gmra.mrb[0].mxu0 %v324
      %v425 = vpop.f32.mrb[0].mxu0
      %v426 = vadd.f32 0.0, %v425
      %v427 = vpop.f32.mrb[0].mxu0
      %v428 = vpop.f32.mrb[0].mxu0
      %v429 = vadd.f32 0.0, %v428
      %v430 = vpop.f32.mrb[0].mxu0
      %431 = vmatprep.mubr.bf16.mxu0 0
      %432 = vmatmul.mubr.bf16.gmra.mrb[0].mxu0 %v327
      %v433 = vpop.f32.mrb[0].mxu0
      %v434 = vadd.f32 0.0, %v433
      %v435 = vpop.f32.mrb[0].mxu0
      %v436 = vpop.f32.mrb[0].mxu0
      %v437 = vadd.f32 0.0, %v436
      %v438 = vpop.f32.mrb[0].mxu0
      %439 = vmatprep.mubr.bf16.mxu0 0
      %440 = vmatmul.mubr.bf16.gmra.mrb[0].mxu0 %v330
      %v441 = vpop.f32.mrb[0].mxu0
      %v442 = vadd.f32 0.0, %v441
      %v443 = vpop.f32.mrb[0].mxu0
      %v444 = vpop.f32.mrb[0].mxu0
      %v445 = vadd.f32 0.0, %v444
      %v446 = vpop.f32.mrb[0].mxu0
      %447 = vmatprep.mubr.bf16.mxu0 0
      %448 = vmatmul.mubr.bf16.gmra.mrb[0].mxu0 %v333
      %v449 = vpop.f32.mrb[0].mxu0
      %v450 = vadd.f32 0.0, %v449
      %v451 = vpop.f32.mrb[0].mxu0
      %v452 = vpop.f32.mrb[0].mxu0
      %v453 = vadd.f32 0.0, %v452
      %v454 = vpop.f32.mrb[0].mxu0
      %455 = vmatprep.mubr.bf16.mxu0 0
      %456 = vmatmul.mubr.bf16.gmra.mrb[0].mxu0 %v336
      %v457 = vpop.f32.mrb[0].mxu0
      %v458 = vadd.f32 0.0, %v457
      %v459 = vpop.f32.mrb[0].mxu0
      %v460 = vpop.f32.mrb[0].mxu0
      %v461 = vadd.f32 0.0, %v460
      %v462 = vpop.f32.mrb[0].mxu0
      %463 = vmatprep.mubr.bf16.mxu0 0
      %464 = vmatmul.mubr.bf16.gmra.mrb[0].mxu0 %v339
      %v465 = vpop.f32.mrb[0].mxu0
      %v466 = vadd.f32 0.0, %v465
      %v467 = vpop.f32.mrb[0].mxu0
      %v468 = vpop.f32.mrb[0].mxu0
      %v469 = vadd.f32 0.0, %v468
      %v470 = vpop.f32.mrb[0].mxu0
      %471 = vmatprep.mubr.bf16.mxu0 0
      %472 = vmatmul.mubr.bf16.gmra.mrb[0].mxu0 %v342
      %v473 = vpop.f32.mrb[0].mxu0
      %v474 = vadd.f32 0.0, %v473
      %v475 = vpop.f32.mrb[0].mxu0
      %v476 = vpop.f32.mrb[0].mxu0
      %v477 = vadd.f32 0.0, %v476
      %v478 = vpop.f32.mrb[0].mxu0
      %479 = vmatprep.mubr.bf16.mxu0 0
      %480 = vmatmul.mubr.bf16.gmra.mrb[0].mxu0 %v345
      %v481 = vpop.f32.mrb[0].mxu0
      %v482 = vadd.f32 0.0, %v481
      %v483 = vpop.f32.mrb[0].mxu0
      %v484 = vpop.f32.mrb[0].mxu0
      %v485 = vpop.f32.mrb[0].mxu0
      %486 = vdwg.mxu0
      %512 = vrot.lane.b32.xlu0 %v386, 96
      %v513 = vpop.permute.xlu0 %512
      %514 = vrot.lane.b32.xlu0 %v389, 96
      %v515 = vpop.permute.xlu0 %514
      %516 = vrot.lane.b32.xlu0 %v394, 96
      %v517 = vpop.permute.xlu0 %516
      %518 = vrot.lane.b32.xlu0 %v397, 96
      %v519 = vpop.permute.xlu0 %518
      %520 = vrot.lane.b32.xlu0 %v402, 96
      %v521 = vpop.permute.xlu0 %520
      %522 = vrot.lane.b32.xlu0 %v405, 96
      %v523 = vpop.permute.xlu0 %522
      %524 = vrot.lane.b32.xlu0 %v410, 96
      %v525 = vpop.permute.xlu0 %524
      %526 = vrot.lane.b32.xlu0 %v413, 96
      %v527 = vpop.permute.xlu0 %526
      %528 = vrot.lane.b32.xlu0 %v418, 96
      %v529 = vpop.permute.xlu0 %528
      %530 = vrot.lane.b32.xlu0 %v421, 96
      %v531 = vpop.permute.xlu0 %530
      %532 = vrot.lane.b32.xlu0 %v426, 96
      %v533 = vpop.permute.xlu0 %532
      %534 = vrot.lane.b32.xlu0 %v429, 96
      %v535 = vpop.permute.xlu0 %534
      %536 = vrot.lane.b32.xlu0 %v434, 96
      %v537 = vpop.permute.xlu0 %536
      %538 = vrot.lane.b32.xlu0 %v437, 96
      %v539 = vpop.permute.xlu0 %538
      %540 = vrot.lane.b32.xlu0 %v442, 96
      %v541 = vpop.permute.xlu0 %540
      %542 = vrot.lane.b32.xlu0 %v445, 96
      %v543 = vpop.permute.xlu0 %542
      %544 = vrot.lane.b32.xlu0 %v450, 96
      %v545 = vpop.permute.xlu0 %544
      %546 = vrot.lane.b32.xlu0 %v453, 96
      %v547 = vpop.permute.xlu0 %546
      %548 = vrot.lane.b32.xlu0 %v458, 96
      %v549 = vpop.permute.xlu0 %548
      %550 = vrot.lane.b32.xlu0 %v461, 96
      %v551 = vpop.permute.xlu0 %550
      %552 = vrot.lane.b32.xlu0 %v466, 96
      %v553 = vpop.permute.xlu0 %552
      %554 = vrot.lane.b32.xlu0 %v469, 96
      %v555 = vpop.permute.xlu0 %554
      %556 = vrot.lane.b32.xlu0 %v474, 96
      %v557 = vpop.permute.xlu0 %556
      %558 = vrot.lane.b32.xlu0 %v477, 96
      %v559 = vpop.permute.xlu0 %558
      %560 = vrot.lane.b32.xlu0 %v482, 96
      %v561 = vpop.permute.xlu0 %560
      %v587 = vmax.f32 %v386, %v513
      %v588 = vmax.f32 %v389, %v515
      %v589 = vmax.f32 %v394, %v517
      %v590 = vmax.f32 %v397, %v519
      %v591 = vmax.f32 %v402, %v521
      %v592 = vmax.f32 %v405, %v523
      %v593 = vmax.f32 %v410, %v525
      %v594 = vmax.f32 %v413, %v527
      %v595 = vmax.f32 %v418, %v529
      %v596 = vmax.f32 %v421, %v531
      %v597 = vmax.f32 %v426, %v533
      %v598 = vmax.f32 %v429, %v535
      %v599 = vmax.f32 %v434, %v537
      %v600 = vmax.f32 %v437, %v539
      %v601 = vmax.f32 %v442, %v541
      %v602 = vmax.f32 %v445, %v543
      %v603 = vmax.f32 %v450, %v545
      %v604 = vmax.f32 %v453, %v547
      %v605 = vmax.f32 %v458, %v549
      %v606 = vmax.f32 %v461, %v551
      %v607 = vmax.f32 %v466, %v553
      %v608 = vmax.f32 %v469, %v555
      %v609 = vmax.f32 %v474, %v557
      %v610 = vmax.f32 %v477, %v559
      %v611 = vmax.f32 %v482, %v561
      %637 = vrot.lane.b32.xlu0 %v587, 64
      %v638 = vpop.permute.xlu0 %637
      %639 = vrot.lane.b32.xlu0 %v588, 64
      %v640 = vpop.permute.xlu0 %639
      %641 = vrot.lane.b32.xlu0 %v589, 64
      %v642 = vpop.permute.xlu0 %641
      %643 = vrot.lane.b32.xlu0 %v590, 64
      %v644 = vpop.permute.xlu0 %643
      %645 = vrot.lane.b32.xlu0 %v591, 64
      %v646 = vpop.permute.xlu0 %645
      %647 = vrot.lane.b32.xlu0 %v592, 64
      %v648 = vpop.permute.xlu0 %647
      %649 = vrot.lane.b32.xlu0 %v593, 64
      %v650 = vpop.permute.xlu0 %649
      %651 = vrot.lane.b32.xlu0 %v594, 64
      %v652 = vpop.permute.xlu0 %651
      %653 = vrot.lane.b32.xlu0 %v595, 64
      %v654 = vpop.permute.xlu0 %653
      %655 = vrot.lane.b32.xlu0 %v596, 64
      %v656 = vpop.permute.xlu0 %655
      %657 = vrot.lane.b32.xlu0 %v597, 64
      %v658 = vpop.permute.xlu0 %657
      %659 = vrot.lane.b32.xlu0 %v598, 64
      %v660 = vpop.permute.xlu0 %659
      %661 = vrot.lane.b32.xlu0 %v599, 64
      %v662 = vpop.permute.xlu0 %661
      %663 = vrot.lane.b32.xlu0 %v600, 64
      %v664 = vpop.permute.xlu0 %663
      %665 = vrot.lane.b32.xlu0 %v601, 64
      %v666 = vpop.permute.xlu0 %665
      %667 = vrot.lane.b32.xlu0 %v602, 64
      %v668 = vpop.permute.xlu0 %667
      %669 = vrot.lane.b32.xlu0 %v603, 64
      %v670 = vpop.permute.xlu0 %669
      %671 = vrot.lane.b32.xlu0 %v604, 64
      %v672 = vpop.permute.xlu0 %671
      %673 = vrot.lane.b32.xlu0 %v605, 64
      %v674 = vpop.permute.xlu0 %673
      %675 = vrot.lane.b32.xlu0 %v606, 64
      %v676 = vpop.permute.xlu0 %675
      %677 = vrot.lane.b32.xlu0 %v607, 64
      %v678 = vpop.permute.xlu0 %677
      %679 = vrot.lane.b32.xlu0 %v608, 64
      %v680 = vpop.permute.xlu0 %679
      %681 = vrot.lane.b32.xlu0 %v609, 64
      %v682 = vpop.permute.xlu0 %681
      %683 = vrot.lane.b32.xlu0 %v610, 64
      %v684 = vpop.permute.xlu0 %683
      %685 = vrot.lane.b32.xlu0 %v611, 64
      %v686 = vpop.permute.xlu0 %685
      %v712 = vmax.f32 %v587, %v638
      %v713 = vmax.f32 %v588, %v640
      %v714 = vmax.f32 %v589, %v642
      %v715 = vmax.f32 %v590, %v644
      %v716 = vmax.f32 %v591, %v646
      %v717 = vmax.f32 %v592, %v648
      %v718 = vmax.f32 %v593, %v650
      %v719 = vmax.f32 %v594, %v652
      %v720 = vmax.f32 %v595, %v654
      %v721 = vmax.f32 %v596, %v656
      %v722 = vmax.f32 %v597, %v658
      %v723 = vmax.f32 %v598, %v660
      %v724 = vmax.f32 %v599, %v662
      %v725 = vmax.f32 %v600, %v664
      %v726 = vmax.f32 %v601, %v666
      %v727 = vmax.f32 %v602, %v668
      %v728 = vmax.f32 %v603, %v670
      %v729 = vmax.f32 %v604, %v672
      %v730 = vmax.f32 %v605, %v674
      %v731 = vmax.f32 %v606, %v676
      %v732 = vmax.f32 %v607, %v678
      %v733 = vmax.f32 %v608, %v680
      %v734 = vmax.f32 %v609, %v682
      %v735 = vmax.f32 %v610, %v684
      %v736 = vmax.f32 %v611, %v686
      %v737 = vld [vmem:[%s2] sm:$0x1]
      %v739 = vlaneseq
      %v740 = vshrl.u32 %v739, 7
      %v741 = vsub.s32 0, %v740
      %v742 = vrot.slane %v737, %v741
      %v744 = vmul.f32 %v712, %v742
      %v745 = vmul.f32 %v713, %v742
      %v746 = vmul.f32 %v714, %v742
      %v747 = vmul.f32 %v715, %v742
      %v748 = vmul.f32 %v716, %v742
      %v749 = vmul.f32 %v717, %v742
      %v750 = vmul.f32 %v718, %v742
      %v751 = vmul.f32 %v719, %v742
      %v752 = vmul.f32 %v720, %v742
      %v753 = vmul.f32 %v721, %v742
      %v754 = vmul.f32 %v722, %v742
      %v755 = vmul.f32 %v723, %v742
      %v756 = vmul.f32 %v724, %v742
      %v757 = vmul.f32 %v725, %v742
      %v758 = vmul.f32 %v726, %v742
      %v759 = vmul.f32 %v727, %v742
      %v760 = vmul.f32 %v728, %v742
      %v761 = vmul.f32 %v729, %v742
      %v762 = vmul.f32 %v730, %v742
      %v763 = vmul.f32 %v731, %v742
      %v764 = vmul.f32 %v732, %v742
      %v765 = vmul.f32 %v733, %v742
      %v766 = vmul.f32 %v734, %v742
      %v767 = vmul.f32 %v735, %v742
      %v768 = vmul.f32 %v736, %v742
      %v769 = vld [vmem:[%s3] sm:$0x1]
      %v771 = vlaneseq
      %v772 = vshrl.u32 %v771, 7
      %v773 = vsub.s32 0, %v772
      %v774 = vrot.slane %v769, %v773
      %v776 = vadd.f32 %v744, %v774
      %v777 = vadd.f32 %v745, %v774
      %v778 = vadd.f32 %v746, %v774
      %v779 = vadd.f32 %v747, %v774
      %v780 = vadd.f32 %v748, %v774
      %v781 = vadd.f32 %v749, %v774
      %v782 = vadd.f32 %v750, %v774
      %v783 = vadd.f32 %v751, %v774
      %v784 = vadd.f32 %v752, %v774
      %v785 = vadd.f32 %v753, %v774
      %v786 = vadd.f32 %v754, %v774
      %v787 = vadd.f32 %v755, %v774
      %v788 = vadd.f32 %v756, %v774
      %v789 = vadd.f32 %v757, %v774
      %v790 = vadd.f32 %v758, %v774
      %v791 = vadd.f32 %v759, %v774
      %v792 = vadd.f32 %v760, %v774
      %v793 = vadd.f32 %v761, %v774
      %v794 = vadd.f32 %v762, %v774
      %v795 = vadd.f32 %v763, %v774
      %v796 = vadd.f32 %v764, %v774
      %v797 = vadd.f32 %v765, %v774
      %v798 = vadd.f32 %v766, %v774
      %v799 = vadd.f32 %v767, %v774
      %v800 = vadd.f32 %v768, %v774
      %v801 = vsub.f32 0.0, %v776
      %v802 = vsub.f32 0.0, %v777
      %v803 = vsub.f32 0.0, %v778
      %v804 = vsub.f32 0.0, %v779
      %v805 = vsub.f32 0.0, %v780
      %v806 = vsub.f32 0.0, %v781
      %v807 = vsub.f32 0.0, %v782
      %v808 = vsub.f32 0.0, %v783
      %v809 = vsub.f32 0.0, %v784
      %v810 = vsub.f32 0.0, %v785
      %v811 = vsub.f32 0.0, %v786
      %v812 = vsub.f32 0.0, %v787
      %v813 = vsub.f32 0.0, %v788
      %v814 = vsub.f32 0.0, %v789
      %v815 = vsub.f32 0.0, %v790
      %v816 = vsub.f32 0.0, %v791
      %v817 = vsub.f32 0.0, %v792
      %v818 = vsub.f32 0.0, %v793
      %v819 = vsub.f32 0.0, %v794
      %v820 = vsub.f32 0.0, %v795
      %v821 = vsub.f32 0.0, %v796
      %v822 = vsub.f32 0.0, %v797
      %v823 = vsub.f32 0.0, %v798
      %v824 = vsub.f32 0.0, %v799
      %v825 = vsub.f32 0.0, %v800
      %v826 = vmul.f32 %v801, 1.442695
      %v827 = vpow.pop %v826
      %v828 = vmul.f32 %v802, 1.442695
      %v829 = vpow.pop %v828
      %v830 = vmul.f32 %v803, 1.442695
      %v831 = vpow.pop %v830
      %v832 = vmul.f32 %v804, 1.442695
      %v833 = vpow.pop %v832
      %v834 = vmul.f32 %v805, 1.442695
      %v835 = vpow.pop %v834
      %v836 = vmul.f32 %v806, 1.442695
      %v837 = vpow.pop %v836
      %v838 = vmul.f32 %v807, 1.442695
      %v839 = vpow.pop %v838
      %v840 = vmul.f32 %v808, 1.442695
      %v841 = vpow.pop %v840
      %v842 = vmul.f32 %v809, 1.442695
      %v843 = vpow.pop %v842
      %v844 = vmul.f32 %v810, 1.442695
      %v845 = vpow.pop %v844
      %v846 = vmul.f32 %v811, 1.442695
      %v847 = vpow.pop %v846
      %v848 = vmul.f32 %v812, 1.442695
      %v849 = vpow.pop %v848
      %v850 = vmul.f32 %v813, 1.442695
      %v851 = vpow.pop %v850
      %v852 = vmul.f32 %v814, 1.442695
      %v853 = vpow.pop %v852
      %v854 = vmul.f32 %v815, 1.442695
      %v855 = vpow.pop %v854
      %v856 = vmul.f32 %v816, 1.442695
      %v857 = vpow.pop %v856
      %v858 = vmul.f32 %v817, 1.442695
      %v859 = vpow.pop %v858
      %v860 = vmul.f32 %v818, 1.442695
      %v861 = vpow.pop %v860
      %v862 = vmul.f32 %v819, 1.442695
      %v863 = vpow.pop %v862
      %v864 = vmul.f32 %v820, 1.442695
      %v865 = vpow.pop %v864
      %v866 = vmul.f32 %v821, 1.442695
      %v867 = vpow.pop %v866
      %v868 = vmul.f32 %v822, 1.442695
      %v869 = vpow.pop %v868
      %v870 = vmul.f32 %v823, 1.442695
      %v871 = vpow.pop %v870
      %v872 = vmul.f32 %v824, 1.442695
      %v873 = vpow.pop %v872
      %v874 = vmul.f32 %v825, 1.442695
      %v875 = vpow.pop %v874
      %v876 = vadd.f32 %v827, 1.0
      %v877 = vadd.f32 %v829, 1.0
      %v878 = vadd.f32 %v831, 1.0
      %v879 = vadd.f32 %v833, 1.0
      %v880 = vadd.f32 %v835, 1.0
      %v881 = vadd.f32 %v837, 1.0
      %v882 = vadd.f32 %v839, 1.0
      %v883 = vadd.f32 %v841, 1.0
      %v884 = vadd.f32 %v843, 1.0
      %v885 = vadd.f32 %v845, 1.0
      %v886 = vadd.f32 %v847, 1.0
      %v887 = vadd.f32 %v849, 1.0
      %v888 = vadd.f32 %v851, 1.0
      %v889 = vadd.f32 %v853, 1.0
      %v890 = vadd.f32 %v855, 1.0
      %v891 = vadd.f32 %v857, 1.0
      %v892 = vadd.f32 %v859, 1.0
      %v893 = vadd.f32 %v861, 1.0
      %v894 = vadd.f32 %v863, 1.0
      %v895 = vadd.f32 %v865, 1.0
      %v896 = vadd.f32 %v867, 1.0
      %v897 = vadd.f32 %v869, 1.0
      %v898 = vadd.f32 %v871, 1.0
      %v899 = vadd.f32 %v873, 1.0
      %v900 = vadd.f32 %v875, 1.0
      %v901 = vrcp.pop %v876
      %v902 = vrcp.pop %v877
      %v903 = vrcp.pop %v878
      %v904 = vrcp.pop %v879
      %v905 = vrcp.pop %v880
      %v906 = vrcp.pop %v881
      %v907 = vrcp.pop %v882
      %v908 = vrcp.pop %v883
      %v909 = vrcp.pop %v884
      %v910 = vrcp.pop %v885
      %v911 = vrcp.pop %v886
      %v912 = vrcp.pop %v887
      %v913 = vrcp.pop %v888
      %v914 = vrcp.pop %v889
      %v915 = vrcp.pop %v890
      %v916 = vrcp.pop %v891
      %v917 = vrcp.pop %v892
      %v918 = vrcp.pop %v893
      %v919 = vrcp.pop %v894
      %v920 = vrcp.pop %v895
      %v921 = vrcp.pop %v896
      %v922 = vrcp.pop %v897
      %v923 = vrcp.pop %v898
      %v924 = vrcp.pop %v899
      %v925 = vrcp.pop %v900
      %v926 = vpack.c.bf16 %v902, %v901
      %v927 = vpack.c.bf16 %v904, %v903
      %v928 = vpack.c.bf16 %v906, %v905
      %v929 = vpack.c.bf16 %v908, %v907
      %v930 = vpack.c.bf16 %v910, %v909
      %v931 = vpack.c.bf16 %v912, %v911
      %v932 = vpack.c.bf16 %v914, %v913
      %v933 = vpack.c.bf16 %v916, %v915
      %v934 = vpack.c.bf16 %v918, %v917
      %v935 = vpack.c.bf16 %v920, %v919
      %v936 = vpack.c.bf16 %v922, %v921
      %v937 = vpack.c.bf16 %v924, %v923
      %v938 = vpack.c.bf16 %v925, %v925
      %v952 = vunpack.c.l.b16 %v926
      %v953 = vunpack.c.h.b16 %v926
      %v954 = vunpack.c.l.b16 %v927
      %v955 = vunpack.c.h.b16 %v927
      %v956 = vunpack.c.l.b16 %v928
      %v957 = vunpack.c.h.b16 %v928
      %v958 = vunpack.c.l.b16 %v929
      %v959 = vunpack.c.h.b16 %v929
      %v960 = vunpack.c.l.b16 %v930
      %v961 = vunpack.c.h.b16 %v930
      %v962 = vunpack.c.l.b16 %v931
      %v963 = vunpack.c.h.b16 %v931
      %v964 = vunpack.c.l.b16 %v932
      %v965 = vunpack.c.h.b16 %v932
      %v966 = vunpack.c.l.b16 %v933
      %v967 = vunpack.c.h.b16 %v933
      %v968 = vunpack.c.l.b16 %v934
      %v969 = vunpack.c.h.b16 %v934
      %v970 = vunpack.c.l.b16 %v935
      %v971 = vunpack.c.h.b16 %v935
      %v972 = vunpack.c.l.b16 %v936
      %v973 = vunpack.c.h.b16 %v936
      %v974 = vunpack.c.l.b16 %v937
      %v975 = vunpack.c.h.b16 %v937
      %v976 = vunpack.c.l.b16 %v938
      %v977 = vpack.c.b16 %v952, %v952
      %v978 = vpack.c.b16 %v953, %v953
      %v979 = vpack.c.b16 %v954, %v954
      %v980 = vpack.c.b16 %v955, %v955
      %v981 = vpack.c.b16 %v956, %v956
      %v982 = vpack.c.b16 %v957, %v957
      %v983 = vpack.c.b16 %v958, %v958
      %v984 = vpack.c.b16 %v959, %v959
      %v985 = vpack.c.b16 %v960, %v960
      %v986 = vpack.c.b16 %v961, %v961
      %v987 = vpack.c.b16 %v962, %v962
      %v988 = vpack.c.b16 %v963, %v963
      %v989 = vpack.c.b16 %v964, %v964
      %v990 = vpack.c.b16 %v965, %v965
      %v991 = vpack.c.b16 %v966, %v966
      %v992 = vpack.c.b16 %v967, %v967
      %v993 = vpack.c.b16 %v968, %v968
      %v994 = vpack.c.b16 %v969, %v969
      %v995 = vpack.c.b16 %v970, %v970
      %v996 = vpack.c.b16 %v971, %v971
      %v997 = vpack.c.b16 %v972, %v972
      %v998 = vpack.c.b16 %v973, %v973
      %v999 = vpack.c.b16 %v974, %v974
      %v1000 = vpack.c.b16 %v975, %v975
      %v1001 = vpack.c.b16 %v976, %v976
      %vm1027 = vcmask 257024
      %1028 = vst.msk [vmem:[%s197] sm:$0xf] %vm1027, %v977
      %1029 = vst.msk [vmem:[%s197 + $0x4] sm:$0xf] %vm1027, %v978
      %1030 = vst.msk [vmem:[%s197 + $0x8] sm:$0xf] %vm1027, %v979
      %1031 = vst.msk [vmem:[%s197 + $0xc] sm:$0xf] %vm1027, %v980
      %1032 = vst.msk [vmem:[%s197 + $0x10] sm:$0xf] %vm1027, %v981
      %1033 = vst.msk [vmem:[%s197 + $0x14] sm:$0xf] %vm1027, %v982
      %1034 = vst.msk [vmem:[%s197 + $0x18] sm:$0xf] %vm1027, %v983
      %1035 = vst.msk [vmem:[%s197 + $0x1c] sm:$0xf] %vm1027, %v984
      %1036 = vst.msk [vmem:[%s197 + $0x20] sm:$0xf] %vm1027, %v985
      %1037 = vst.msk [vmem:[%s197 + $0x24] sm:$0xf] %vm1027, %v986
      %1038 = vst.msk [vmem:[%s197 + $0x28] sm:$0xf] %vm1027, %v987
      %1039 = vst.msk [vmem:[%s197 + $0x2c] sm:$0xf] %vm1027, %v988
      %1040 = vst.msk [vmem:[%s197 + $0x30] sm:$0xf] %vm1027, %v989
      %1041 = vst.msk [vmem:[%s197 + $0x34] sm:$0xf] %vm1027, %v990
      %1042 = vst.msk [vmem:[%s197 + $0x38] sm:$0xf] %vm1027, %v991
      %1043 = vst.msk [vmem:[%s197 + $0x3c] sm:$0xf] %vm1027, %v992
      %1044 = vst.msk [vmem:[%s197 + $0x40] sm:$0xf] %vm1027, %v993
      %1045 = vst.msk [vmem:[%s197 + $0x44] sm:$0xf] %vm1027, %v994
      %1046 = vst.msk [vmem:[%s197 + $0x48] sm:$0xf] %vm1027, %v995
      %1047 = vst.msk [vmem:[%s197 + $0x4c] sm:$0xf] %vm1027, %v996
      %1048 = vst.msk [vmem:[%s197 + $0x50] sm:$0xf] %vm1027, %v997
      %1049 = vst.msk [vmem:[%s197 + $0x54] sm:$0xf] %vm1027, %v998
      %1050 = vst.msk [vmem:[%s197 + $0x58] sm:$0xf] %vm1027, %v999
      %1051 = vst.msk [vmem:[%s197 + $0x5c] sm:$0xf] %vm1027, %v1000
      %vm1052 = vcmask 254976
      %1053 = vst.msk [vmem:[%s197 + $0x60] sm:$0x3] %vm1052, %v1001
      %p1054 = scmp.lt.s32.totalorder %s15, 1
      %s1055 = scalar_select %p1054, %s15, 1
      %s1056 = smul.addr %s1055, 25
      %s1057 = smul.addr %s1056, 4
      %s1058 = scalar_lea.vmem %s4, %s1057
      // Predicated region
      $region37: #{forward.3} parent=35 // pred_check
        %p1059 = pneg %p122
      $region38: #{forward.3} parent=35 // pred_check_branch
        %1061 = sbr.rel (%p1059) target = $region40
      $region39: #{forward.3} parent=35 // pred_region
        _
      $region40: #{forward.3} parent=35 // pred_fallthru
        _
    $region36: #{forward.3} parent=5 // pred_fallthru
      _
    %p1062 = scmp.le.s32.totalorder 2, %s10
    // Predicated region
    $region41: #{forward.3} parent=5 // pred_check
      %p1063 = pneg %p1062
    $region42: #{forward.3} parent=5 // pred_check_branch
      %1065 = sbr.rel (%p1063) target = $region44
    $region43: #{forward.3} parent=5 // pred_region
      %s1066 = ssub.s32 %s10, 2
      // Predicated region
      $region45: #{forward.3} parent=43 // pred_check
        %p1067 = pneg %p128
      $region46: #{forward.3} parent=43 // pred_check_branch
        %1069 = sbr.rel (%p1067) target = $region48
      $region47: #{forward.3} parent=43 // pred_region
        %p1070 = scmp.lt.s32.totalorder %s16, 1
        %s1071 = scalar_select %p1070, %s16, 1
        %s1072 = smul.addr %s1071, 25
        %s1073 = smul.addr %s1072, 4
        %s1074 = scalar_lea.vmem %s4, %s1073
      $region48: #{forward.3} parent=43 // pred_fallthru
        _
    $region44: #{forward.3} parent=5 // pred_fallthru
      _
  $region6: #{forward.3} parent=0 // loop_footer
    %s14 = sadd.s32 1, %s10
  $region7: #{forward.3} parent=0 // loop_footer_branch
    %9 = sbr.rel target = $region3
  $region8: #{forward.3} parent=0 // loop_exit
    _

// kernel: forward.4
$region0: #{forward.4}
  #allocation0 [shape = 'u32[]', space=smem, size = 0x4, offset = 0x4, fixed_abs, tag = 'smem constant byte address 0x4 - core index']
  #allocation1 [shape = 'u32[144,128]{1,0:T(1,128)}', space=vmem, size = 0x12000, scoped, tag = 'internal scratch']
  %s0 = inlined_call_operand.vmem [shape: bf16[2,49,1152], index: 0, kind: input, shape index: {}]
  %s1 = inlined_call_operand.vmem [shape: bf16[1152,128], index: 1, kind: input, shape index: {}]
  %s2 = inlined_call_operand.vmem [shape: f32[1,32], index: 2, kind: input, shape index: {}]
  %s3 = inlined_call_operand.vmem [shape: f32[1,32], index: 3, kind: input, shape index: {}]
  %s4 = inlined_call_operand.vmem [shape: bf16[2,49,32], index: 4, kind: output, shape index: {}]
  %s5 = sld [smem:[#allocation0]]
  $region49: #{forward.4} parent=0
    _
  %s7 = ssub.s32 1, %s5
  %s8 = scalar_select 0, %s7, %s5
  loop: start=0, step=1, limit=4
  $region2: #{forward.4} parent=0 // loop_pre_header
    _
  $region3: #{forward.4} parent=0 // loop_header
    %s10 = sphi 0, %s14
    %p11 = scmp.ge.s32.totalorder %s10, 4
    %s20 = sphi 0, %s22
    %s23 = sphi 0, %s20
    %s24 = sphi 0, %s23
    %s40 = sphi 0, %s24
    %s44 = sphi 0, %s44
    %s46 = sphi 0, %s44
    %s47 = sphi 0, %s46
    %s61 = sphi 0, %s47
    %s65 = sphi 0, %s65
    %s67 = sphi 0, %s65
    %s68 = sphi 0, %s67
    %s82 = sphi 0, %s68
    %s86 = sphi 0, %s86
    %s88 = sphi 0, %s86
    %s89 = sphi 0, %s88
    %s103 = sphi 0, %s89
    %s109 = sphi 0, %s111
    %s112 = sphi 0, %s109
    %s113 = sphi 0, %s112
    %s129 = sphi 0, %s113
  $region4: #{forward.4} parent=0 // loop_header_branch
    %13 = sbr.rel (%p11) target = $region8
  $region5: #{forward.4} parent=0 // loop_body
    %s15 = ssub.s32 %s10, 1
    %s16 = ssub.s32 %s10, 2
    %s17 = sadd.s32 %s10, 1
    %s18 = ssub.s32 %s10, %s17
    %p19 = scmp.eq.s32.totalorder %s18, 0
    %s21 = sadd.s32 %s20, 1
    %s22 = scalar_select %p19, %s20, %s21
    %p25 = pneg %p19
    %p26 = scmp.eq.s32.totalorder %s10, 1
    %p27 = por %p25, %p26
    %p28 = scmp.ne.s32.totalorder %s20, %s23
    %p29 = scmp.eq.s32.totalorder %s10, 0
    %p30 = por %p28, %p29
    %p31 = scmp.ne.s32.totalorder %s20, %s23
    %p32 = scmp.eq.s32.totalorder %s15, 1
    %p33 = por %p31, %p32
    %p34 = scmp.ne.s32.totalorder %s23, %s24
    %p35 = scmp.eq.s32.totalorder %s15, 0
    %p36 = por %p34, %p35
    %p37 = scmp.ne.s32.totalorder %s23, %s24
    %p38 = scmp.eq.s32.totalorder %s16, 1
    %p39 = por %p37, %p38
    %p41 = scmp.ne.s32.totalorder %s24, %s40
    %p42 = scmp.eq.s32.totalorder %s16, 0
    %p43 = por %p41, %p42
    %s45 = sadd.s32 %s44, 1
    %p48 = scmp.eq.s32.totalorder %s10, 1
    %p49 = scmp.ne.s32.totalorder %s44, %s46
    %p50 = scmp.eq.s32.totalorder %s10, 0
    %p51 = por %p49, %p50
    %p52 = scmp.ne.s32.totalorder %s44, %s46
    %p53 = scmp.eq.s32.totalorder %s15, 1
    %p54 = por %p52, %p53
    %p55 = scmp.ne.s32.totalorder %s46, %s47
    %p56 = scmp.eq.s32.totalorder %s15, 0
    %p57 = por %p55, %p56
    %p58 = scmp.ne.s32.totalorder %s46, %s47
    %p59 = scmp.eq.s32.totalorder %s16, 1
    %p60 = por %p58, %p59
    %p62 = scmp.ne.s32.totalorder %s47, %s61
    %p63 = scmp.eq.s32.totalorder %s16, 0
    %p64 = por %p62, %p63
    %s66 = sadd.s32 %s65, 1
    %p69 = scmp.eq.s32.totalorder %s10, 1
    %p70 = scmp.ne.s32.totalorder %s65, %s67
    %p71 = scmp.eq.s32.totalorder %s10, 0
    %p72 = por %p70, %p71
    %p73 = scmp.ne.s32.totalorder %s65, %s67
    %p74 = scmp.eq.s32.totalorder %s15, 1
    %p75 = por %p73, %p74
    %p76 = scmp.ne.s32.totalorder %s67, %s68
    %p77 = scmp.eq.s32.totalorder %s15, 0
    %p78 = por %p76, %p77
    %p79 = scmp.ne.s32.totalorder %s67, %s68
    %p80 = scmp.eq.s32.totalorder %s16, 1
    %p81 = por %p79, %p80
    %p83 = scmp.ne.s32.totalorder %s68, %s82
    %p84 = scmp.eq.s32.totalorder %s16, 0
    %p85 = por %p83, %p84
    %s87 = sadd.s32 %s86, 1
    %p90 = scmp.eq.s32.totalorder %s10, 1
    %p91 = scmp.ne.s32.totalorder %s86, %s88
    %p92 = scmp.eq.s32.totalorder %s10, 0
    %p93 = por %p91, %p92
    %p94 = scmp.ne.s32.totalorder %s86, %s88
    %p95 = scmp.eq.s32.totalorder %s15, 1
    %p96 = por %p94, %p95
    %p97 = scmp.ne.s32.totalorder %s88, %s89
    %p98 = scmp.eq.s32.totalorder %s15, 0
    %p99 = por %p97, %p98
    %p100 = scmp.ne.s32.totalorder %s88, %s89
    %p101 = scmp.eq.s32.totalorder %s16, 1
    %p102 = por %p100, %p101
    %p104 = scmp.ne.s32.totalorder %s89, %s103
    %p105 = scmp.eq.s32.totalorder %s16, 0
    %p106 = por %p104, %p105
    %s107 = ssub.s32 %s10, %s17
    %p108 = scmp.eq.s32.totalorder %s107, 0
    %s110 = sadd.s32 %s109, 1
    %s111 = scalar_select %p108, %s109, %s110
    %p114 = pneg %p108
    %p115 = scmp.eq.s32.totalorder %s10, 1
    %p116 = por %p114, %p115
    %p117 = scmp.ne.s32.totalorder %s109, %s112
    %p118 = scmp.eq.s32.totalorder %s10, 0
    %p119 = por %p117, %p118
    %p120 = scmp.ne.s32.totalorder %s109, %s112
    %p121 = scmp.eq.s32.totalorder %s15, 1
    %p122 = por %p120, %p121
    %p123 = scmp.ne.s32.totalorder %s112, %s113
    %p124 = scmp.eq.s32.totalorder %s15, 0
    %p125 = por %p123, %p124
    %p126 = scmp.ne.s32.totalorder %s112, %s113
    %p127 = scmp.eq.s32.totalorder %s16, 1
    %p128 = por %p126, %p127
    %p130 = scmp.ne.s32.totalorder %s113, %s129
    %p131 = scmp.eq.s32.totalorder %s16, 0
    %p132 = por %p130, %p131
    %p133 = scmp.le.s32.totalorder 1, %s10
    %p134 = scmp.lt.s32.totalorder %s10, 3
    %p135 = pnand %p133, %p134
    %p136 = pneg %p135
    // Predicated region
    $region9: #{forward.4} parent=5 // pred_check
      _
    $region10: #{forward.4} parent=5 // pred_check_branch
      %138 = sbr.rel (%p135) target = $region12
    $region11: #{forward.4} parent=5 // pred_region
      %s139 = ssub.s32 %s10, 1
      // Predicated region
      $region13: #{forward.4} parent=11 // pred_check
        %p140 = pneg %p57
      $region14: #{forward.4} parent=11 // pred_check_branch
        %142 = sbr.rel (%p140) target = $region16
      $region15: #{forward.4} parent=11 // pred_region
        _
      $region16: #{forward.4} parent=11 // pred_fallthru
        _
      // Predicated region
      $region17: #{forward.4} parent=11 // pred_check
        %p143 = pneg %p78
      $region18: #{forward.4} parent=11 // pred_check_branch
        %145 = sbr.rel (%p143) target = $region20
      $region19: #{forward.4} parent=11 // pred_region
        _
      $region20: #{forward.4} parent=11 // pred_fallthru
        _
      // Predicated region
      $region21: #{forward.4} parent=11 // pred_check
        %p146 = pneg %p99
      $region22: #{forward.4} parent=11 // pred_check_branch
        %148 = sbr.rel (%p146) target = $region24
      $region23: #{forward.4} parent=11 // pred_region
        _
      $region24: #{forward.4} parent=11 // pred_fallthru
        _
    $region12: #{forward.4} parent=5 // pred_fallthru
      _
    %p149 = scmp.lt.s32.totalorder %s10, 2
    // Predicated region
    $region25: #{forward.4} parent=5 // pred_check
      %p150 = pneg %p149
    $region26: #{forward.4} parent=5 // pred_check_branch
      %152 = sbr.rel (%p150) target = $region28
    $region27: #{forward.4} parent=5 // pred_region
      // Predicated region
      $region29: #{forward.4} parent=27 // pred_check
        %p153 = pneg %p30
      $region30: #{forward.4} parent=27 // pred_check_branch
        %155 = sbr.rel (%p153) target = $region32
      $region31: #{forward.4} parent=27 // pred_region
        %p156 = scmp.lt.s32.totalorder %s10, 1
        %s157 = scalar_select %p156, %s10, 1
        %s158 = smul.addr %s157, 63
        %s159 = smul.addr %s158, 4
        %s160 = scalar_lea.vmem %s0, %s159
      $region32: #{forward.4} parent=27 // pred_fallthru
        _
    $region28: #{forward.4} parent=5 // pred_fallthru
      _
    %p161 = scmp.le.s32.totalorder 1, %s10
    %p162 = scmp.lt.s32.totalorder %s10, 3
    %p163 = pnand %p161, %p162
    %p164 = pneg %p163
    // Predicated region
    $region33: #{forward.4} parent=5 // pred_check
      _
    $region34: #{forward.4} parent=5 // pred_check_branch
      %166 = sbr.rel (%p163) target = $region36
    $region35: #{forward.4} parent=5 // pred_region
      %s167 = ssub.s32 %s10, 1
      %p168 = scmp.lt.s32.totalorder %s15, 1
      %s169 = scalar_select %p168, %s15, 1
      %s170 = smul.addr %s169, 63
      %s171 = smul.addr %s170, 4
      %s172 = scalar_lea.vmem %s0, %s171
      %p173 = pneg %p36
      %p174 = pneg %p33
      %p175 = pneg %p57
      %p176 = pneg %p54
      %p177 = pneg %p78
      %p178 = pneg %p75
      %p179 = pneg %p99
      %p180 = pneg %p96
      %p181 = pneg %p125
      %p182 = pneg %p122
      %p183 = scmp.lt.s32.totalorder %s15, 1
      %s184 = scalar_select %p183, %s15, 1
      %s185 = smul.addr %s184, 7
      %s186 = smul.addr %s185, 4
      %s187 = scalar_lea.vmem %s4, %s186
      %p188 = scmp.lt.s32.totalorder %s15, 1
      %s189 = scalar_select %p188, %s15, 1
      %s190 = smul.addr %s189, 63
      %s191 = smul.addr %s190, 4
      %s192 = scalar_lea.vmem %s0, %s191
      %p193 = scmp.lt.s32.totalorder %s15, 1
      %s194 = scalar_select %p193, %s15, 1
      %s195 = smul.addr %s194, 7
      %s196 = smul.addr %s195, 4
      %s197 = scalar_lea.vmem %s4, %s196
      %v199 = vld [vmem:[%s192] sm:$0xff]
      %v200 = vld [vmem:[%s192 + $0x8] sm:$0xff]
      %v201 = vld [vmem:[%s192 + $0x10] sm:$0xff]
      %v202 = vld [vmem:[%s192 + $0x18] sm:$0xff]
      %v203 = vld [vmem:[%s192 + $0x20] sm:$0xf]
      %v204 = vld [vmem:[%s192 + $0x24] sm:$0xff]
      %v205 = vld [vmem:[%s192 + $0x2c] sm:$0xff]
      %v206 = vld [vmem:[%s192 + $0x34] sm:$0xff]
      %v207 = vld [vmem:[%s192 + $0x3c] sm:$0xff]
      %v208 = vld [vmem:[%s192 + $0x44] sm:$0xf]
      %v209 = vld [vmem:[%s192 + $0x48] sm:$0xff]
      %v210 = vld [vmem:[%s192 + $0x50] sm:$0xff]
      %v211 = vld [vmem:[%s192 + $0x58] sm:$0xff]
      %v212 = vld [vmem:[%s192 + $0x60] sm:$0xff]
      %v213 = vld [vmem:[%s192 + $0x68] sm:$0xf]
      %v214 = vld [vmem:[%s192 + $0x6c] sm:$0xff]
      %v215 = vld [vmem:[%s192 + $0x74] sm:$0xff]
      %v216 = vld [vmem:[%s192 + $0x7c] sm:$0xff]
      %v217 = vld [vmem:[%s192 + $0x84] sm:$0xff]
      %v218 = vld [vmem:[%s192 + $0x8c] sm:$0xf]
      %v219 = vld [vmem:[%s192 + $0x90] sm:$0xff]
      %v220 = vld [vmem:[%s192 + $0x98] sm:$0xff]
      %v221 = vld [vmem:[%s192 + $0xa0] sm:$0xff]
      %v222 = vld [vmem:[%s192 + $0xa8] sm:$0xff]
      %v223 = vld [vmem:[%s192 + $0xb0] sm:$0xf]
      %v224 = vld [vmem:[%s192 + $0xb4] sm:$0xff]
      %v225 = vld [vmem:[%s192 + $0xbc] sm:$0xff]
      %v226 = vld [vmem:[%s192 + $0xc4] sm:$0xff]
      %v227 = vld [vmem:[%s192 + $0xcc] sm:$0xff]
      %v228 = vld [vmem:[%s192 + $0xd4] sm:$0xf]
      %v229 = vld [vmem:[%s192 + $0xd8] sm:$0x11]
      %v230 = vld [vmem:[%s192 + $0xe0] sm:$0x11]
      %v231 = vld [vmem:[%s192 + $0xe8] sm:$0x11]
      %v232 = vld [vmem:[%s192 + $0xf0] sm:$0x11]
      %v233 = vld [vmem:[%s192 + $0xf8] sm:$0x1]
      %v234 = vld [vmem:[%s1] sm:$0xf]
      %v235 = vld [vmem:[%s1 + $0x4] sm:$0xf]
      %v236 = vld [vmem:[%s1 + $0x8] sm:$0xf]
      %v237 = vld [vmem:[%s1 + $0xc] sm:$0xf]
      %v238 = vld [vmem:[%s1 + $0x10] sm:$0xf]
      %v239 = vld [vmem:[%s1 + $0x14] sm:$0xf]
      %v240 = vld [vmem:[%s1 + $0x18] sm:$0xf]
      %v241 = vld [vmem:[%s1 + $0x1c] sm:$0xf]
      %v242 = vld [vmem:[%s1 + $0x20] sm:$0xf]
      %v243 = vld [vmem:[%s1 + $0x24] sm:$0xf]
      %v244 = vld [vmem:[%s1 + $0x28] sm:$0xf]
      %v245 = vld [vmem:[%s1 + $0x2c] sm:$0xf]
      %v246 = vld [vmem:[%s1 + $0x30] sm:$0xf]
      %v247 = vld [vmem:[%s1 + $0x34] sm:$0xf]
      %v248 = vld [vmem:[%s1 + $0x38] sm:$0xf]
      %v249 = vld [vmem:[%s1 + $0x3c] sm:$0xf]
      %v250 = vld [vmem:[%s1 + $0x40] sm:$0xf]
      %v251 = vld [vmem:[%s1 + $0x44] sm:$0xf]
      %v252 = vld [vmem:[%s1 + $0x48] sm:$0xf]
      %v253 = vld [vmem:[%s1 + $0x4c] sm:$0xf]
      %v254 = vld [vmem:[%s1 + $0x50] sm:$0xf]
      %v255 = vld [vmem:[%s1 + $0x54] sm:$0xf]
      %v256 = vld [vmem:[%s1 + $0x58] sm:$0xf]
      %v257 = vld [vmem:[%s1 + $0x5c] sm:$0xf]
      %v258 = vld [vmem:[%s1 + $0x60] sm:$0xf]
      %v259 = vld [vmem:[%s1 + $0x64] sm:$0xf]
      %v260 = vld [vmem:[%s1 + $0x68] sm:$0xf]
      %v261 = vld [vmem:[%s1 + $0x6c] sm:$0xf]
      %v262 = vld [vmem:[%s1 + $0x70] sm:$0xf]
      %v263 = vld [vmem:[%s1 + $0x74] sm:$0xf]
      %v264 = vld [vmem:[%s1 + $0x78] sm:$0xf]
      %v265 = vld [vmem:[%s1 + $0x7c] sm:$0xf]
      %v266 = vld [vmem:[%s1 + $0x80] sm:$0xf]
      %v267 = vld [vmem:[%s1 + $0x84] sm:$0xf]
      %v268 = vld [vmem:[%s1 + $0x88] sm:$0xf]
      %v269 = vld [vmem:[%s1 + $0x8c] sm:$0xf]
      %v270 = vld [vmem:[%s1 + $0x90] sm:$0xf]
      %v271 = vld [vmem:[%s1 + $0x94] sm:$0xf]
      %v272 = vld [vmem:[%s1 + $0x98] sm:$0xf]
      %v273 = vld [vmem:[%s1 + $0x9c] sm:$0xf]
      %v274 = vld [vmem:[%s1 + $0xa0] sm:$0xf]
      %v275 = vld [vmem:[%s1 + $0xa4] sm:$0xf]
      %v276 = vld [vmem:[%s1 + $0xa8] sm:$0xf]
      %v277 = vld [vmem:[%s1 + $0xac] sm:$0xf]
      %v278 = vld [vmem:[%s1 + $0xb0] sm:$0xf]
      %v279 = vld [vmem:[%s1 + $0xb4] sm:$0xf]
      %v280 = vld [vmem:[%s1 + $0xb8] sm:$0xf]
      %v281 = vld [vmem:[%s1 + $0xbc] sm:$0xf]
      %v282 = vld [vmem:[%s1 + $0xc0] sm:$0xf]
      %v283 = vld [vmem:[%s1 + $0xc4] sm:$0xf]
      %v284 = vld [vmem:[%s1 + $0xc8] sm:$0xf]
      %v285 = vld [vmem:[%s1 + $0xcc] sm:$0xf]
      %v286 = vld [vmem:[%s1 + $0xd0] sm:$0xf]
      %v287 = vld [vmem:[%s1 + $0xd4] sm:$0xf]
      %v288 = vld [vmem:[%s1 + $0xd8] sm:$0xf]
      %v289 = vld [vmem:[%s1 + $0xdc] sm:$0xf]
      %v290 = vld [vmem:[%s1 + $0xe0] sm:$0xf]
      %v291 = vld [vmem:[%s1 + $0xe4] sm:$0xf]
      %v292 = vld [vmem:[%s1 + $0xe8] sm:$0xf]
      %v293 = vld [vmem:[%s1 + $0xec] sm:$0xf]
      %v294 = vld [vmem:[%s1 + $0xf0] sm:$0xf]
      %v295 = vld [vmem:[%s1 + $0xf4] sm:$0xf]
      %v296 = vld [vmem:[%s1 + $0xf8] sm:$0xf]
      %v297 = vld [vmem:[%s1 + $0xfc] sm:$0xf]
      %v298 = vld [vmem:[%s1 + $0x100] sm:$0xf]
      %v299 = vld [vmem:[%s1 + $0x104] sm:$0xf]
      %v300 = vld [vmem:[%s1 + $0x108] sm:$0xf]
      %v301 = vld [vmem:[%s1 + $0x10c] sm:$0xf]
      %v302 = vld [vmem:[%s1 + $0x110] sm:$0xf]
      %v303 = vld [vmem:[%s1 + $0x114] sm:$0xf]
      %v304 = vld [vmem:[%s1 + $0x118] sm:$0xf]
      %v305 = vld [vmem:[%s1 + $0x11c] sm:$0xf]
      %v306 = vld [vmem:[%s1 + $0x120] sm:$0xf]
      %v307 = vld [vmem:[%s1 + $0x124] sm:$0xf]
      %v308 = vld [vmem:[%s1 + $0x128] sm:$0xf]
      %v309 = vld [vmem:[%s1 + $0x12c] sm:$0xf]
      %v310 = vld [vmem:[%s1 + $0x130] sm:$0xf]
      %v311 = vld [vmem:[%s1 + $0x134] sm:$0xf]
      %v312 = vld [vmem:[%s1 + $0x138] sm:$0xf]
      %v313 = vld [vmem:[%s1 + $0x13c] sm:$0xf]
      %v314 = vld [vmem:[%s1 + $0x140] sm:$0xf]
      %v315 = vld [vmem:[%s1 + $0x144] sm:$0xf]
      %v316 = vld [vmem:[%s1 + $0x148] sm:$0xf]
      %v317 = vld [vmem:[%s1 + $0x14c] sm:$0xf]
      %v318 = vld [vmem:[%s1 + $0x150] sm:$0xf]
      %v319 = vld [vmem:[%s1 + $0x154] sm:$0xf]
      %v320 = vld [vmem:[%s1 + $0x158] sm:$0xf]
      %v321 = vld [vmem:[%s1 + $0x15c] sm:$0xf]
      %v322 = vld [vmem:[%s1 + $0x160] sm:$0xf]
      %v323 = vld [vmem:[%s1 + $0x164] sm:$0xf]
      %v324 = vld [vmem:[%s1 + $0x168] sm:$0xf]
      %v325 = vld [vmem:[%s1 + $0x16c] sm:$0xf]
      %v326 = vld [vmem:[%s1 + $0x170] sm:$0xf]
      %v327 = vld [vmem:[%s1 + $0x174] sm:$0xf]
      %v328 = vld [vmem:[%s1 + $0x178] sm:$0xf]
      %v329 = vld [vmem:[%s1 + $0x17c] sm:$0xf]
      %v330 = vld [vmem:[%s1 + $0x180] sm:$0xf]
      %v331 = vld [vmem:[%s1 + $0x184] sm:$0xf]
      %v332 = vld [vmem:[%s1 + $0x188] sm:$0xf]
      %v333 = vld [vmem:[%s1 + $0x18c] sm:$0xf]
      %v334 = vld [vmem:[%s1 + $0x190] sm:$0xf]
      %v335 = vld [vmem:[%s1 + $0x194] sm:$0xf]
      %v336 = vld [vmem:[%s1 + $0x198] sm:$0xf]
      %v337 = vld [vmem:[%s1 + $0x19c] sm:$0xf]
      %v338 = vld [vmem:[%s1 + $0x1a0] sm:$0xf]
      %v339 = vld [vmem:[%s1 + $0x1a4] sm:$0xf]
      %v340 = vld [vmem:[%s1 + $0x1a8] sm:$0xf]
      %v341 = vld [vmem:[%s1 + $0x1ac] sm:$0xf]
      %v342 = vld [vmem:[%s1 + $0x1b0] sm:$0xf]
      %v343 = vld [vmem:[%s1 + $0x1b4] sm:$0xf]
      %v344 = vld [vmem:[%s1 + $0x1b8] sm:$0xf]
      %v345 = vld [vmem:[%s1 + $0x1bc] sm:$0xf]
      %v346 = vld [vmem:[%s1 + $0x1c0] sm:$0xf]
      %v347 = vld [vmem:[%s1 + $0x1c4] sm:$0xf]
      %v348 = vld [vmem:[%s1 + $0x1c8] sm:$0xf]
      %v349 = vld [vmem:[%s1 + $0x1cc] sm:$0xf]
      %v350 = vld [vmem:[%s1 + $0x1d0] sm:$0xf]
      %v351 = vld [vmem:[%s1 + $0x1d4] sm:$0xf]
      %v352 = vld [vmem:[%s1 + $0x1d8] sm:$0xf]
      %v353 = vld [vmem:[%s1 + $0x1dc] sm:$0xf]
      %v354 = vld [vmem:[%s1 + $0x1e0] sm:$0xf]
      %v355 = vld [vmem:[%s1 + $0x1e4] sm:$0xf]
      %v356 = vld [vmem:[%s1 + $0x1e8] sm:$0xf]
      %v357 = vld [vmem:[%s1 + $0x1ec] sm:$0xf]
      %v358 = vld [vmem:[%s1 + $0x1f0] sm:$0xf]
      %v359 = vld [vmem:[%s1 + $0x1f4] sm:$0xf]
      %v360 = vld [vmem:[%s1 + $0x1f8] sm:$0xf]
      %v361 = vld [vmem:[%s1 + $0x1fc] sm:$0xf]
      %v362 = vld [vmem:[%s1 + $0x200] sm:$0xf]
      %v363 = vld [vmem:[%s1 + $0x204] sm:$0xf]
      %v364 = vld [vmem:[%s1 + $0x208] sm:$0xf]
      %v365 = vld [vmem:[%s1 + $0x20c] sm:$0xf]
      %v366 = vld [vmem:[%s1 + $0x210] sm:$0xf]
      %v367 = vld [vmem:[%s1 + $0x214] sm:$0xf]
      %v368 = vld [vmem:[%s1 + $0x218] sm:$0xf]
      %v369 = vld [vmem:[%s1 + $0x21c] sm:$0xf]
      %v370 = vld [vmem:[%s1 + $0x220] sm:$0xf]
      %v371 = vld [vmem:[%s1 + $0x224] sm:$0xf]
      %v372 = vld [vmem:[%s1 + $0x228] sm:$0xf]
      %v373 = vld [vmem:[%s1 + $0x22c] sm:$0xf]
      %v374 = vld [vmem:[%s1 + $0x230] sm:$0xf]
      %v375 = vld [vmem:[%s1 + $0x234] sm:$0xf]
      %v376 = vld [vmem:[%s1 + $0x238] sm:$0xf]
      %v377 = vld [vmem:[%s1 + $0x23c] sm:$0xf]
      %v413 = vunpack.c.l.b16 %v199
      %v414 = vunpack.c.h.b16 %v199
      %v415 = vunpack.c.l.b16 %v200
      %v416 = vunpack.c.h.b16 %v200
      %v417 = vunpack.c.l.b16 %v201
      %v418 = vunpack.c.h.b16 %v201
      %v419 = vunpack.c.l.b16 %v202
      %v420 = vunpack.c.h.b16 %v202
      %v421 = vunpack.c.l.b16 %v203
      %v422 = vunpack.c.l.b16 %v204
      %v423 = vunpack.c.h.b16 %v204
      %v424 = vunpack.c.l.b16 %v205
      %v425 = vunpack.c.h.b16 %v205
      %v426 = vunpack.c.l.b16 %v206
      %v427 = vunpack.c.h.b16 %v206
      %v428 = vunpack.c.l.b16 %v207
      %v429 = vunpack.c.h.b16 %v207
      %v430 = vunpack.c.l.b16 %v208
      %v431 = vunpack.c.l.b16 %v209
      %v432 = vunpack.c.h.b16 %v209
      %v433 = vunpack.c.l.b16 %v210
      %v434 = vunpack.c.h.b16 %v210
      %v435 = vunpack.c.l.b16 %v211
      %v436 = vunpack.c.h.b16 %v211
      %v437 = vunpack.c.l.b16 %v212
      %v438 = vunpack.c.h.b16 %v212
      %v439 = vunpack.c.l.b16 %v213
      %v440 = vunpack.c.l.b16 %v214
      %v441 = vunpack.c.h.b16 %v214
      %v442 = vunpack.c.l.b16 %v215
      %v443 = vunpack.c.h.b16 %v215
      %v444 = vunpack.c.l.b16 %v216
      %v445 = vunpack.c.h.b16 %v216
      %v446 = vunpack.c.l.b16 %v217
      %v447 = vunpack.c.h.b16 %v217
      %v448 = vunpack.c.l.b16 %v218
      %v449 = vunpack.c.l.b16 %v219
      %v450 = vunpack.c.h.b16 %v219
      %v451 = vunpack.c.l.b16 %v220
      %v452 = vunpack.c.h.b16 %v220
      %v453 = vunpack.c.l.b16 %v221
      %v454 = vunpack.c.h.b16 %v221
      %v455 = vunpack.c.l.b16 %v222
      %v456 = vunpack.c.h.b16 %v222
      %v457 = vunpack.c.l.b16 %v223
      %v458 = vunpack.c.l.b16 %v224
      %v459 = vunpack.c.h.b16 %v224
      %v460 = vunpack.c.l.b16 %v225
      %v461 = vunpack.c.h.b16 %v225
      %v462 = vunpack.c.l.b16 %v226
      %v463 = vunpack.c.h.b16 %v226
      %v464 = vunpack.c.l.b16 %v227
      %v465 = vunpack.c.h.b16 %v227
      %v466 = vunpack.c.l.b16 %v228
      %v467 = vunpack.c.l.b16 %v229
      %v468 = vunpack.c.h.b16 %v229
      %v469 = vunpack.c.l.b16 %v230
      %v470 = vunpack.c.h.b16 %v230
      %v471 = vunpack.c.l.b16 %v231
      %v472 = vunpack.c.h.b16 %v231
      %v473 = vunpack.c.l.b16 %v232
      %v474 = vunpack.c.h.b16 %v232
      %v475 = vunpack.c.l.b16 %v233
      %v476 = vpack.c.b16 %v422, %v413
      %v477 = vpack.c.b16 %v423, %v414
      %v478 = vpack.c.b16 %v424, %v415
      %v479 = vpack.c.b16 %v425, %v416
      %v480 = vpack.c.b16 %v426, %v417
      %v481 = vpack.c.b16 %v427, %v418
      %v482 = vpack.c.b16 %v428, %v419
      %v483 = vpack.c.b16 %v429, %v420
      %v484 = vpack.c.b16 %v430, %v421
      %v485 = vpack.c.b16 %v440, %v431
      %v486 = vpack.c.b16 %v441, %v432
      %v487 = vpack.c.b16 %v442, %v433
      %v488 = vpack.c.b16 %v443, %v434
      %v489 = vpack.c.b16 %v444, %v435
      %v490 = vpack.c.b16 %v445, %v436
      %v491 = vpack.c.b16 %v446, %v437
      %v492 = vpack.c.b16 %v447, %v438
      %v493 = vpack.c.b16 %v448, %v439
      %v494 = vpack.c.b16 %v458, %v449
      %v495 = vpack.c.b16 %v459, %v450
      %v496 = vpack.c.b16 %v460, %v451
      %v497 = vpack.c.b16 %v461, %v452
      %v498 = vpack.c.b16 %v462, %v453
      %v499 = vpack.c.b16 %v463, %v454
      %v500 = vpack.c.b16 %v464, %v455
      %v501 = vpack.c.b16 %v465, %v456
      %v502 = vpack.c.b16 %v466, %v457
      %v503 = vpack.c.b16 %v467, %v467
      %v504 = vpack.c.b16 %v468, %v468
      %v505 = vpack.c.b16 %v469, %v469
      %v506 = vpack.c.b16 %v470, %v470
      %v507 = vpack.c.b16 %v471, %v471
      %v508 = vpack.c.b16 %v472, %v472
      %v509 = vpack.c.b16 %v473, %v473
      %v510 = vpack.c.b16 %v474, %v474
      %v511 = vpack.c.b16 %v475, %v475
      %v692 = vunpack.c.l.b16 %v234
      %v693 = vunpack.c.l.b16 %v235
      %v694 = vunpack.c.l.b16 %v236
      %v695 = vunpack.c.l.b16 %v237
      %v696 = vunpack.c.l.b16 %v238
      %v697 = vunpack.c.l.b16 %v239
      %v698 = vunpack.c.l.b16 %v240
      %v699 = vunpack.c.l.b16 %v241
      %v700 = vunpack.c.l.b16 %v242
      %v701 = vunpack.c.l.b16 %v243
      %v702 = vunpack.c.l.b16 %v244
      %v703 = vunpack.c.l.b16 %v245
      %v704 = vunpack.c.l.b16 %v246
      %v705 = vunpack.c.l.b16 %v247
      %v706 = vunpack.c.l.b16 %v248
      %v707 = vunpack.c.l.b16 %v249
      %v708 = vunpack.c.l.b16 %v250
      %v709 = vunpack.c.l.b16 %v251
      %v710 = vunpack.c.l.b16 %v252
      %v711 = vunpack.c.l.b16 %v253
      %v712 = vunpack.c.l.b16 %v254
      %v713 = vunpack.c.l.b16 %v255
      %v714 = vunpack.c.l.b16 %v256
      %v715 = vunpack.c.l.b16 %v257
      %v716 = vunpack.c.l.b16 %v258
      %v717 = vunpack.c.l.b16 %v259
      %v718 = vunpack.c.l.b16 %v260
      %v719 = vunpack.c.l.b16 %v261
      %v720 = vunpack.c.l.b16 %v262
      %v721 = vunpack.c.l.b16 %v263
      %v722 = vunpack.c.l.b16 %v264
      %v723 = vunpack.c.l.b16 %v265
      %v724 = vunpack.c.l.b16 %v266
      %v725 = vunpack.c.l.b16 %v267
      %v726 = vunpack.c.l.b16 %v268
      %v727 = vunpack.c.l.b16 %v269
      %v728 = vunpack.c.l.b16 %v270
      %v729 = vunpack.c.l.b16 %v271
      %v730 = vunpack.c.l.b16 %v272
      %v731 = vunpack.c.l.b16 %v273
      %v732 = vunpack.c.l.b16 %v274
      %v733 = vunpack.c.l.b16 %v275
      %v734 = vunpack.c.l.b16 %v276
      %v735 = vunpack.c.l.b16 %v277
      %v736 = vunpack.c.l.b16 %v278
      %v737 = vunpack.c.l.b16 %v279
      %v738 = vunpack.c.l.b16 %v280
      %v739 = vunpack.c.l.b16 %v281
      %v740 = vunpack.c.l.b16 %v282
      %v741 = vunpack.c.l.b16 %v283
      %v742 = vunpack.c.l.b16 %v284
      %v743 = vunpack.c.l.b16 %v285
      %v744 = vunpack.c.l.b16 %v286
      %v745 = vunpack.c.l.b16 %v287
      %v746 = vunpack.c.l.b16 %v288
      %v747 = vunpack.c.l.b16 %v289
      %v748 = vunpack.c.l.b16 %v290
      %v749 = vunpack.c.l.b16 %v291
      %v750 = vunpack.c.l.b16 %v292
      %v751 = vunpack.c.l.b16 %v293
      %v752 = vunpack.c.l.b16 %v294
      %v753 = vunpack.c.l.b16 %v295
      %v754 = vunpack.c.l.b16 %v296
      %v755 = vunpack.c.l.b16 %v297
      %v756 = vunpack.c.l.b16 %v298
      %v757 = vunpack.c.l.b16 %v299
      %v758 = vunpack.c.l.b16 %v300
      %v759 = vunpack.c.l.b16 %v301
      %v760 = vunpack.c.l.b16 %v302
      %v761 = vunpack.c.l.b16 %v303
      %v762 = vunpack.c.l.b16 %v304
      %v763 = vunpack.c.l.b16 %v305
      %v764 = vunpack.c.l.b16 %v306
      %v765 = vunpack.c.l.b16 %v307
      %v766 = vunpack.c.l.b16 %v308
      %v767 = vunpack.c.l.b16 %v309
      %v768 = vunpack.c.l.b16 %v310
      %v769 = vunpack.c.l.b16 %v311
      %v770 = vunpack.c.l.b16 %v312
      %v771 = vunpack.c.l.b16 %v313
      %v772 = vunpack.c.l.b16 %v314
      %v773 = vunpack.c.l.b16 %v315
      %v774 = vunpack.c.l.b16 %v316
      %v775 = vunpack.c.l.b16 %v317
      %v776 = vunpack.c.l.b16 %v318
      %v777 = vunpack.c.l.b16 %v319
      %v778 = vunpack.c.l.b16 %v320
      %v779 = vunpack.c.l.b16 %v321
      %v780 = vunpack.c.l.b16 %v322
      %v781 = vunpack.c.l.b16 %v323
      %v782 = vunpack.c.l.b16 %v324
      %v783 = vunpack.c.l.b16 %v325
      %v784 = vunpack.c.l.b16 %v326
      %v785 = vunpack.c.l.b16 %v327
      %v786 = vunpack.c.l.b16 %v328
      %v787 = vunpack.c.l.b16 %v329
      %v788 = vunpack.c.l.b16 %v330
      %v789 = vunpack.c.l.b16 %v331
      %v790 = vunpack.c.l.b16 %v332
      %v791 = vunpack.c.l.b16 %v333
      %v792 = vunpack.c.l.b16 %v334
      %v793 = vunpack.c.l.b16 %v335
      %v794 = vunpack.c.l.b16 %v336
      %v795 = vunpack.c.l.b16 %v337
      %v796 = vunpack.c.l.b16 %v338
      %v797 = vunpack.c.l.b16 %v339
      %v798 = vunpack.c.l.b16 %v340
      %v799 = vunpack.c.l.b16 %v341
      %v800 = vunpack.c.l.b16 %v342
      %v801 = vunpack.c.l.b16 %v343
      %v802 = vunpack.c.l.b16 %v344
      %v803 = vunpack.c.l.b16 %v345
      %v804 = vunpack.c.l.b16 %v346
      %v805 = vunpack.c.l.b16 %v347
      %v806 = vunpack.c.l.b16 %v348
      %v807 = vunpack.c.l.b16 %v349
      %v808 = vunpack.c.l.b16 %v350
      %v809 = vunpack.c.l.b16 %v351
      %v810 = vunpack.c.l.b16 %v352
      %v811 = vunpack.c.l.b16 %v353
      %v812 = vunpack.c.l.b16 %v354
      %v813 = vunpack.c.l.b16 %v355
      %v814 = vunpack.c.l.b16 %v356
      %v815 = vunpack.c.l.b16 %v357
      %v816 = vunpack.c.l.b16 %v358
      %v817 = vunpack.c.l.b16 %v359
      %v818 = vunpack.c.l.b16 %v360
      %v819 = vunpack.c.l.b16 %v361
      %v820 = vunpack.c.l.b16 %v362
      %v821 = vunpack.c.l.b16 %v363
      %v822 = vunpack.c.l.b16 %v364
      %v823 = vunpack.c.l.b16 %v365
      %v824 = vunpack.c.l.b16 %v366
      %v825 = vunpack.c.l.b16 %v367
      %v826 = vunpack.c.l.b16 %v368
      %v827 = vunpack.c.l.b16 %v369
      %v828 = vunpack.c.l.b16 %v370
      %v829 = vunpack.c.l.b16 %v371
      %v830 = vunpack.c.l.b16 %v372
      %v831 = vunpack.c.l.b16 %v373
      %v832 = vunpack.c.l.b16 %v374
      %v833 = vunpack.c.l.b16 %v375
      %v834 = vunpack.c.l.b16 %v376
      %v835 = vunpack.c.l.b16 %v377
      %v836 = vpack.c.b16 %v693, %v692
      %v837 = vpack.c.b16 %v695, %v694
      %v838 = vpack.c.b16 %v697, %v696
      %v839 = vpack.c.b16 %v699, %v698
      %v840 = vpack.c.b16 %v701, %v700
      %v841 = vpack.c.b16 %v703, %v702
      %v842 = vpack.c.b16 %v705, %v704
      %v843 = vpack.c.b16 %v707, %v706
      %v844 = vpack.c.b16 %v709, %v708
      %v845 = vpack.c.b16 %v711, %v710
      %v846 = vpack.c.b16 %v713, %v712
      %v847 = vpack.c.b16 %v715, %v714
      %v848 = vpack.c.b16 %v717, %v716
      %v849 = vpack.c.b16 %v719, %v718
      %v850 = vpack.c.b16 %v721, %v720
      %v851 = vpack.c.b16 %v723, %v722
      %v852 = vpack.c.b16 %v725, %v724
      %v853 = vpack.c.b16 %v727, %v726
      %v854 = vpack.c.b16 %v729, %v728
      %v855 = vpack.c.b16 %v731, %v730
      %v856 = vpack.c.b16 %v733, %v732
      %v857 = vpack.c.b16 %v735, %v734
      %v858 = vpack.c.b16 %v737, %v736
      %v859 = vpack.c.b16 %v739, %v738
      %v860 = vpack.c.b16 %v741, %v740
      %v861 = vpack.c.b16 %v743, %v742
      %v862 = vpack.c.b16 %v745, %v744
      %v863 = vpack.c.b16 %v747, %v746
      %v864 = vpack.c.b16 %v749, %v748
      %v865 = vpack.c.b16 %v751, %v750
      %v866 = vpack.c.b16 %v753, %v752
      %v867 = vpack.c.b16 %v755, %v754
      %v868 = vpack.c.b16 %v757, %v756
      %v869 = vpack.c.b16 %v759, %v758
      %v870 = vpack.c.b16 %v761, %v760
      %v871 = vpack.c.b16 %v763, %v762
      %v872 = vpack.c.b16 %v765, %v764
      %v873 = vpack.c.b16 %v767, %v766
      %v874 = vpack.c.b16 %v769, %v768
      %v875 = vpack.c.b16 %v771, %v770
      %v876 = vpack.c.b16 %v773, %v772
      %v877 = vpack.c.b16 %v775, %v774
      %v878 = vpack.c.b16 %v777, %v776
      %v879 = vpack.c.b16 %v779, %v778
      %v880 = vpack.c.b16 %v781, %v780
      %v881 = vpack.c.b16 %v783, %v782
      %v882 = vpack.c.b16 %v785, %v784
      %v883 = vpack.c.b16 %v787, %v786
      %v884 = vpack.c.b16 %v789, %v788
      %v885 = vpack.c.b16 %v791, %v790
      %v886 = vpack.c.b16 %v793, %v792
      %v887 = vpack.c.b16 %v795, %v794
      %v888 = vpack.c.b16 %v797, %v796
      %v889 = vpack.c.b16 %v799, %v798
      %v890 = vpack.c.b16 %v801, %v800
      %v891 = vpack.c.b16 %v803, %v802
      %v892 = vpack.c.b16 %v805, %v804
      %v893 = vpack.c.b16 %v807, %v806
      %v894 = vpack.c.b16 %v809, %v808
      %v895 = vpack.c.b16 %v811, %v810
      %v896 = vpack.c.b16 %v813, %v812
      %v897 = vpack.c.b16 %v815, %v814
      %v898 = vpack.c.b16 %v817, %v816
      %v899 = vpack.c.b16 %v819, %v818
      %v900 = vpack.c.b16 %v821, %v820
      %v901 = vpack.c.b16 %v823, %v822
      %v902 = vpack.c.b16 %v825, %v824
      %v903 = vpack.c.b16 %v827, %v826
      %v904 = vpack.c.b16 %v829, %v828
      %v905 = vpack.c.b16 %v831, %v830
      %v906 = vpack.c.b16 %v833, %v832
      %v907 = vpack.c.b16 %v835, %v834
      %980 = vmatprep.subr.bf16.mxu0 0
      %981 = vmatpush1.bf16.msra.mxu0 %v836
      %982 = vmatprep.subr.bf16.mxu0 0
      %983 = vmatpush1.bf16.msra.mxu0 %v837
      %984 = vmatprep.subr.bf16.mxu0 0
      %985 = vmatpush1.bf16.msra.mxu0 %v838
      %986 = vmatprep.subr.bf16.mxu0 0
      %987 = vmatpush1.bf16.msra.mxu0 %v839
      %988 = vmatprep.subr.bf16.mxu0 0
      %989 = vmatpush1.bf16.msra.mxu0 %v840
      %990 = vmatprep.subr.bf16.mxu0 0
      %991 = vmatpush1.bf16.msra.mxu0 %v841
      %992 = vmatprep.subr.bf16.mxu0 0
      %993 = vmatpush1.bf16.msra.mxu0 %v842
      %994 = vmatprep.subr.bf16.mxu0 0
      %995 = vmatpush1.bf16.msra.mxu0 %v843
      %996 = vmatprep.subr.bf16.mxu0 0
      %997 = vmatpush1.bf16.msra.mxu0 %v844
      %998 = vmatprep.subr.bf16.mxu0 0
      %999 = vmatpush1.bf16.msra.mxu0 %v845
      %1000 = vmatprep.subr.bf16.mxu0 0
      %1001 = vmatpush1.bf16.msra.mxu0 %v846
      %1002 = vmatprep.subr.bf16.mxu0 0
      %1003 = vmatpush1.bf16.msra.mxu0 %v847
      %1004 = vmatprep.subr.bf16.mxu0 0
      %1005 = vmatpush1.bf16.msra.mxu0 %v848
      %1006 = vmatprep.subr.bf16.mxu0 0
      %1007 = vmatpush1.bf16.msra.mxu0 %v849
      %1008 = vmatprep.subr.bf16.mxu0 0
      %1009 = vmatpush1.bf16.msra.mxu0 %v850
      %1010 = vmatprep.subr.bf16.mxu0 0
      %1011 = vmatpush1.bf16.msra.mxu0 %v851
      %1012 = vmatprep.mubr.bf16.mxu0 %v477
      %1013 = vmatmul.mubr.bf16.gmra.mrb[0].mxu0 %v476
      %v1014 = vpop.f32.mrb[0].mxu0
      %v1015 = vadd.f32 0.0, %v1014
      %v1016 = vpop.f32.mrb[0].mxu0
      %v1017 = vpop.f32.mrb[0].mxu0
      %v1018 = vadd.f32 0.0, %v1017
      %v1019 = vpop.f32.mrb[0].mxu0
      %1020 = vmatprep.mubr.bf16.mxu0 %v486
      %1021 = vmatmul.mubr.bf16.gmra.mrb[0].mxu0 %v485
      %v1022 = vpop.f32.mrb[0].mxu0
      %v1023 = vadd.f32 0.0, %v1022
      %v1024 = vpop.f32.mrb[0].mxu0
      %v1025 = vpop.f32.mrb[0].mxu0
      %v1026 = vadd.f32 0.0, %v1025
      %v1027 = vpop.f32.mrb[0].mxu0
      %1028 = vmatprep.mubr.bf16.mxu0 %v495
      %1029 = vmatmul.mubr.bf16.gmra.mrb[0].mxu0 %v494
      %v1030 = vpop.f32.mrb[0].mxu0
      %v1031 = vadd.f32 0.0, %v1030
      %v1032 = vpop.f32.mrb[0].mxu0
      %v1033 = vpop.f32.mrb[0].mxu0
      %v1034 = vadd.f32 0.0, %v1033
      %v1035 = vpop.f32.mrb[0].mxu0
      %1036 = vmatprep.mubr.bf16.mxu0 %v504
      %1037 = vmatmul.mubr.bf16.gmra.mrb[0].mxu0 %v503
      %v1038 = vpop.f32.mrb[0].mxu0
      %v1039 = vadd.f32 0.0, %v1038
      %v1040 = vpop.f32.mrb[0].mxu0
      %v1041 = vpop.f32.mrb[0].mxu0
      %v1042 = vpop.f32.mrb[0].mxu0
      %1043 = vdwg.mxu0
      %1044 = vmatprep.subr.bf16.mxu0 0
      %1045 = vmatpush1.bf16.msra.mxu0 %v852
      %1046 = vmatprep.subr.bf16.mxu0 0
      %1047 = vmatpush1.bf16.msra.mxu0 %v853
      %1048 = vmatprep.subr.bf16.mxu0 0
      %1049 = vmatpush1.bf16.msra.mxu0 %v854
      %1050 = vmatprep.subr.bf16.mxu0 0
      %1051 = vmatpush1.bf16.msra.mxu0 %v855
      %1052 = vmatprep.subr.bf16.mxu0 0
      %1053 = vmatpush1.bf16.msra.mxu0 %v856
      %1054 = vmatprep.subr.bf16.mxu0 0
      %1055 = vmatpush1.bf16.msra.mxu0 %v857
      %1056 = vmatprep.subr.bf16.mxu0 0
      %1057 = vmatpush1.bf16.msra.mxu0 %v858
      %1058 = vmatprep.subr.bf16.mxu0 0
      %1059 = vmatpush1.bf16.msra.mxu0 %v859
      %1060 = vmatprep.subr.bf16.mxu0 0
      %1061 = vmatpush1.bf16.msra.mxu0 %v860
      %1062 = vmatprep.subr.bf16.mxu0 0
      %1063 = vmatpush1.bf16.msra.mxu0 %v861
      %1064 = vmatprep.subr.bf16.mxu0 0
      %1065 = vmatpush1.bf16.msra.mxu0 %v862
      %1066 = vmatprep.subr.bf16.mxu0 0
      %1067 = vmatpush1.bf16.msra.mxu0 %v863
      %1068 = vmatprep.subr.bf16.mxu0 0
      %1069 = vmatpush1.bf16.msra.mxu0 %v864
      %1070 = vmatprep.subr.bf16.mxu0 0
      %1071 = vmatpush1.bf16.msra.mxu0 %v865
      %1072 = vmatprep.subr.bf16.mxu0 0
      %1073 = vmatpush1.bf16.msra.mxu0 %v866
      %1074 = vmatprep.subr.bf16.mxu0 0
      %1075 = vmatpush1.bf16.msra.mxu0 %v867
      %1076 = vmatprep.mubr.bf16.mxu0 %v479
      %1077 = vmatmul.mubr.bf16.gmra.mrb[0].mxu0 %v478
      %v1078 = vpop.f32.mrb[0].mxu0
      %v1079 = vadd.f32 %v1015, %v1078
      %v1080 = vpop.f32.mrb[0].mxu0
      %v1081 = vpop.f32.mrb[0].mxu0
      %v1082 = vadd.f32 %v1018, %v1081
      %v1083 = vpop.f32.mrb[0].mxu0
      %1084 = vmatprep.mubr.bf16.mxu0 %v488
      %1085 = vmatmul.mubr.bf16.gmra.mrb[0].mxu0 %v487
      %v1086 = vpop.f32.mrb[0].mxu0
      %v1087 = vadd.f32 %v1023, %v1086
      %v1088 = vpop.f32.mrb[0].mxu0
      %v1089 = vpop.f32.mrb[0].mxu0
      %v1090 = vadd.f32 %v1026, %v1089
      %v1091 = vpop.f32.mrb[0].mxu0
      %1092 = vmatprep.mubr.bf16.mxu0 %v497
      %1093 = vmatmul.mubr.bf16.gmra.mrb[0].mxu0 %v496
      %v1094 = vpop.f32.mrb[0].mxu0
      %v1095 = vadd.f32 %v1031, %v1094
      %v1096 = vpop.f32.mrb[0].mxu0
      %v1097 = vpop.f32.mrb[0].mxu0
      %v1098 = vadd.f32 %v1034, %v1097
      %v1099 = vpop.f32.mrb[0].mxu0
      %1100 = vmatprep.mubr.bf16.mxu0 %v506
      %1101 = vmatmul.mubr.bf16.gmra.mrb[0].mxu0 %v505
      %v1102 = vpop.f32.mrb[0].mxu0
      %v1103 = vadd.f32 %v1039, %v1102
      %v1104 = vpop.f32.mrb[0].mxu0
      %v1105 = vpop.f32.mrb[0].mxu0
      %v1106 = vpop.f32.mrb[0].mxu0
      %1107 = vdwg.mxu0
      %1108 = vmatprep.subr.bf16.mxu0 0
      %1109 = vmatpush1.bf16.msra.mxu0 %v868
      %1110 = vmatprep.subr.bf16.mxu0 0
      %1111 = vmatpush1.bf16.msra.mxu0 %v869
      %1112 = vmatprep.subr.bf16.mxu0 0
      %1113 = vmatpush1.bf16.msra.mxu0 %v870
      %1114 = vmatprep.subr.bf16.mxu0 0
      %1115 = vmatpush1.bf16.msra.mxu0 %v871
      %1116 = vmatprep.subr.bf16.mxu0 0
      %1117 = vmatpush1.bf16.msra.mxu0 %v872
      %1118 = vmatprep.subr.bf16.mxu0 0
      %1119 = vmatpush1.bf16.msra.mxu0 %v873
      %1120 = vmatprep.subr.bf16.mxu0 0
      %1121 = vmatpush1.bf16.msra.mxu0 %v874
      %1122 = vmatprep.subr.bf16.mxu0 0
      %1123 = vmatpush1.bf16.msra.mxu0 %v875
      %1124 = vmatprep.subr.bf16.mxu0 0
      %1125 = vmatpush1.bf16.msra.mxu0 %v876
      %1126 = vmatprep.subr.bf16.mxu0 0
      %1127 = vmatpush1.bf16.msra.mxu0 %v877
      %1128 = vmatprep.subr.bf16.mxu0 0
      %1129 = vmatpush1.bf16.msra.mxu0 %v878
      %1130 = vmatprep.subr.bf16.mxu0 0
      %1131 = vmatpush1.bf16.msra.mxu0 %v879
      %1132 = vmatprep.subr.bf16.mxu0 0
      %1133 = vmatpush1.bf16.msra.mxu0 %v880
      %1134 = vmatprep.subr.bf16.mxu0 0
      %1135 = vmatpush1.bf16.msra.mxu0 %v881
      %1136 = vmatprep.subr.bf16.mxu0 0
      %1137 = vmatpush1.bf16.msra.mxu0 %v882
      %1138 = vmatprep.subr.bf16.mxu0 0
      %1139 = vmatpush1.bf16.msra.mxu0 %v883
      %1140 = vmatprep.mubr.bf16.mxu0 %v481
      %1141 = vmatmul.mubr.bf16.gmra.mrb[0].mxu0 %v480
      %v1142 = vpop.f32.mrb[0].mxu0
      %v1143 = vadd.f32 %v1079, %v1142
      %v1144 = vpop.f32.mrb[0].mxu0
      %v1145 = vpop.f32.mrb[0].mxu0
      %v1146 = vadd.f32 %v1082, %v1145
      %v1147 = vpop.f32.mrb[0].mxu0
      %1148 = vmatprep.mubr.bf16.mxu0 %v490
      %1149 = vmatmul.mubr.bf16.gmra.mrb[0].mxu0 %v489
      %v1150 = vpop.f32.mrb[0].mxu0
      %v1151 = vadd.f32 %v1087, %v1150
      %v1152 = vpop.f32.mrb[0].mxu0
      %v1153 = vpop.f32.mrb[0].mxu0
      %v1154 = vadd.f32 %v1090, %v1153
      %v1155 = vpop.f32.mrb[0].mxu0
      %1156 = vmatprep.mubr.bf16.mxu0 %v499
      %1157 = vmatmul.mubr.bf16.gmra.mrb[0].mxu0 %v498
      %v1158 = vpop.f32.mrb[0].mxu0
      %v1159 = vadd.f32 %v1095, %v1158
      %v1160 = vpop.f32.mrb[0].mxu0
      %v1161 = vpop.f32.mrb[0].mxu0
      %v1162 = vadd.f32 %v1098, %v1161
      %v1163 = vpop.f32.mrb[0].mxu0
      %1164 = vmatprep.mubr.bf16.mxu0 %v508
      %1165 = vmatmul.mubr.bf16.gmra.mrb[0].mxu0 %v507
      %v1166 = vpop.f32.mrb[0].mxu0
      %v1167 = vadd.f32 %v1103, %v1166
      %v1168 = vpop.f32.mrb[0].mxu0
      %v1169 = vpop.f32.mrb[0].mxu0
      %v1170 = vpop.f32.mrb[0].mxu0
      %1171 = vdwg.mxu0
      %1172 = vmatprep.subr.bf16.mxu0 0
      %1173 = vmatpush1.bf16.msra.mxu0 %v884
      %1174 = vmatprep.subr.bf16.mxu0 0
      %1175 = vmatpush1.bf16.msra.mxu0 %v885
      %1176 = vmatprep.subr.bf16.mxu0 0
      %1177 = vmatpush1.bf16.msra.mxu0 %v886
      %1178 = vmatprep.subr.bf16.mxu0 0
      %1179 = vmatpush1.bf16.msra.mxu0 %v887
      %1180 = vmatprep.subr.bf16.mxu0 0
      %1181 = vmatpush1.bf16.msra.mxu0 %v888
      %1182 = vmatprep.subr.bf16.mxu0 0
      %1183 = vmatpush1.bf16.msra.mxu0 %v889
      %1184 = vmatprep.subr.bf16.mxu0 0
      %1185 = vmatpush1.bf16.msra.mxu0 %v890
      %1186 = vmatprep.subr.bf16.mxu0 0
      %1187 = vmatpush1.bf16.msra.mxu0 %v891
      %1188 = vmatprep.subr.bf16.mxu0 0
      %1189 = vmatpush1.bf16.msra.mxu0 %v892
      %1190 = vmatprep.subr.bf16.mxu0 0
      %1191 = vmatpush1.bf16.msra.mxu0 %v893
      %1192 = vmatprep.subr.bf16.mxu0 0
      %1193 = vmatpush1.bf16.msra.mxu0 %v894
      %1194 = vmatprep.subr.bf16.mxu0 0
      %1195 = vmatpush1.bf16.msra.mxu0 %v895
      %1196 = vmatprep.subr.bf16.mxu0 0
      %1197 = vmatpush1.bf16.msra.mxu0 %v896
      %1198 = vmatprep.subr.bf16.mxu0 0
      %1199 = vmatpush1.bf16.msra.mxu0 %v897
      %1200 = vmatprep.subr.bf16.mxu0 0
      %1201 = vmatpush1.bf16.msra.mxu0 %v898
      %1202 = vmatprep.subr.bf16.mxu0 0
      %1203 = vmatpush1.bf16.msra.mxu0 %v899
      %1204 = vmatprep.mubr.bf16.mxu0 %v483
      %1205 = vmatmul.mubr.bf16.gmra.mrb[0].mxu0 %v482
      %v1206 = vpop.f32.mrb[0].mxu0
      %v1207 = vadd.f32 %v1143, %v1206
      %v1208 = vpop.f32.mrb[0].mxu0
      %v1209 = vpop.f32.mrb[0].mxu0
      %v1210 = vadd.f32 %v1146, %v1209
      %v1211 = vpop.f32.mrb[0].mxu0
      %1212 = vmatprep.mubr.bf16.mxu0 %v492
      %1213 = vmatmul.mubr.bf16.gmra.mrb[0].mxu0 %v491
      %v1214 = vpop.f32.mrb[0].mxu0
      %v1215 = vadd.f32 %v1151, %v1214
      %v1216 = vpop.f32.mrb[0].mxu0
      %v1217 = vpop.f32.mrb[0].mxu0
      %v1218 = vadd.f32 %v1154, %v1217
      %v1219 = vpop.f32.mrb[0].mxu0
      %1220 = vmatprep.mubr.bf16.mxu0 %v501
      %1221 = vmatmul.mubr.bf16.gmra.mrb[0].mxu0 %v500
      %v1222 = vpop.f32.mrb[0].mxu0
      %v1223 = vadd.f32 %v1159, %v1222
      %v1224 = vpop.f32.mrb[0].mxu0
      %v1225 = vpop.f32.mrb[0].mxu0
      %v1226 = vadd.f32 %v1162, %v1225
      %v1227 = vpop.f32.mrb[0].mxu0
      %1228 = vmatprep.mubr.bf16.mxu0 %v510
      %1229 = vmatmul.mubr.bf16.gmra.mrb[0].mxu0 %v509
      %v1230 = vpop.f32.mrb[0].mxu0
      %v1231 = vadd.f32 %v1167, %v1230
      %v1232 = vpop.f32.mrb[0].mxu0
      %v1233 = vpop.f32.mrb[0].mxu0
      %v1234 = vpop.f32.mrb[0].mxu0
      %1235 = vdwg.mxu0
      %1236 = vmatprep.subr.bf16.mxu0 0
      %1237 = vmatpush1.bf16.msra.mxu0 %v900
      %1238 = vmatprep.subr.bf16.mxu0 0
      %1239 = vmatpush1.bf16.msra.mxu0 %v901
      %1240 = vmatprep.subr.bf16.mxu0 0
      %1241 = vmatpush1.bf16.msra.mxu0 %v902
      %1242 = vmatprep.subr.bf16.mxu0 0
      %1243 = vmatpush1.bf16.msra.mxu0 %v903
      %1244 = vmatprep.subr.bf16.mxu0 0
      %1245 = vmatpush1.bf16.msra.mxu0 %v904
      %1246 = vmatprep.subr.bf16.mxu0 0
      %1247 = vmatpush1.bf16.msra.mxu0 %v905
      %1248 = vmatprep.subr.bf16.mxu0 0
      %1249 = vmatpush1.bf16.msra.mxu0 %v906
      %1250 = vmatprep.subr.bf16.mxu0 0
      %1251 = vmatpush1.bf16.msra.mxu0 %v907
      %1252 = vmatprep.subr.bf16.mxu0 0
      %1253 = vmatpush1.bf16.msra.mxu0 0
      %1254 = vmatprep.subr.bf16.mxu0 0
      %1255 = vmatpush1.bf16.msra.mxu0 0
      %1256 = vmatprep.subr.bf16.mxu0 0
      %1257 = vmatpush1.bf16.msra.mxu0 0
      %1258 = vmatprep.subr.bf16.mxu0 0
      %1259 = vmatpush1.bf16.msra.mxu0 0
      %1260 = vmatprep.subr.bf16.mxu0 0
      %1261 = vmatpush1.bf16.msra.mxu0 0
      %1262 = vmatprep.subr.bf16.mxu0 0
      %1263 = vmatpush1.bf16.msra.mxu0 0
      %1264 = vmatprep.subr.bf16.mxu0 0
      %1265 = vmatpush1.bf16.msra.mxu0 0
      %1266 = vmatprep.subr.bf16.mxu0 0
      %1267 = vmatpush1.bf16.msra.mxu0 0
      %1268 = vmatprep.mubr.bf16.mxu0 0
      %1269 = vmatmul.mubr.bf16.gmra.mrb[0].mxu0 %v484
      %v1270 = vpop.f32.mrb[0].mxu0
      %v1271 = vadd.f32 %v1207, %v1270
      %v1272 = vpop.f32.mrb[0].mxu0
      %v1273 = vpop.f32.mrb[0].mxu0
      %v1274 = vadd.f32 %v1210, %v1273
      %v1275 = vpop.f32.mrb[0].mxu0
      %1276 = vmatprep.mubr.bf16.mxu0 0
      %1277 = vmatmul.mubr.bf16.gmra.mrb[0].mxu0 %v493
      %v1278 = vpop.f32.mrb[0].mxu0
      %v1279 = vadd.f32 %v1215, %v1278
      %v1280 = vpop.f32.mrb[0].mxu0
      %v1281 = vpop.f32.mrb[0].mxu0
      %v1282 = vadd.f32 %v1218, %v1281
      %v1283 = vpop.f32.mrb[0].mxu0
      %1284 = vmatprep.mubr.bf16.mxu0 0
      %1285 = vmatmul.mubr.bf16.gmra.mrb[0].mxu0 %v502
      %v1286 = vpop.f32.mrb[0].mxu0
      %v1287 = vadd.f32 %v1223, %v1286
      %v1288 = vpop.f32.mrb[0].mxu0
      %v1289 = vpop.f32.mrb[0].mxu0
      %v1290 = vadd.f32 %v1226, %v1289
      %v1291 = vpop.f32.mrb[0].mxu0
      %1292 = vmatprep.mubr.bf16.mxu0 0
      %1293 = vmatmul.mubr.bf16.gmra.mrb[0].mxu0 %v511
      %v1294 = vpop.f32.mrb[0].mxu0
      %v1295 = vadd.f32 %v1231, %v1294
      %v1296 = vpop.f32.mrb[0].mxu0
      %v1297 = vpop.f32.mrb[0].mxu0
      %v1298 = vpop.f32.mrb[0].mxu0
      %1299 = vdwg.mxu0
      %1307 = vrot.lane.b32.xlu0 %v1271, 96
      %v1308 = vpop.permute.xlu0 %1307
      %1309 = vrot.lane.b32.xlu0 %v1274, 96
      %v1310 = vpop.permute.xlu0 %1309
      %1311 = vrot.lane.b32.xlu0 %v1279, 96
      %v1312 = vpop.permute.xlu0 %1311
      %1313 = vrot.lane.b32.xlu0 %v1282, 96
      %v1314 = vpop.permute.xlu0 %1313
      %1315 = vrot.lane.b32.xlu0 %v1287, 96
      %v1316 = vpop.permute.xlu0 %1315
      %1317 = vrot.lane.b32.xlu0 %v1290, 96
      %v1318 = vpop.permute.xlu0 %1317
      %1319 = vrot.lane.b32.xlu0 %v1295, 96
      %v1320 = vpop.permute.xlu0 %1319
      %v1328 = vmax.f32 %v1271, %v1308
      %v1329 = vmax.f32 %v1274, %v1310
      %v1330 = vmax.f32 %v1279, %v1312
      %v1331 = vmax.f32 %v1282, %v1314
      %v1332 = vmax.f32 %v1287, %v1316
      %v1333 = vmax.f32 %v1290, %v1318
      %v1334 = vmax.f32 %v1295, %v1320
      %1342 = vrot.lane.b32.xlu0 %v1328, 64
      %v1343 = vpop.permute.xlu0 %1342
      %1344 = vrot.lane.b32.xlu0 %v1329, 64
      %v1345 = vpop.permute.xlu0 %1344
      %1346 = vrot.lane.b32.xlu0 %v1330, 64
      %v1347 = vpop.permute.xlu0 %1346
      %1348 = vrot.lane.b32.xlu0 %v1331, 64
      %v1349 = vpop.permute.xlu0 %1348
      %1350 = vrot.lane.b32.xlu0 %v1332, 64
      %v1351 = vpop.permute.xlu0 %1350
      %1352 = vrot.lane.b32.xlu0 %v1333, 64
      %v1353 = vpop.permute.xlu0 %1352
      %1354 = vrot.lane.b32.xlu0 %v1334, 64
      %v1355 = vpop.permute.xlu0 %1354
      %v1363 = vmax.f32 %v1328, %v1343
      %v1364 = vmax.f32 %v1329, %v1345
      %v1365 = vmax.f32 %v1330, %v1347
      %v1366 = vmax.f32 %v1331, %v1349
      %v1367 = vmax.f32 %v1332, %v1351
      %v1368 = vmax.f32 %v1333, %v1353
      %v1369 = vmax.f32 %v1334, %v1355
      %v1370 = vld [vmem:[%s2] sm:$0x1]
      %v1372 = vlaneseq
      %v1373 = vshrl.u32 %v1372, 7
      %v1374 = vsub.s32 0, %v1373
      %v1375 = vrot.slane %v1370, %v1374
      %v1377 = vmul.f32 %v1363, %v1375
      %v1378 = vmul.f32 %v1364, %v1375
      %v1379 = vmul.f32 %v1365, %v1375
      %v1380 = vmul.f32 %v1366, %v1375
      %v1381 = vmul.f32 %v1367, %v1375
      %v1382 = vmul.f32 %v1368, %v1375
      %v1383 = vmul.f32 %v1369, %v1375
      %v1384 = vld [vmem:[%s3] sm:$0x1]
      %v1386 = vlaneseq
      %v1387 = vshrl.u32 %v1386, 7
      %v1388 = vsub.s32 0, %v1387
      %v1389 = vrot.slane %v1384, %v1388
      %v1391 = vadd.f32 %v1377, %v1389
      %v1392 = vadd.f32 %v1378, %v1389
      %v1393 = vadd.f32 %v1379, %v1389
      %v1394 = vadd.f32 %v1380, %v1389
      %v1395 = vadd.f32 %v1381, %v1389
      %v1396 = vadd.f32 %v1382, %v1389
      %v1397 = vadd.f32 %v1383, %v1389
      %v1398 = vsub.f32 0.0, %v1391
      %v1399 = vsub.f32 0.0, %v1392
      %v1400 = vsub.f32 0.0, %v1393
      %v1401 = vsub.f32 0.0, %v1394
      %v1402 = vsub.f32 0.0, %v1395
      %v1403 = vsub.f32 0.0, %v1396
      %v1404 = vsub.f32 0.0, %v1397
      %v1405 = vmul.f32 %v1398, 1.442695
      %v1406 = vpow.pop %v1405
      %v1407 = vmul.f32 %v1399, 1.442695
      %v1408 = vpow.pop %v1407
      %v1409 = vmul.f32 %v1400, 1.442695
      %v1410 = vpow.pop %v1409
      %v1411 = vmul.f32 %v1401, 1.442695
      %v1412 = vpow.pop %v1411
      %v1413 = vmul.f32 %v1402, 1.442695
      %v1414 = vpow.pop %v1413
      %v1415 = vmul.f32 %v1403, 1.442695
      %v1416 = vpow.pop %v1415
      %v1417 = vmul.f32 %v1404, 1.442695
      %v1418 = vpow.pop %v1417
      %v1419 = vadd.f32 %v1406, 1.0
      %v1420 = vadd.f32 %v1408, 1.0
      %v1421 = vadd.f32 %v1410, 1.0
      %v1422 = vadd.f32 %v1412, 1.0
      %v1423 = vadd.f32 %v1414, 1.0
      %v1424 = vadd.f32 %v1416, 1.0
      %v1425 = vadd.f32 %v1418, 1.0
      %v1426 = vrcp.pop %v1419
      %v1427 = vrcp.pop %v1420
      %v1428 = vrcp.pop %v1421
      %v1429 = vrcp.pop %v1422
      %v1430 = vrcp.pop %v1423
      %v1431 = vrcp.pop %v1424
      %v1432 = vrcp.pop %v1425
      %v1433 = vpack.c.bf16 %v1427, %v1426
      %v1434 = vpack.c.bf16 %v1429, %v1428
      %v1435 = vpack.c.bf16 %v1431, %v1430
      %v1436 = vpack.c.bf16 %v1432, %v1432
      %v1441 = vunpack.c.l.b16 %v1433
      %v1442 = vunpack.c.h.b16 %v1433
      %v1443 = vunpack.c.l.b16 %v1434
      %v1444 = vunpack.c.h.b16 %v1434
      %v1445 = vunpack.c.l.b16 %v1435
      %v1446 = vunpack.c.h.b16 %v1435
      %v1447 = vunpack.c.l.b16 %v1436
      %v1448 = vpack.c.b16 %v1441, %v1441
      %v1449 = vpack.c.b16 %v1442, %v1442
      %v1450 = vpack.c.b16 %v1443, %v1443
      %v1451 = vpack.c.b16 %v1444, %v1444
      %v1452 = vpack.c.b16 %v1445, %v1445
      %v1453 = vpack.c.b16 %v1446, %v1446
      %v1454 = vpack.c.b16 %v1447, %v1447
      %vm1462 = vcmask 257024
      %1463 = vst.msk [vmem:[%s197] sm:$0xf] %vm1462, %v1448
      %1464 = vst.msk [vmem:[%s197 + $0x4] sm:$0xf] %vm1462, %v1449
      %1465 = vst.msk [vmem:[%s197 + $0x8] sm:$0xf] %vm1462, %v1450
      %1466 = vst.msk [vmem:[%s197 + $0xc] sm:$0xf] %vm1462, %v1451
      %1467 = vst.msk [vmem:[%s197 + $0x10] sm:$0xf] %vm1462, %v1452
      %1468 = vst.msk [vmem:[%s197 + $0x14] sm:$0xf] %vm1462, %v1453
      %vm1469 = vcmask 253952
      %vm1470 = vsmask.f32 256
      %vm1471 = vmand %vm1469, %vm1470
      %v1472 = vld [vmem:[%s197 + $0x18] sm:$0x1]
      %v1473 = vsel %vm1471, %v1454, %v1472
      %1474 = vst [vmem:[%s197 + $0x18] sm:$0x1] %v1473
      %p1475 = scmp.lt.s32.totalorder %s15, 1
      %s1476 = scalar_select %p1475, %s15, 1
      %s1477 = smul.addr %s1476, 7
      %s1478 = smul.addr %s1477, 4
      %s1479 = scalar_lea.vmem %s4, %s1478
      // Predicated region
      $region37: #{forward.4} parent=35 // pred_check
        %p1480 = pneg %p122
      $region38: #{forward.4} parent=35 // pred_check_branch
        %1482 = sbr.rel (%p1480) target = $region40
      $region39: #{forward.4} parent=35 // pred_region
        _
      $region40: #{forward.4} parent=35 // pred_fallthru
        _
    $region36: #{forward.4} parent=5 // pred_fallthru
      _
    %p1483 = scmp.le.s32.totalorder 2, %s10
    // Predicated region
    $region41: #{forward.4} parent=5 // pred_check
      %p1484 = pneg %p1483
    $region42: #{forward.4} parent=5 // pred_check_branch
      %1486 = sbr.rel (%p1484) target = $region44
    $region43: #{forward.4} parent=5 // pred_region
      %s1487 = ssub.s32 %s10, 2
      // Predicated region
      $region45: #{forward.4} parent=43 // pred_check
        %p1488 = pneg %p128
      $region46: #{forward.4} parent=43 // pred_check_branch
        %1490 = sbr.rel (%p1488) target = $region48
      $region47: #{forward.4} parent=43 // pred_region
        %p1491 = scmp.lt.s32.totalorder %s16, 1
        %s1492 = scalar_select %p1491, %s16, 1
        %s1493 = smul.addr %s1492, 7
        %s1494 = smul.addr %s1493, 4
        %s1495 = scalar_lea.vmem %s4, %s1494
      $region48: #{forward.4} parent=43 // pred_fallthru
        _
    $region44: #{forward.4} parent=5 // pred_fallthru
      _
  $region6: #{forward.4} parent=0 // loop_footer
    %s14 = sadd.s32 1, %s10
  $region7: #{forward.4} parent=0 // loop_footer_branch
    %9 = sbr.rel target = $region3
  $region8: #{forward.4} parent=0 // loop_exit
    _

// kernel: forward.5
$region0: #{forward.5}
  #allocation0 [shape = 'u32[]', space=smem, size = 0x4, offset = 0x4, fixed_abs, tag = 'smem constant byte address 0x4 - core index']
  #allocation1 [shape = 'u32[144,128]{1,0:T(1,128)}', space=vmem, size = 0x12000, scoped, tag = 'internal scratch']
  %s0 = inlined_call_operand.vmem [shape: bf16[2,1568], index: 0, kind: input, shape index: {}]
  %s1 = inlined_call_operand.vmem [shape: bf16[1568,64], index: 1, kind: input, shape index: {}]
  %s2 = inlined_call_operand.vmem [shape: f32[1,64], index: 2, kind: input, shape index: {}]
  %s3 = inlined_call_operand.vmem [shape: bf16[64,10], index: 3, kind: input, shape index: {}]
  %s4 = inlined_call_operand.vmem [shape: f32[1,10], index: 4, kind: input, shape index: {}]
  %s5 = inlined_call_operand.hbm [shape: f32[2,10], index: 5, kind: output, shape index: {}]
  %s6 = sld [smem:[#allocation0]]
  $region30: #{forward.5} parent=0
    _
  %s8 = ssub.s32 1, %s6
  %s9 = scalar_select 0, %s8, %s6
  $region1: #{forward.5} parent=0
    #allocation2 [shape = 'u8[1024]{0}', space=vmem, size = 0x400, scoped, tag = 'output window, operand 0, single buffered']
    #allocation3 [shape = 's32[1]{0}', space=sflag, size = 0x4, scoped, tag = 'scoped memory for forward.5']
    %10 = vsyncpa [#allocation3], 0
    // Predicated region
    $region2: #{forward.5} parent=1 // pred_check
      _
    $region3: #{forward.5} parent=1 // pred_check_branch
      %12 = sbr.rel (0) target = $region5
    $region4: #{forward.5} parent=1 // pred_region
      _
    $region5: #{forward.5} parent=1 // pred_fallthru
      _
    // Predicated region
    $region6: #{forward.5} parent=1 // pred_check
      _
    $region7: #{forward.5} parent=1 // pred_check_branch
      %14 = sbr.rel (0) target = $region9
    $region8: #{forward.5} parent=1 // pred_region
      _
    $region9: #{forward.5} parent=1 // pred_fallthru
      _
    // Predicated region
    $region10: #{forward.5} parent=1 // pred_check
      _
    $region11: #{forward.5} parent=1 // pred_check_branch
      %16 = sbr.rel (0) target = $region13
    $region12: #{forward.5} parent=1 // pred_region
      _
    $region13: #{forward.5} parent=1 // pred_fallthru
      _
    // Predicated region
    $region14: #{forward.5} parent=1 // pred_check
      _
    $region15: #{forward.5} parent=1 // pred_check_branch
      %18 = sbr.rel (0) target = $region17
    $region16: #{forward.5} parent=1 // pred_region
      _
    $region17: #{forward.5} parent=1 // pred_fallthru
      _
    // Predicated region
    $region18: #{forward.5} parent=1 // pred_check
      _
    $region19: #{forward.5} parent=1 // pred_check_branch
      %20 = sbr.rel (0) target = $region21
    $region20: #{forward.5} parent=1 // pred_region
      _
    $region21: #{forward.5} parent=1 // pred_fallthru
      _
    %v22 = vld [vmem:[%s0] sm:$0xff]
    %v23 = vld [vmem:[%s0 + $0x8] sm:$0x1f]
    %v24 = vld [vmem:[%s1] sm:$0xf]
    %v25 = vld [vmem:[%s1 + $0x4] sm:$0xf]
    %v26 = vld [vmem:[%s1 + $0x8] sm:$0xf]
    %v27 = vld [vmem:[%s1 + $0xc] sm:$0xf]
    %v28 = vld [vmem:[%s1 + $0x10] sm:$0xf]
    %v29 = vld [vmem:[%s1 + $0x14] sm:$0xf]
    %v30 = vld [vmem:[%s1 + $0x18] sm:$0xf]
    %v31 = vld [vmem:[%s1 + $0x1c] sm:$0xf]
    %v32 = vld [vmem:[%s1 + $0x20] sm:$0xf]
    %v33 = vld [vmem:[%s1 + $0x24] sm:$0xf]
    %v34 = vld [vmem:[%s1 + $0x28] sm:$0xf]
    %v35 = vld [vmem:[%s1 + $0x2c] sm:$0xf]
    %v36 = vld [vmem:[%s1 + $0x30] sm:$0xf]
    %v37 = vld [vmem:[%s1 + $0x34] sm:$0xf]
    %v38 = vld [vmem:[%s1 + $0x38] sm:$0xf]
    %v39 = vld [vmem:[%s1 + $0x3c] sm:$0xf]
    %v40 = vld [vmem:[%s1 + $0x40] sm:$0xf]
    %v41 = vld [vmem:[%s1 + $0x44] sm:$0xf]
    %v42 = vld [vmem:[%s1 + $0x48] sm:$0xf]
    %v43 = vld [vmem:[%s1 + $0x4c] sm:$0xf]
    %v44 = vld [vmem:[%s1 + $0x50] sm:$0xf]
    %v45 = vld [vmem:[%s1 + $0x54] sm:$0xf]
    %v46 = vld [vmem:[%s1 + $0x58] sm:$0xf]
    %v47 = vld [vmem:[%s1 + $0x5c] sm:$0xf]
    %v48 = vld [vmem:[%s1 + $0x60] sm:$0xf]
    %v49 = vld [vmem:[%s1 + $0x64] sm:$0xf]
    %v50 = vld [vmem:[%s1 + $0x68] sm:$0xf]
    %v51 = vld [vmem:[%s1 + $0x6c] sm:$0xf]
    %v52 = vld [vmem:[%s1 + $0x70] sm:$0xf]
    %v53 = vld [vmem:[%s1 + $0x74] sm:$0xf]
    %v54 = vld [vmem:[%s1 + $0x78] sm:$0xf]
    %v55 = vld [vmem:[%s1 + $0x7c] sm:$0xf]
    %v56 = vld [vmem:[%s1 + $0x80] sm:$0xf]
    %v57 = vld [vmem:[%s1 + $0x84] sm:$0xf]
    %v58 = vld [vmem:[%s1 + $0x88] sm:$0xf]
    %v59 = vld [vmem:[%s1 + $0x8c] sm:$0xf]
    %v60 = vld [vmem:[%s1 + $0x90] sm:$0xf]
    %v61 = vld [vmem:[%s1 + $0x94] sm:$0xf]
    %v62 = vld [vmem:[%s1 + $0x98] sm:$0xf]
    %v63 = vld [vmem:[%s1 + $0x9c] sm:$0xf]
    %v64 = vld [vmem:[%s1 + $0xa0] sm:$0xf]
    %v65 = vld [vmem:[%s1 + $0xa4] sm:$0xf]
    %v66 = vld [vmem:[%s1 + $0xa8] sm:$0xf]
    %v67 = vld [vmem:[%s1 + $0xac] sm:$0xf]
    %v68 = vld [vmem:[%s1 + $0xb0] sm:$0xf]
    %v69 = vld [vmem:[%s1 + $0xb4] sm:$0xf]
    %v70 = vld [vmem:[%s1 + $0xb8] sm:$0xf]
    %v71 = vld [vmem:[%s1 + $0xbc] sm:$0xf]
    %v72 = vld [vmem:[%s1 + $0xc0] sm:$0xf]
    %v73 = vld [vmem:[%s1 + $0xc4] sm:$0xf]
    %v74 = vld [vmem:[%s1 + $0xc8] sm:$0xf]
    %v75 = vld [vmem:[%s1 + $0xcc] sm:$0xf]
    %v76 = vld [vmem:[%s1 + $0xd0] sm:$0xf]
    %v77 = vld [vmem:[%s1 + $0xd4] sm:$0xf]
    %v78 = vld [vmem:[%s1 + $0xd8] sm:$0xf]
    %v79 = vld [vmem:[%s1 + $0xdc] sm:$0xf]
    %v80 = vld [vmem:[%s1 + $0xe0] sm:$0xf]
    %v81 = vld [vmem:[%s1 + $0xe4] sm:$0xf]
    %v82 = vld [vmem:[%s1 + $0xe8] sm:$0xf]
    %v83 = vld [vmem:[%s1 + $0xec] sm:$0xf]
    %v84 = vld [vmem:[%s1 + $0xf0] sm:$0xf]
    %v85 = vld [vmem:[%s1 + $0xf4] sm:$0xf]
    %v86 = vld [vmem:[%s1 + $0xf8] sm:$0xf]
    %v87 = vld [vmem:[%s1 + $0xfc] sm:$0xf]
    %v88 = vld [vmem:[%s1 + $0x100] sm:$0xf]
    %v89 = vld [vmem:[%s1 + $0x104] sm:$0xf]
    %v90 = vld [vmem:[%s1 + $0x108] sm:$0xf]
    %v91 = vld [vmem:[%s1 + $0x10c] sm:$0xf]
    %v92 = vld [vmem:[%s1 + $0x110] sm:$0xf]
    %v93 = vld [vmem:[%s1 + $0x114] sm:$0xf]
    %v94 = vld [vmem:[%s1 + $0x118] sm:$0xf]
    %v95 = vld [vmem:[%s1 + $0x11c] sm:$0xf]
    %v96 = vld [vmem:[%s1 + $0x120] sm:$0xf]
    %v97 = vld [vmem:[%s1 + $0x124] sm:$0xf]
    %v98 = vld [vmem:[%s1 + $0x128] sm:$0xf]
    %v99 = vld [vmem:[%s1 + $0x12c] sm:$0xf]
    %v100 = vld [vmem:[%s1 + $0x130] sm:$0xf]
    %v101 = vld [vmem:[%s1 + $0x134] sm:$0xf]
    %v102 = vld [vmem:[%s1 + $0x138] sm:$0xf]
    %v103 = vld [vmem:[%s1 + $0x13c] sm:$0xf]
    %v104 = vld [vmem:[%s1 + $0x140] sm:$0xf]
    %v105 = vld [vmem:[%s1 + $0x144] sm:$0xf]
    %v106 = vld [vmem:[%s1 + $0x148] sm:$0xf]
    %v107 = vld [vmem:[%s1 + $0x14c] sm:$0xf]
    %v108 = vld [vmem:[%s1 + $0x150] sm:$0xf]
    %v109 = vld [vmem:[%s1 + $0x154] sm:$0xf]
    %v110 = vld [vmem:[%s1 + $0x158] sm:$0xf]
    %v111 = vld [vmem:[%s1 + $0x15c] sm:$0xf]
    %v112 = vld [vmem:[%s1 + $0x160] sm:$0xf]
    %v113 = vld [vmem:[%s1 + $0x164] sm:$0xf]
    %v114 = vld [vmem:[%s1 + $0x168] sm:$0xf]
    %v115 = vld [vmem:[%s1 + $0x16c] sm:$0xf]
    %v116 = vld [vmem:[%s1 + $0x170] sm:$0xf]
    %v117 = vld [vmem:[%s1 + $0x174] sm:$0xf]
    %v118 = vld [vmem:[%s1 + $0x178] sm:$0xf]
    %v119 = vld [vmem:[%s1 + $0x17c] sm:$0xf]
    %v120 = vld [vmem:[%s1 + $0x180] sm:$0xf]
    %v121 = vld [vmem:[%s1 + $0x184] sm:$0xf]
    %v122 = vld [vmem:[%s1 + $0x188] sm:$0xf]
    %v123 = vld [vmem:[%s1 + $0x18c] sm:$0xf]
    %v124 = vld [vmem:[%s1 + $0x190] sm:$0xf]
    %v125 = vld [vmem:[%s1 + $0x194] sm:$0xf]
    %v126 = vld [vmem:[%s1 + $0x198] sm:$0xf]
    %v127 = vld [vmem:[%s1 + $0x19c] sm:$0xf]
    %v128 = vld [vmem:[%s1 + $0x1a0] sm:$0xf]
    %v129 = vld [vmem:[%s1 + $0x1a4] sm:$0xf]
    %v130 = vld [vmem:[%s1 + $0x1a8] sm:$0xf]
    %v131 = vld [vmem:[%s1 + $0x1ac] sm:$0xf]
    %v132 = vld [vmem:[%s1 + $0x1b0] sm:$0xf]
    %v133 = vld [vmem:[%s1 + $0x1b4] sm:$0xf]
    %v134 = vld [vmem:[%s1 + $0x1b8] sm:$0xf]
    %v135 = vld [vmem:[%s1 + $0x1bc] sm:$0xf]
    %v136 = vld [vmem:[%s1 + $0x1c0] sm:$0xf]
    %v137 = vld [vmem:[%s1 + $0x1c4] sm:$0xf]
    %v138 = vld [vmem:[%s1 + $0x1c8] sm:$0xf]
    %v139 = vld [vmem:[%s1 + $0x1cc] sm:$0xf]
    %v140 = vld [vmem:[%s1 + $0x1d0] sm:$0xf]
    %v141 = vld [vmem:[%s1 + $0x1d4] sm:$0xf]
    %v142 = vld [vmem:[%s1 + $0x1d8] sm:$0xf]
    %v143 = vld [vmem:[%s1 + $0x1dc] sm:$0xf]
    %v144 = vld [vmem:[%s1 + $0x1e0] sm:$0xf]
    %v145 = vld [vmem:[%s1 + $0x1e4] sm:$0xf]
    %v146 = vld [vmem:[%s1 + $0x1e8] sm:$0xf]
    %v147 = vld [vmem:[%s1 + $0x1ec] sm:$0xf]
    %v148 = vld [vmem:[%s1 + $0x1f0] sm:$0xf]
    %v149 = vld [vmem:[%s1 + $0x1f4] sm:$0xf]
    %v150 = vld [vmem:[%s1 + $0x1f8] sm:$0xf]
    %v151 = vld [vmem:[%s1 + $0x1fc] sm:$0xf]
    %v152 = vld [vmem:[%s1 + $0x200] sm:$0xf]
    %v153 = vld [vmem:[%s1 + $0x204] sm:$0xf]
    %v154 = vld [vmem:[%s1 + $0x208] sm:$0xf]
    %v155 = vld [vmem:[%s1 + $0x20c] sm:$0xf]
    %v156 = vld [vmem:[%s1 + $0x210] sm:$0xf]
    %v157 = vld [vmem:[%s1 + $0x214] sm:$0xf]
    %v158 = vld [vmem:[%s1 + $0x218] sm:$0xf]
    %v159 = vld [vmem:[%s1 + $0x21c] sm:$0xf]
    %v160 = vld [vmem:[%s1 + $0x220] sm:$0xf]
    %v161 = vld [vmem:[%s1 + $0x224] sm:$0xf]
    %v162 = vld [vmem:[%s1 + $0x228] sm:$0xf]
    %v163 = vld [vmem:[%s1 + $0x22c] sm:$0xf]
    %v164 = vld [vmem:[%s1 + $0x230] sm:$0xf]
    %v165 = vld [vmem:[%s1 + $0x234] sm:$0xf]
    %v166 = vld [vmem:[%s1 + $0x238] sm:$0xf]
    %v167 = vld [vmem:[%s1 + $0x23c] sm:$0xf]
    %v168 = vld [vmem:[%s1 + $0x240] sm:$0xf]
    %v169 = vld [vmem:[%s1 + $0x244] sm:$0xf]
    %v170 = vld [vmem:[%s1 + $0x248] sm:$0xf]
    %v171 = vld [vmem:[%s1 + $0x24c] sm:$0xf]
    %v172 = vld [vmem:[%s1 + $0x250] sm:$0xf]
    %v173 = vld [vmem:[%s1 + $0x254] sm:$0xf]
    %v174 = vld [vmem:[%s1 + $0x258] sm:$0xf]
    %v175 = vld [vmem:[%s1 + $0x25c] sm:$0xf]
    %v176 = vld [vmem:[%s1 + $0x260] sm:$0xf]
    %v177 = vld [vmem:[%s1 + $0x264] sm:$0xf]
    %v178 = vld [vmem:[%s1 + $0x268] sm:$0xf]
    %v179 = vld [vmem:[%s1 + $0x26c] sm:$0xf]
    %v180 = vld [vmem:[%s1 + $0x270] sm:$0xf]
    %v181 = vld [vmem:[%s1 + $0x274] sm:$0xf]
    %v182 = vld [vmem:[%s1 + $0x278] sm:$0xf]
    %v183 = vld [vmem:[%s1 + $0x27c] sm:$0xf]
    %v184 = vld [vmem:[%s1 + $0x280] sm:$0xf]
    %v185 = vld [vmem:[%s1 + $0x284] sm:$0xf]
    %v186 = vld [vmem:[%s1 + $0x288] sm:$0xf]
    %v187 = vld [vmem:[%s1 + $0x28c] sm:$0xf]
    %v188 = vld [vmem:[%s1 + $0x290] sm:$0xf]
    %v189 = vld [vmem:[%s1 + $0x294] sm:$0xf]
    %v190 = vld [vmem:[%s1 + $0x298] sm:$0xf]
    %v191 = vld [vmem:[%s1 + $0x29c] sm:$0xf]
    %v192 = vld [vmem:[%s1 + $0x2a0] sm:$0xf]
    %v193 = vld [vmem:[%s1 + $0x2a4] sm:$0xf]
    %v194 = vld [vmem:[%s1 + $0x2a8] sm:$0xf]
    %v195 = vld [vmem:[%s1 + $0x2ac] sm:$0xf]
    %v196 = vld [vmem:[%s1 + $0x2b0] sm:$0xf]
    %v197 = vld [vmem:[%s1 + $0x2b4] sm:$0xf]
    %v198 = vld [vmem:[%s1 + $0x2b8] sm:$0xf]
    %v199 = vld [vmem:[%s1 + $0x2bc] sm:$0xf]
    %v200 = vld [vmem:[%s1 + $0x2c0] sm:$0xf]
    %v201 = vld [vmem:[%s1 + $0x2c4] sm:$0xf]
    %v202 = vld [vmem:[%s1 + $0x2c8] sm:$0xf]
    %v203 = vld [vmem:[%s1 + $0x2cc] sm:$0xf]
    %v204 = vld [vmem:[%s1 + $0x2d0] sm:$0xf]
    %v205 = vld [vmem:[%s1 + $0x2d4] sm:$0xf]
    %v206 = vld [vmem:[%s1 + $0x2d8] sm:$0xf]
    %v207 = vld [vmem:[%s1 + $0x2dc] sm:$0xf]
    %v208 = vld [vmem:[%s1 + $0x2e0] sm:$0xf]
    %v209 = vld [vmem:[%s1 + $0x2e4] sm:$0xf]
    %v210 = vld [vmem:[%s1 + $0x2e8] sm:$0xf]
    %v211 = vld [vmem:[%s1 + $0x2ec] sm:$0xf]
    %v212 = vld [vmem:[%s1 + $0x2f0] sm:$0xf]
    %v213 = vld [vmem:[%s1 + $0x2f4] sm:$0xf]
    %v214 = vld [vmem:[%s1 + $0x2f8] sm:$0xf]
    %v215 = vld [vmem:[%s1 + $0x2fc] sm:$0xf]
    %v216 = vld [vmem:[%s1 + $0x300] sm:$0xf]
    %v217 = vld [vmem:[%s1 + $0x304] sm:$0xf]
    %v218 = vld [vmem:[%s1 + $0x308] sm:$0xf]
    %v219 = vld [vmem:[%s1 + $0x30c] sm:$0xf]
    %v220 = vld [vmem:[%s2] sm:$0x1]
    %v222 = vlaneseq
    %v223 = vshrl.u32 %v222, 7
    %v224 = vsub.s32 0, %v223
    %v225 = vrot.slane %v220, %v224
    %v229 = vcombine.high %v22, %v22
    %v231 = vunpack.c.l.s4 1966171168
    %v232 = vunpack.c.0.s8 %v231
    %v233 = vlaneseq
    %v234 = vshrl.u32 %v233, 7
    %v235 = vsub.s32 %v232, %v234
    %v236 = vrot.slane %v22, %v235
    %v238 = vunpack.c.l.s4 1966171168
    %v239 = vunpack.c.0.s8 %v238
    %v240 = vlaneseq
    %v241 = vshrl.u32 %v240, 7
    %v242 = vsub.s32 %v239, %v241
    %v243 = vrot.slane %v229, %v242
    %v244 = vcombine.high %v236, %v236
    %v245 = vcombine.high %v243, %v243
    %v247 = vunpack.c.l.s4 1966171168
    %v248 = vunpack.c.0.s8 %v247
    %v249 = vlaneseq
    %v250 = vshrl.u32 %v249, 7
    %v251 = vsub.s32 %v248, %v250
    %v252 = vrot.slane %v236, %v251
    %v254 = vunpack.c.l.s4 1966171168
    %v255 = vunpack.c.0.s8 %v254
    %v256 = vlaneseq
    %v257 = vshrl.u32 %v256, 7
    %v258 = vsub.s32 %v255, %v257
    %v259 = vrot.slane %v243, %v258
    %v261 = vunpack.c.l.s4 1966171168
    %v262 = vunpack.c.0.s8 %v261
    %v263 = vlaneseq
    %v264 = vshrl.u32 %v263, 7
    %v265 = vsub.s32 %v262, %v264
    %v266 = vrot.slane %v244, %v265
    %v268 = vunpack.c.l.s4 1966171168
    %v269 = vunpack.c.0.s8 %v268
    %v270 = vlaneseq
    %v271 = vshrl.u32 %v270, 7
    %v272 = vsub.s32 %v269, %v271
    %v273 = vrot.slane %v245, %v272
    %v274 = vcombine.high %v252, %v252
    %v275 = vcombine.high %v259, %v259
    %v276 = vcombine.high %v266, %v266
    %v277 = vcombine.high %v273, %v273
    %v278 = vcombine.high %v23, %v23
    %v280 = vunpack.c.l.s4 1966171168
    %v281 = vunpack.c.0.s8 %v280
    %v282 = vlaneseq
    %v283 = vshrl.u32 %v282, 7
    %v284 = vsub.s32 %v281, %v283
    %v285 = vrot.slane %v23, %v284
    %v287 = vunpack.c.l.s4 1966171168
    %v288 = vunpack.c.0.s8 %v287
    %v289 = vlaneseq
    %v290 = vshrl.u32 %v289, 7
    %v291 = vsub.s32 %v288, %v290
    %v292 = vrot.slane %v278, %v291
    %v293 = vcombine.high %v285, %v285
    %v295 = vunpack.c.l.s4 1966171168
    %v296 = vunpack.c.0.s8 %v295
    %v297 = vlaneseq
    %v298 = vshrl.u32 %v297, 7
    %v299 = vsub.s32 %v296, %v298
    %v300 = vrot.slane %v285, %v299
    %v302 = vunpack.c.l.s4 1966171168
    %v303 = vunpack.c.0.s8 %v302
    %v304 = vlaneseq
    %v305 = vshrl.u32 %v304, 7
    %v306 = vsub.s32 %v303, %v305
    %v307 = vrot.slane %v292, %v306
    %v309 = vunpack.c.l.s4 1966171168
    %v310 = vunpack.c.0.s8 %v309
    %v311 = vlaneseq
    %v312 = vshrl.u32 %v311, 7
    %v313 = vsub.s32 %v310, %v312
    %v314 = vrot.slane %v293, %v313
    %v315 = vcombine.high %v300, %v300
    %v316 = vcombine.high %v314, %v314
    %v525 = vunpack.c.l.b16 %v24
    %v526 = vunpack.c.l.b16 %v25
    %v527 = vunpack.c.l.b16 %v26
    %v528 = vunpack.c.l.b16 %v27
    %v529 = vunpack.c.l.b16 %v28
    %v530 = vunpack.c.l.b16 %v29
    %v531 = vunpack.c.l.b16 %v30
    %v532 = vunpack.c.l.b16 %v31
    %v533 = vunpack.c.l.b16 %v32
    %v534 = vunpack.c.l.b16 %v33
    %v535 = vunpack.c.l.b16 %v34
    %v536 = vunpack.c.l.b16 %v35
    %v537 = vunpack.c.l.b16 %v36
    %v538 = vunpack.c.l.b16 %v37
    %v539 = vunpack.c.l.b16 %v38
    %v540 = vunpack.c.l.b16 %v39
    %v541 = vunpack.c.l.b16 %v40
    %v542 = vunpack.c.l.b16 %v41
    %v543 = vunpack.c.l.b16 %v42
    %v544 = vunpack.c.l.b16 %v43
    %v545 = vunpack.c.l.b16 %v44
    %v546 = vunpack.c.l.b16 %v45
    %v547 = vunpack.c.l.b16 %v46
    %v548 = vunpack.c.l.b16 %v47
    %v549 = vunpack.c.l.b16 %v48
    %v550 = vunpack.c.l.b16 %v49
    %v551 = vunpack.c.l.b16 %v50
    %v552 = vunpack.c.l.b16 %v51
    %v553 = vunpack.c.l.b16 %v52
    %v554 = vunpack.c.l.b16 %v53
    %v555 = vunpack.c.l.b16 %v54
    %v556 = vunpack.c.l.b16 %v55
    %v557 = vunpack.c.l.b16 %v56
    %v558 = vunpack.c.l.b16 %v57
    %v559 = vunpack.c.l.b16 %v58
    %v560 = vunpack.c.l.b16 %v59
    %v561 = vunpack.c.l.b16 %v60
    %v562 = vunpack.c.l.b16 %v61
    %v563 = vunpack.c.l.b16 %v62
    %v564 = vunpack.c.l.b16 %v63
    %v565 = vunpack.c.l.b16 %v64
    %v566 = vunpack.c.l.b16 %v65
    %v567 = vunpack.c.l.b16 %v66
    %v568 = vunpack.c.l.b16 %v67
    %v569 = vunpack.c.l.b16 %v68
    %v570 = vunpack.c.l.b16 %v69
    %v571 = vunpack.c.l.b16 %v70
    %v572 = vunpack.c.l.b16 %v71
    %v573 = vunpack.c.l.b16 %v72
    %v574 = vunpack.c.l.b16 %v73
    %v575 = vunpack.c.l.b16 %v74
    %v576 = vunpack.c.l.b16 %v75
    %v577 = vunpack.c.l.b16 %v76
    %v578 = vunpack.c.l.b16 %v77
    %v579 = vunpack.c.l.b16 %v78
    %v580 = vunpack.c.l.b16 %v79
    %v581 = vunpack.c.l.b16 %v80
    %v582 = vunpack.c.l.b16 %v81
    %v583 = vunpack.c.l.b16 %v82
    %v584 = vunpack.c.l.b16 %v83
    %v585 = vunpack.c.l.b16 %v84
    %v586 = vunpack.c.l.b16 %v85
    %v587 = vunpack.c.l.b16 %v86
    %v588 = vunpack.c.l.b16 %v87
    %v589 = vunpack.c.l.b16 %v88
    %v590 = vunpack.c.l.b16 %v89
    %v591 = vunpack.c.l.b16 %v90
    %v592 = vunpack.c.l.b16 %v91
    %v593 = vunpack.c.l.b16 %v92
    %v594 = vunpack.c.l.b16 %v93
    %v595 = vunpack.c.l.b16 %v94
    %v596 = vunpack.c.l.b16 %v95
    %v597 = vunpack.c.l.b16 %v96
    %v598 = vunpack.c.l.b16 %v97
    %v599 = vunpack.c.l.b16 %v98
    %v600 = vunpack.c.l.b16 %v99
    %v601 = vunpack.c.l.b16 %v100
    %v602 = vunpack.c.l.b16 %v101
    %v603 = vunpack.c.l.b16 %v102
    %v604 = vunpack.c.l.b16 %v103
    %v605 = vunpack.c.l.b16 %v104
    %v606 = vunpack.c.l.b16 %v105
    %v607 = vunpack.c.l.b16 %v106
    %v608 = vunpack.c.l.b16 %v107
    %v609 = vunpack.c.l.b16 %v108
    %v610 = vunpack.c.l.b16 %v109
    %v611 = vunpack.c.l.b16 %v110
    %v612 = vunpack.c.l.b16 %v111
    %v613 = vunpack.c.l.b16 %v112
    %v614 = vunpack.c.l.b16 %v113
    %v615 = vunpack.c.l.b16 %v114
    %v616 = vunpack.c.l.b16 %v115
    %v617 = vunpack.c.l.b16 %v116
    %v618 = vunpack.c.l.b16 %v117
    %v619 = vunpack.c.l.b16 %v118
    %v620 = vunpack.c.l.b16 %v119
    %v621 = vunpack.c.l.b16 %v120
    %v622 = vunpack.c.l.b16 %v121
    %v623 = vunpack.c.l.b16 %v122
    %v624 = vunpack.c.l.b16 %v123
    %v625 = vunpack.c.l.b16 %v124
    %v626 = vunpack.c.l.b16 %v125
    %v627 = vunpack.c.l.b16 %v126
    %v628 = vunpack.c.l.b16 %v127
    %v629 = vunpack.c.l.b16 %v128
    %v630 = vunpack.c.l.b16 %v129
    %v631 = vunpack.c.l.b16 %v130
    %v632 = vunpack.c.l.b16 %v131
    %v633 = vunpack.c.l.b16 %v132
    %v634 = vunpack.c.l.b16 %v133
    %v635 = vunpack.c.l.b16 %v134
    %v636 = vunpack.c.l.b16 %v135
    %v637 = vunpack.c.l.b16 %v136
    %v638 = vunpack.c.l.b16 %v137
    %v639 = vunpack.c.l.b16 %v138
    %v640 = vunpack.c.l.b16 %v139
    %v641 = vunpack.c.l.b16 %v140
    %v642 = vunpack.c.l.b16 %v141
    %v643 = vunpack.c.l.b16 %v142
    %v644 = vunpack.c.l.b16 %v143
    %v645 = vunpack.c.l.b16 %v144
    %v646 = vunpack.c.l.b16 %v145
    %v647 = vunpack.c.l.b16 %v146
    %v648 = vunpack.c.l.b16 %v147
    %v649 = vunpack.c.l.b16 %v148
    %v650 = vunpack.c.l.b16 %v149
    %v651 = vunpack.c.l.b16 %v150
    %v652 = vunpack.c.l.b16 %v151
    %v653 = vunpack.c.l.b16 %v152
    %v654 = vunpack.c.l.b16 %v153
    %v655 = vunpack.c.l.b16 %v154
    %v656 = vunpack.c.l.b16 %v155
    %v657 = vunpack.c.l.b16 %v156
    %v658 = vunpack.c.l.b16 %v157
    %v659 = vunpack.c.l.b16 %v158
    %v660 = vunpack.c.l.b16 %v159
    %v661 = vunpack.c.l.b16 %v160
    %v662 = vunpack.c.l.b16 %v161
    %v663 = vunpack.c.l.b16 %v162
    %v664 = vunpack.c.l.b16 %v163
    %v665 = vunpack.c.l.b16 %v164
    %v666 = vunpack.c.l.b16 %v165
    %v667 = vunpack.c.l.b16 %v166
    %v668 = vunpack.c.l.b16 %v167
    %v669 = vunpack.c.l.b16 %v168
    %v670 = vunpack.c.l.b16 %v169
    %v671 = vunpack.c.l.b16 %v170
    %v672 = vunpack.c.l.b16 %v171
    %v673 = vunpack.c.l.b16 %v172
    %v674 = vunpack.c.l.b16 %v173
    %v675 = vunpack.c.l.b16 %v174
    %v676 = vunpack.c.l.b16 %v175
    %v677 = vunpack.c.l.b16 %v176
    %v678 = vunpack.c.l.b16 %v177
    %v679 = vunpack.c.l.b16 %v178
    %v680 = vunpack.c.l.b16 %v179
    %v681 = vunpack.c.l.b16 %v180
    %v682 = vunpack.c.l.b16 %v181
    %v683 = vunpack.c.l.b16 %v182
    %v684 = vunpack.c.l.b16 %v183
    %v685 = vunpack.c.l.b16 %v184
    %v686 = vunpack.c.l.b16 %v185
    %v687 = vunpack.c.l.b16 %v186
    %v688 = vunpack.c.l.b16 %v187
    %v689 = vunpack.c.l.b16 %v188
    %v690 = vunpack.c.l.b16 %v189
    %v691 = vunpack.c.l.b16 %v190
    %v692 = vunpack.c.l.b16 %v191
    %v693 = vunpack.c.l.b16 %v192
    %v694 = vunpack.c.l.b16 %v193
    %v695 = vunpack.c.l.b16 %v194
    %v696 = vunpack.c.l.b16 %v195
    %v697 = vunpack.c.l.b16 %v196
    %v698 = vunpack.c.l.b16 %v197
    %v699 = vunpack.c.l.b16 %v198
    %v700 = vunpack.c.l.b16 %v199
    %v701 = vunpack.c.l.b16 %v200
    %v702 = vunpack.c.l.b16 %v201
    %v703 = vunpack.c.l.b16 %v202
    %v704 = vunpack.c.l.b16 %v203
    %v705 = vunpack.c.l.b16 %v204
    %v706 = vunpack.c.l.b16 %v205
    %v707 = vunpack.c.l.b16 %v206
    %v708 = vunpack.c.l.b16 %v207
    %v709 = vunpack.c.l.b16 %v208
    %v710 = vunpack.c.l.b16 %v209
    %v711 = vunpack.c.l.b16 %v210
    %v712 = vunpack.c.l.b16 %v211
    %v713 = vunpack.c.l.b16 %v212
    %v714 = vunpack.c.l.b16 %v213
    %v715 = vunpack.c.l.b16 %v214
    %v716 = vunpack.c.l.b16 %v215
    %v717 = vunpack.c.l.b16 %v216
    %v718 = vunpack.c.l.b16 %v217
    %v719 = vunpack.c.l.b16 %v218
    %v720 = vunpack.c.l.b16 %v219
    %v721 = vpack.c.b16 %v526, %v525
    %v722 = vpack.c.b16 %v528, %v527
    %v723 = vpack.c.b16 %v530, %v529
    %v724 = vpack.c.b16 %v532, %v531
    %v725 = vpack.c.b16 %v534, %v533
    %v726 = vpack.c.b16 %v536, %v535
    %v727 = vpack.c.b16 %v538, %v537
    %v728 = vpack.c.b16 %v540, %v539
    %v729 = vpack.c.b16 %v542, %v541
    %v730 = vpack.c.b16 %v544, %v543
    %v731 = vpack.c.b16 %v546, %v545
    %v732 = vpack.c.b16 %v548, %v547
    %v733 = vpack.c.b16 %v550, %v549
    %v734 = vpack.c.b16 %v552, %v551
    %v735 = vpack.c.b16 %v554, %v553
    %v736 = vpack.c.b16 %v556, %v555
    %v737 = vpack.c.b16 %v558, %v557
    %v738 = vpack.c.b16 %v560, %v559
    %v739 = vpack.c.b16 %v562, %v561
    %v740 = vpack.c.b16 %v564, %v563
    %v741 = vpack.c.b16 %v566, %v565
    %v742 = vpack.c.b16 %v568, %v567
    %v743 = vpack.c.b16 %v570, %v569
    %v744 = vpack.c.b16 %v572, %v571
    %v745 = vpack.c.b16 %v574, %v573
    %v746 = vpack.c.b16 %v576, %v575
    %v747 = vpack.c.b16 %v578, %v577
    %v748 = vpack.c.b16 %v580, %v579
    %v749 = vpack.c.b16 %v582, %v581
    %v750 = vpack.c.b16 %v584, %v583
    %v751 = vpack.c.b16 %v586, %v585
    %v752 = vpack.c.b16 %v588, %v587
    %v753 = vpack.c.b16 %v590, %v589
    %v754 = vpack.c.b16 %v592, %v591
    %v755 = vpack.c.b16 %v594, %v593
    %v756 = vpack.c.b16 %v596, %v595
    %v757 = vpack.c.b16 %v598, %v597
    %v758 = vpack.c.b16 %v600, %v599
    %v759 = vpack.c.b16 %v602, %v601
    %v760 = vpack.c.b16 %v604, %v603
    %v761 = vpack.c.b16 %v606, %v605
    %v762 = vpack.c.b16 %v608, %v607
    %v763 = vpack.c.b16 %v610, %v609
    %v764 = vpack.c.b16 %v612, %v611
    %v765 = vpack.c.b16 %v614, %v613
    %v766 = vpack.c.b16 %v616, %v615
    %v767 = vpack.c.b16 %v618, %v617
    %v768 = vpack.c.b16 %v620, %v619
    %v769 = vpack.c.b16 %v622, %v621
    %v770 = vpack.c.b16 %v624, %v623
    %v771 = vpack.c.b16 %v626, %v625
    %v772 = vpack.c.b16 %v628, %v627
    %v773 = vpack.c.b16 %v630, %v629
    %v774 = vpack.c.b16 %v632, %v631
    %v775 = vpack.c.b16 %v634, %v633
    %v776 = vpack.c.b16 %v636, %v635
    %v777 = vpack.c.b16 %v638, %v637
    %v778 = vpack.c.b16 %v640, %v639
    %v779 = vpack.c.b16 %v642, %v641
    %v780 = vpack.c.b16 %v644, %v643
    %v781 = vpack.c.b16 %v646, %v645
    %v782 = vpack.c.b16 %v648, %v647
    %v783 = vpack.c.b16 %v650, %v649
    %v784 = vpack.c.b16 %v652, %v651
    %v785 = vpack.c.b16 %v654, %v653
    %v786 = vpack.c.b16 %v656, %v655
    %v787 = vpack.c.b16 %v658, %v657
    %v788 = vpack.c.b16 %v660, %v659
    %v789 = vpack.c.b16 %v662, %v661
    %v790 = vpack.c.b16 %v664, %v663
    %v791 = vpack.c.b16 %v666, %v665
    %v792 = vpack.c.b16 %v668, %v667
    %v793 = vpack.c.b16 %v670, %v669
    %v794 = vpack.c.b16 %v672, %v671
    %v795 = vpack.c.b16 %v674, %v673
    %v796 = vpack.c.b16 %v676, %v675
    %v797 = vpack.c.b16 %v678, %v677
    %v798 = vpack.c.b16 %v680, %v679
    %v799 = vpack.c.b16 %v682, %v681
    %v800 = vpack.c.b16 %v684, %v683
    %v801 = vpack.c.b16 %v686, %v685
    %v802 = vpack.c.b16 %v688, %v687
    %v803 = vpack.c.b16 %v690, %v689
    %v804 = vpack.c.b16 %v692, %v691
    %v805 = vpack.c.b16 %v694, %v693
    %v806 = vpack.c.b16 %v696, %v695
    %v807 = vpack.c.b16 %v698, %v697
    %v808 = vpack.c.b16 %v700, %v699
    %v809 = vpack.c.b16 %v702, %v701
    %v810 = vpack.c.b16 %v704, %v703
    %v811 = vpack.c.b16 %v706, %v705
    %v812 = vpack.c.b16 %v708, %v707
    %v813 = vpack.c.b16 %v710, %v709
    %v814 = vpack.c.b16 %v712, %v711
    %v815 = vpack.c.b16 %v714, %v713
    %v816 = vpack.c.b16 %v716, %v715
    %v817 = vpack.c.b16 %v718, %v717
    %v818 = vpack.c.b16 %v720, %v719
    %vm917 = vcmask 261120
    %v919 = vsel %vm917, %v307, 0
    %921 = vmatprep.subr.bf16.mxu0 0
    %922 = vmatpush1.bf16.msra.mxu0 %v721
    %923 = vmatprep.subr.bf16.mxu0 0
    %924 = vmatpush1.bf16.msra.mxu0 %v722
    %925 = vmatprep.subr.bf16.mxu0 0
    %926 = vmatpush1.bf16.msra.mxu0 %v723
    %927 = vmatprep.subr.bf16.mxu0 0
    %928 = vmatpush1.bf16.msra.mxu0 %v724
    %929 = vmatprep.subr.bf16.mxu0 0
    %930 = vmatpush1.bf16.msra.mxu0 %v725
    %931 = vmatprep.subr.bf16.mxu0 0
    %932 = vmatpush1.bf16.msra.mxu0 %v726
    %933 = vmatprep.subr.bf16.mxu0 0
    %934 = vmatpush1.bf16.msra.mxu0 %v727
    %935 = vmatprep.subr.bf16.mxu0 0
    %936 = vmatpush1.bf16.msra.mxu0 %v728
    %937 = vmatprep.subr.bf16.mxu0 0
    %938 = vmatpush1.bf16.msra.mxu0 %v729
    %939 = vmatprep.subr.bf16.mxu0 0
    %940 = vmatpush1.bf16.msra.mxu0 %v730
    %941 = vmatprep.subr.bf16.mxu0 0
    %942 = vmatpush1.bf16.msra.mxu0 %v731
    %943 = vmatprep.subr.bf16.mxu0 0
    %944 = vmatpush1.bf16.msra.mxu0 %v732
    %945 = vmatprep.subr.bf16.mxu0 0
    %946 = vmatpush1.bf16.msra.mxu0 %v733
    %947 = vmatprep.subr.bf16.mxu0 0
    %948 = vmatpush1.bf16.msra.mxu0 %v734
    %949 = vmatprep.subr.bf16.mxu0 0
    %950 = vmatpush1.bf16.msra.mxu0 %v735
    %951 = vmatprep.subr.bf16.mxu0 0
    %952 = vmatpush1.bf16.msra.mxu0 %v736
    %953 = vmatprep.mubr.bf16.mxu0 %v266
    %954 = vmatmul.mubr.bf16.gmra.mrb[0].mxu0 %v252
    %v955 = vpop.f32.mrb[0].mxu0
    %v956 = vadd.f32 %v225, %v955
    %v957 = vpop.f32.mrb[0].mxu0
    %v958 = vpop.f32.mrb[0].mxu0
    %v959 = vpop.f32.mrb[0].mxu0
    %960 = vdwg.mxu0
    %961 = vmatprep.subr.bf16.mxu0 0
    %962 = vmatpush1.bf16.msra.mxu0 %v737
    %963 = vmatprep.subr.bf16.mxu0 0
    %964 = vmatpush1.bf16.msra.mxu0 %v738
    %965 = vmatprep.subr.bf16.mxu0 0
    %966 = vmatpush1.bf16.msra.mxu0 %v739
    %967 = vmatprep.subr.bf16.mxu0 0
    %968 = vmatpush1.bf16.msra.mxu0 %v740
    %969 = vmatprep.subr.bf16.mxu0 0
    %970 = vmatpush1.bf16.msra.mxu0 %v741
    %971 = vmatprep.subr.bf16.mxu0 0
    %972 = vmatpush1.bf16.msra.mxu0 %v742
    %973 = vmatprep.subr.bf16.mxu0 0
    %974 = vmatpush1.bf16.msra.mxu0 %v743
    %975 = vmatprep.subr.bf16.mxu0 0
    %976 = vmatpush1.bf16.msra.mxu0 %v744
    %977 = vmatprep.subr.bf16.mxu0 0
    %978 = vmatpush1.bf16.msra.mxu0 %v745
    %979 = vmatprep.subr.bf16.mxu0 0
    %980 = vmatpush1.bf16.msra.mxu0 %v746
    %981 = vmatprep.subr.bf16.mxu0 0
    %982 = vmatpush1.bf16.msra.mxu0 %v747
    %983 = vmatprep.subr.bf16.mxu0 0
    %984 = vmatpush1.bf16.msra.mxu0 %v748
    %985 = vmatprep.subr.bf16.mxu0 0
    %986 = vmatpush1.bf16.msra.mxu0 %v749
    %987 = vmatprep.subr.bf16.mxu0 0
    %988 = vmatpush1.bf16.msra.mxu0 %v750
    %989 = vmatprep.subr.bf16.mxu0 0
    %990 = vmatpush1.bf16.msra.mxu0 %v751
    %991 = vmatprep.subr.bf16.mxu0 0
    %992 = vmatpush1.bf16.msra.mxu0 %v752
    %993 = vmatprep.mubr.bf16.mxu0 %v276
    %994 = vmatmul.mubr.bf16.gmra.mrb[0].mxu0 %v274
    %v995 = vpop.f32.mrb[0].mxu0
    %v996 = vadd.f32 %v956, %v995
    %v997 = vpop.f32.mrb[0].mxu0
    %v998 = vpop.f32.mrb[0].mxu0
    %v999 = vpop.f32.mrb[0].mxu0
    %1000 = vdwg.mxu0
    %1001 = vmatprep.subr.bf16.mxu0 0
    %1002 = vmatpush1.bf16.msra.mxu0 %v753
    %1003 = vmatprep.subr.bf16.mxu0 0
    %1004 = vmatpush1.bf16.msra.mxu0 %v754
    %1005 = vmatprep.subr.bf16.mxu0 0
    %1006 = vmatpush1.bf16.msra.mxu0 %v755
    %1007 = vmatprep.subr.bf16.mxu0 0
    %1008 = vmatpush1.bf16.msra.mxu0 %v756
    %1009 = vmatprep.subr.bf16.mxu0 0
    %1010 = vmatpush1.bf16.msra.mxu0 %v757
    %1011 = vmatprep.subr.bf16.mxu0 0
    %1012 = vmatpush1.bf16.msra.mxu0 %v758
    %1013 = vmatprep.subr.bf16.mxu0 0
    %1014 = vmatpush1.bf16.msra.mxu0 %v759
    %1015 = vmatprep.subr.bf16.mxu0 0
    %1016 = vmatpush1.bf16.msra.mxu0 %v760
    %1017 = vmatprep.subr.bf16.mxu0 0
    %1018 = vmatpush1.bf16.msra.mxu0 %v761
    %1019 = vmatprep.subr.bf16.mxu0 0
    %1020 = vmatpush1.bf16.msra.mxu0 %v762
    %1021 = vmatprep.subr.bf16.mxu0 0
    %1022 = vmatpush1.bf16.msra.mxu0 %v763
    %1023 = vmatprep.subr.bf16.mxu0 0
    %1024 = vmatpush1.bf16.msra.mxu0 %v764
    %1025 = vmatprep.subr.bf16.mxu0 0
    %1026 = vmatpush1.bf16.msra.mxu0 %v765
    %1027 = vmatprep.subr.bf16.mxu0 0
    %1028 = vmatpush1.bf16.msra.mxu0 %v766
    %1029 = vmatprep.subr.bf16.mxu0 0
    %1030 = vmatpush1.bf16.msra.mxu0 %v767
    %1031 = vmatprep.subr.bf16.mxu0 0
    %1032 = vmatpush1.bf16.msra.mxu0 %v768
    %1033 = vmatprep.mubr.bf16.mxu0 %v273
    %1034 = vmatmul.mubr.bf16.gmra.mrb[0].mxu0 %v259
    %v1035 = vpop.f32.mrb[0].mxu0
    %v1036 = vadd.f32 %v996, %v1035
    %v1037 = vpop.f32.mrb[0].mxu0
    %v1038 = vpop.f32.mrb[0].mxu0
    %v1039 = vpop.f32.mrb[0].mxu0
    %1040 = vdwg.mxu0
    %1041 = vmatprep.subr.bf16.mxu0 0
    %1042 = vmatpush1.bf16.msra.mxu0 %v769
    %1043 = vmatprep.subr.bf16.mxu0 0
    %1044 = vmatpush1.bf16.msra.mxu0 %v770
    %1045 = vmatprep.subr.bf16.mxu0 0
    %1046 = vmatpush1.bf16.msra.mxu0 %v771
    %1047 = vmatprep.subr.bf16.mxu0 0
    %1048 = vmatpush1.bf16.msra.mxu0 %v772
    %1049 = vmatprep.subr.bf16.mxu0 0
    %1050 = vmatpush1.bf16.msra.mxu0 %v773
    %1051 = vmatprep.subr.bf16.mxu0 0
    %1052 = vmatpush1.bf16.msra.mxu0 %v774
    %1053 = vmatprep.subr.bf16.mxu0 0
    %1054 = vmatpush1.bf16.msra.mxu0 %v775
    %1055 = vmatprep.subr.bf16.mxu0 0
    %1056 = vmatpush1.bf16.msra.mxu0 %v776
    %1057 = vmatprep.subr.bf16.mxu0 0
    %1058 = vmatpush1.bf16.msra.mxu0 %v777
    %1059 = vmatprep.subr.bf16.mxu0 0
    %1060 = vmatpush1.bf16.msra.mxu0 %v778
    %1061 = vmatprep.subr.bf16.mxu0 0
    %1062 = vmatpush1.bf16.msra.mxu0 %v779
    %1063 = vmatprep.subr.bf16.mxu0 0
    %1064 = vmatpush1.bf16.msra.mxu0 %v780
    %1065 = vmatprep.subr.bf16.mxu0 0
    %1066 = vmatpush1.bf16.msra.mxu0 %v781
    %1067 = vmatprep.subr.bf16.mxu0 0
    %1068 = vmatpush1.bf16.msra.mxu0 %v782
    %1069 = vmatprep.subr.bf16.mxu0 0
    %1070 = vmatpush1.bf16.msra.mxu0 %v783
    %1071 = vmatprep.subr.bf16.mxu0 0
    %1072 = vmatpush1.bf16.msra.mxu0 %v784
    %1073 = vmatprep.mubr.bf16.mxu0 %v277
    %1074 = vmatmul.mubr.bf16.gmra.mrb[0].mxu0 %v275
    %v1075 = vpop.f32.mrb[0].mxu0
    %v1076 = vadd.f32 %v1036, %v1075
    %v1077 = vpop.f32.mrb[0].mxu0
    %v1078 = vpop.f32.mrb[0].mxu0
    %v1079 = vpop.f32.mrb[0].mxu0
    %1080 = vdwg.mxu0
    %1081 = vmatprep.subr.bf16.mxu0 0
    %1082 = vmatpush1.bf16.msra.mxu0 %v785
    %1083 = vmatprep.subr.bf16.mxu0 0
    %1084 = vmatpush1.bf16.msra.mxu0 %v786
    %1085 = vmatprep.subr.bf16.mxu0 0
    %1086 = vmatpush1.bf16.msra.mxu0 %v787
    %1087 = vmatprep.subr.bf16.mxu0 0
    %1088 = vmatpush1.bf16.msra.mxu0 %v788
    %1089 = vmatprep.subr.bf16.mxu0 0
    %1090 = vmatpush1.bf16.msra.mxu0 %v789
    %1091 = vmatprep.subr.bf16.mxu0 0
    %1092 = vmatpush1.bf16.msra.mxu0 %v790
    %1093 = vmatprep.subr.bf16.mxu0 0
    %1094 = vmatpush1.bf16.msra.mxu0 %v791
    %1095 = vmatprep.subr.bf16.mxu0 0
    %1096 = vmatpush1.bf16.msra.mxu0 %v792
    %1097 = vmatprep.subr.bf16.mxu0 0
    %1098 = vmatpush1.bf16.msra.mxu0 %v793
    %1099 = vmatprep.subr.bf16.mxu0 0
    %1100 = vmatpush1.bf16.msra.mxu0 %v794
    %1101 = vmatprep.subr.bf16.mxu0 0
    %1102 = vmatpush1.bf16.msra.mxu0 %v795
    %1103 = vmatprep.subr.bf16.mxu0 0
    %1104 = vmatpush1.bf16.msra.mxu0 %v796
    %1105 = vmatprep.subr.bf16.mxu0 0
    %1106 = vmatpush1.bf16.msra.mxu0 %v797
    %1107 = vmatprep.subr.bf16.mxu0 0
    %1108 = vmatpush1.bf16.msra.mxu0 %v798
    %1109 = vmatprep.subr.bf16.mxu0 0
    %1110 = vmatpush1.bf16.msra.mxu0 %v799
    %1111 = vmatprep.subr.bf16.mxu0 0
    %1112 = vmatpush1.bf16.msra.mxu0 %v800
    %1113 = vmatprep.mubr.bf16.mxu0 %v314
    %1114 = vmatmul.mubr.bf16.gmra.mrb[0].mxu0 %v300
    %v1115 = vpop.f32.mrb[0].mxu0
    %v1116 = vadd.f32 %v1076, %v1115
    %v1117 = vpop.f32.mrb[0].mxu0
    %v1118 = vpop.f32.mrb[0].mxu0
    %v1119 = vpop.f32.mrb[0].mxu0
    %1120 = vdwg.mxu0
    %1121 = vmatprep.subr.bf16.mxu0 0
    %1122 = vmatpush1.bf16.msra.mxu0 %v801
    %1123 = vmatprep.subr.bf16.mxu0 0
    %1124 = vmatpush1.bf16.msra.mxu0 %v802
    %1125 = vmatprep.subr.bf16.mxu0 0
    %1126 = vmatpush1.bf16.msra.mxu0 %v803
    %1127 = vmatprep.subr.bf16.mxu0 0
    %1128 = vmatpush1.bf16.msra.mxu0 %v804
    %1129 = vmatprep.subr.bf16.mxu0 0
    %1130 = vmatpush1.bf16.msra.mxu0 %v805
    %1131 = vmatprep.subr.bf16.mxu0 0
    %1132 = vmatpush1.bf16.msra.mxu0 %v806
    %1133 = vmatprep.subr.bf16.mxu0 0
    %1134 = vmatpush1.bf16.msra.mxu0 %v807
    %1135 = vmatprep.subr.bf16.mxu0 0
    %1136 = vmatpush1.bf16.msra.mxu0 %v808
    %1137 = vmatprep.subr.bf16.mxu0 0
    %1138 = vmatpush1.bf16.msra.mxu0 %v809
    %1139 = vmatprep.subr.bf16.mxu0 0
    %1140 = vmatpush1.bf16.msra.mxu0 %v810
    %1141 = vmatprep.subr.bf16.mxu0 0
    %1142 = vmatpush1.bf16.msra.mxu0 %v811
    %1143 = vmatprep.subr.bf16.mxu0 0
    %1144 = vmatpush1.bf16.msra.mxu0 %v812
    %1145 = vmatprep.subr.bf16.mxu0 0
    %1146 = vmatpush1.bf16.msra.mxu0 %v813
    %1147 = vmatprep.subr.bf16.mxu0 0
    %1148 = vmatpush1.bf16.msra.mxu0 %v814
    %1149 = vmatprep.subr.bf16.mxu0 0
    %1150 = vmatpush1.bf16.msra.mxu0 %v815
    %1151 = vmatprep.subr.bf16.mxu0 0
    %1152 = vmatpush1.bf16.msra.mxu0 %v816
    %1153 = vmatprep.mubr.bf16.mxu0 %v316
    %1154 = vmatmul.mubr.bf16.gmra.mrb[0].mxu0 %v315
    %v1155 = vpop.f32.mrb[0].mxu0
    %v1156 = vadd.f32 %v1116, %v1155
    %v1157 = vpop.f32.mrb[0].mxu0
    %v1158 = vpop.f32.mrb[0].mxu0
    %v1159 = vpop.f32.mrb[0].mxu0
    %1160 = vdwg.mxu0
    %1161 = vmatprep.subr.bf16.mxu0 0
    %1162 = vmatpush1.bf16.msra.mxu0 %v817
    %1163 = vmatprep.subr.bf16.mxu0 0
    %1164 = vmatpush1.bf16.msra.mxu0 %v818
    %1165 = vmatprep.subr.bf16.mxu0 0
    %1166 = vmatpush1.bf16.msra.mxu0 0
    %1167 = vmatprep.subr.bf16.mxu0 0
    %1168 = vmatpush1.bf16.msra.mxu0 0
    %1169 = vmatprep.subr.bf16.mxu0 0
    %1170 = vmatpush1.bf16.msra.mxu0 0
    %1171 = vmatprep.subr.bf16.mxu0 0
    %1172 = vmatpush1.bf16.msra.mxu0 0
    %1173 = vmatprep.subr.bf16.mxu0 0
    %1174 = vmatpush1.bf16.msra.mxu0 0
    %1175 = vmatprep.subr.bf16.mxu0 0
    %1176 = vmatpush1.bf16.msra.mxu0 0
    %1177 = vmatprep.subr.bf16.mxu0 0
    %1178 = vmatpush1.bf16.msra.mxu0 0
    %1179 = vmatprep.subr.bf16.mxu0 0
    %1180 = vmatpush1.bf16.msra.mxu0 0
    %1181 = vmatprep.subr.bf16.mxu0 0
    %1182 = vmatpush1.bf16.msra.mxu0 0
    %1183 = vmatprep.subr.bf16.mxu0 0
    %1184 = vmatpush1.bf16.msra.mxu0 0
    %1185 = vmatprep.subr.bf16.mxu0 0
    %1186 = vmatpush1.bf16.msra.mxu0 0
    %1187 = vmatprep.subr.bf16.mxu0 0
    %1188 = vmatpush1.bf16.msra.mxu0 0
    %1189 = vmatprep.subr.bf16.mxu0 0
    %1190 = vmatpush1.bf16.msra.mxu0 0
    %1191 = vmatprep.subr.bf16.mxu0 0
    %1192 = vmatpush1.bf16.msra.mxu0 0
    %1193 = vmatprep.mubr.bf16.mxu0 0
    %1194 = vmatmul.mubr.bf16.gmra.mrb[0].mxu0 %v919
    %v1195 = vpop.f32.mrb[0].mxu0
    %v1196 = vadd.f32 %v1156, %v1195
    %v1197 = vpop.f32.mrb[0].mxu0
    %v1198 = vpop.f32.mrb[0].mxu0
    %v1199 = vpop.f32.mrb[0].mxu0
    %1200 = vdwg.mxu0
    %v1201 = vsub.f32 0.0, %v1196
    %v1202 = vmul.f32 %v1201, 1.442695
    %v1203 = vpow.pop %v1202
    %v1204 = vadd.f32 %v1203, 1.0
    %v1205 = vrcp.pop %v1204
    %v1206 = vpack.c.bf16 %v1205, %v1205
    %v1207 = vld [vmem:[%s3] sm:$0xf]
    %v1208 = vld [vmem:[%s3 + $0x4] sm:$0xf]
    %v1209 = vld [vmem:[%s3 + $0x8] sm:$0xf]
    %v1210 = vld [vmem:[%s3 + $0xc] sm:$0xf]
    %v1211 = vld [vmem:[%s3 + $0x10] sm:$0xf]
    %v1212 = vld [vmem:[%s3 + $0x14] sm:$0xf]
    %v1213 = vld [vmem:[%s3 + $0x18] sm:$0xf]
    %v1214 = vld [vmem:[%s3 + $0x1c] sm:$0xf]
    %v1215 = vld [vmem:[%s4] sm:$0x1]
    %v1217 = vlaneseq
    %v1218 = vshrl.u32 %v1217, 7
    %v1219 = vsub.s32 0, %v1218
    %v1220 = vrot.slane %v1215, %v1219
    %v1230 = vunpack.c.l.b16 %v1207
    %v1231 = vunpack.c.l.b16 %v1208
    %v1232 = vunpack.c.l.b16 %v1209
    %v1233 = vunpack.c.l.b16 %v1210
    %v1234 = vunpack.c.l.b16 %v1211
    %v1235 = vunpack.c.l.b16 %v1212
    %v1236 = vunpack.c.l.b16 %v1213
    %v1237 = vunpack.c.l.b16 %v1214
    %v1238 = vpack.c.b16 %v1231, %v1230
    %v1239 = vpack.c.b16 %v1233, %v1232
    %v1240 = vpack.c.b16 %v1235, %v1234
    %v1241 = vpack.c.b16 %v1237, %v1236
    %vm1246 = vcmask 523264
    %v1248 = vsel %vm1246, %v1206, 0
    %1250 = vmatprep.subr.bf16.mxu0 0
    %1251 = vmatpush1.bf16.msra.mxu0 %v1238
    %1252 = vmatprep.subr.bf16.mxu0 0
    %1253 = vmatpush1.bf16.msra.mxu0 %v1239
    %1254 = vmatprep.subr.bf16.mxu0 0
    %1255 = vmatpush1.bf16.msra.mxu0 %v1240
    %1256 = vmatprep.subr.bf16.mxu0 0
    %1257 = vmatpush1.bf16.msra.mxu0 %v1241
    %1258 = vmatprep.subr.bf16.mxu0 0
    %1259 = vmatpush1.bf16.msra.mxu0 0
    %1260 = vmatprep.subr.bf16.mxu0 0
    %1261 = vmatpush1.bf16.msra.mxu0 0
    %1262 = vmatprep.subr.bf16.mxu0 0
    %1263 = vmatpush1.bf16.msra.mxu0 0
    %1264 = vmatprep.subr.bf16.mxu0 0
    %1265 = vmatpush1.bf16.msra.mxu0 0
    %1266 = vmatprep.subr.bf16.mxu0 0
    %1267 = vmatpush1.bf16.msra.mxu0 0
    %1268 = vmatprep.subr.bf16.mxu0 0
    %1269 = vmatpush1.bf16.msra.mxu0 0
    %1270 = vmatprep.subr.bf16.mxu0 0
    %1271 = vmatpush1.bf16.msra.mxu0 0
    %1272 = vmatprep.subr.bf16.mxu0 0
    %1273 = vmatpush1.bf16.msra.mxu0 0
    %1274 = vmatprep.subr.bf16.mxu0 0
    %1275 = vmatpush1.bf16.msra.mxu0 0
    %1276 = vmatprep.subr.bf16.mxu0 0
    %1277 = vmatpush1.bf16.msra.mxu0 0
    %1278 = vmatprep.subr.bf16.mxu0 0
    %1279 = vmatpush1.bf16.msra.mxu0 0
    %1280 = vmatprep.subr.bf16.mxu0 0
    %1281 = vmatpush1.bf16.msra.mxu0 0
    %1282 = vmatprep.mubr.bf16.mxu0 0
    %1283 = vmatmul.mubr.bf16.gmra.mrb[0].mxu0 %v1248
    %v1284 = vpop.f32.mrb[0].mxu0
    %v1285 = vadd.f32 %v1220, %v1284
    %v1286 = vpop.f32.mrb[0].mxu0
    %v1287 = vpop.f32.mrb[0].mxu0
    %v1288 = vpop.f32.mrb[0].mxu0
    %1289 = vdwg.mxu0
    %vm1290 = vcmask 74752
    %1291 = vst.msk [vmem:[#allocation2] sm:$0x3] %vm1290, %v1285
    // Predicated region
    $region22: #{forward.5} parent=1 // pred_check
      _
    $region23: #{forward.5} parent=1 // pred_check_branch
      %1293 = sbr.rel (0) target = $region25
    $region24: #{forward.5} parent=1 // pred_region
      %s1295 = ssub.s32 32, 32
      %1296 = vsyncadd [#allocation3], %s1295
      %s1298 = sshll.u32 [#allocation2], 4
      %s1299 = int_to_ptr.vmem [resolvable:$true] %s1298
      %1301 = dma.vmem_to_hbm [thread:$0]  %s1299, 32, %s5, [#allocation3]
    $region25: #{forward.5} parent=1 // pred_fallthru
      _
    // Predicated region
    $region26: #{forward.5} parent=1 // pred_check
      _
    $region27: #{forward.5} parent=1 // pred_check_branch
      %1303 = sbr.rel (0) target = $region29
    $region28: #{forward.5} parent=1 // pred_region
      %1304 = dma.done [#allocation3], 32
    $region29: #{forward.5} parent=1 // pred_fallthru
      _
    %1305 = vsyncpa [#allocation3], 1

</llo_original>
